<compile_context>
chip_gen: v7x
topology: tpu7x:2x2x1
jax: 0.10.0
libtpu: 0.0.40
codegen_flags: <defaults>
</compile_context>

<pallas_src>
import jax
import jax.numpy as jnp
import numpy as np
from jax.experimental import pallas as pl
from jax.experimental.pallas import tpu as pltpu


# ------------------------- Pallas kernel -------------------------------------

def _proj_layer_kernel(x_ref, w1_ref, s1_ref, b1_ref, w2_ref, s2_ref, b2_ref,
                       gamma_ref, beta_ref, o_ref, ln_scratch):
    """Fused ProjLayer: LayerNorm -> dense1 -> QuickGELU -> dense2 -> +residual.

    Grid axis 0 walks chunks of the hidden (3072) dimension.  o_ref is the
    VMEM-resident f32 accumulator (its block index is constant across k).
    W1/W2 arrive as int8; per-output-channel scales s1/s2 are applied after the
    matmuls (mathematically identical, much cheaper than rescaling the weights).
    """
    k = pl.program_id(0)

    @pl.when(k == 0)
    def _():
        x = x_ref[...]                                                  # f32
        mean = jnp.mean(x, axis=-1, keepdims=True)
        var = jnp.mean((x - mean) ** 2, axis=-1, keepdims=True)         # biased var (PyTorch LN)
        ln = (x - mean) * jax.lax.rsqrt(var + 1e-12)
        ln_scratch[...] = (ln * gamma_ref[...] + beta_ref[...]).astype(jnp.bfloat16)
        o_ref[...] = jnp.zeros_like(o_ref)

    # dense1 chunk + QuickGELU + dense2 chunk (accumulated into o_ref).
    # int8 weights dequantized to bf16 on the VPU (hidden under weight DMA),
    # bf16 MXU inputs, f32 accumulation, per-column scale applied post-matmul.
    w1 = w1_ref[0].astype(jnp.bfloat16)                                  # (D, ht)
    h = jnp.dot(ln_scratch[...], w1,
                preferred_element_type=jnp.float32) * s1_ref[...] + b1_ref[...]
    g = h * jax.nn.sigmoid(1.702 * h)                                    # QuickGELU
    w2 = w2_ref[...].astype(jnp.bfloat16)                                # (ht, D)
    o_ref[...] += jnp.dot(g.astype(jnp.bfloat16), w2,
                          preferred_element_type=jnp.float32)

    @pl.when(k == pl.num_programs(0) - 1)
    def _():
        # dropout is identity in eval; apply W2 per-column scale (linear, so it
        # can be folded after the chunk sum), add bias2 and the pre-LN residual.
        o_ref[...] = o_ref[...] * s2_ref[...] + b2_ref[...] + x_ref[...]


# ------------------------- wrapper --------------------------------------------

def _quantize_int8_per_col(w):
    """Per-output-channel symmetric int8 quantization of a [in, out] matrix."""
    w = w.astype(jnp.float32)
    amax = jnp.max(jnp.abs(w), axis=0, keepdims=True)                    # (1, out)
    scale = jnp.maximum(amax, 1e-12) / 127.0
    wq = jnp.clip(jnp.round(w / scale), -127.0, 127.0).astype(jnp.int8)
    return wq, scale.astype(jnp.float32)


def proj_layer_pallas(x, w1, b1, w2, b2, gamma, beta, *, hidden_tile=1536):
    """x: [B, T, D] float32.  Weights: w1 [D, H], b1 [H], w2 [H, D], b2 [D]."""
    B, T, D = x.shape
    H = w1.shape[1]
    assert H % hidden_tile == 0
    n_rows = B * T
    n_chunks = H // hidden_tile
    assert n_rows % 8 == 0 and D % 128 == 0 and hidden_tile % 128 == 0

    x2 = x.reshape(n_rows, D).astype(jnp.float32)

    # Quantize weights once, outside the kernel (halves weight DMA bytes vs bf16).
    w1q, s1 = _quantize_int8_per_col(w1)                                 # (D,H) i8, (1,H) f32
    w2q, s2 = _quantize_int8_per_col(w2)                                 # (H,D) i8, (1,D) f32
    # Relayout W1 so each hidden chunk is one contiguous HBM slab.
    w1q3 = w1q.reshape(D, n_chunks, hidden_tile).transpose(1, 0, 2)      # (n_chunks, D, ht)

    b1_2 = b1.reshape(1, H).astype(jnp.float32)
    b2_2 = b2.reshape(1, D).astype(jnp.float32)
    gamma_2 = gamma.reshape(1, D).astype(jnp.float32)
    beta_2 = beta.reshape(1, D).astype(jnp.float32)

    grid = (n_chunks,)

    # Actual VMEM need (bytes): int8 weight chunks are double-buffered; x and
    # the output block have constant index maps (resident, single-buffered);
    # plus the bf16 LN scratch and the tiny (sublane-padded) bias/scale/LN rows.
    vmem_need = (
        2 * D * hidden_tile                  # W1 int8 chunk, 2 buffers
        + 2 * hidden_tile * D                # W2 int8 chunk, 2 buffers
        + n_rows * D * 4                     # x (resident)
        + n_rows * D * 4                     # output accumulator (resident)
        + n_rows * D * 2                     # LayerNorm scratch, bf16
        + 2 * 2 * 8 * hidden_tile * 4        # s1 + b1 chunks (padded rows), 2 buffers
        + 4 * 8 * D * 4                      # s2, b2, gamma, beta (padded rows)
    )
    vmem_limit = min(int(vmem_need * 1.5) + (2 << 20), 32 << 20)

    out = pl.pallas_call(
        _proj_layer_kernel,
        out_shape=jax.ShapeDtypeStruct((n_rows, D), jnp.float32),
        grid_spec=pltpu.PrefetchScalarGridSpec(
            num_scalar_prefetch=0,
            grid=grid,
            in_specs=[
                pl.BlockSpec((n_rows, D), lambda k: (0, 0)),             # x (resident)
                pl.BlockSpec((1, D, hidden_tile), lambda k: (k, 0, 0)),  # W1 chunk (int8, contiguous)
                pl.BlockSpec((1, hidden_tile), lambda k: (0, k)),        # s1 chunk
                pl.BlockSpec((1, hidden_tile), lambda k: (0, k)),        # b1 chunk
                pl.BlockSpec((hidden_tile, D), lambda k: (k, 0)),        # W2 chunk (int8, contiguous)
                pl.BlockSpec((1, D), lambda k: (0, 0)),                  # s2
                pl.BlockSpec((1, D), lambda k: (0, 0)),                  # b2
                pl.BlockSpec((1, D), lambda k: (0, 0)),                  # LN gamma
                pl.BlockSpec((1, D), lambda k: (0, 0)),                  # LN beta
            ],
            out_specs=pl.BlockSpec((n_rows, D), lambda k: (0, 0)),       # resident accumulator
            scratch_shapes=[
                pltpu.VMEM((n_rows, D), jnp.bfloat16),                   # LayerNorm(x), bf16
            ],
        ),
        compiler_params=pltpu.CompilerParams(
            dimension_semantics=("arbitrary",),                          # carried scratch/output
            vmem_limit_bytes=vmem_limit,
        ),
    )(x2, w1q3, s1, b1_2, w2q, s2, b2_2, gamma_2, beta_2)

    return out.reshape(B, T, D)


# ------------------------- pure-JAX reference --------------------------------

def proj_layer_ref(x, w1, b1, w2, b2, gamma, beta):
    """Same arithmetic path as the kernel (int8 per-channel weights, bf16 MXU
    inputs, f32 accumulation) so the allclose check validates the kernel, not
    the quantization error (see TODO above)."""
    w1q, s1 = _quantize_int8_per_col(w1)
    w2q, s2 = _quantize_int8_per_col(w2)
    xf = x.astype(jnp.float32)
    mean = jnp.mean(xf, axis=-1, keepdims=True)
    var = jnp.mean((xf - mean) ** 2, axis=-1, keepdims=True)
    ln = ((xf - mean) * jax.lax.rsqrt(var + 1e-12) * gamma + beta).astype(jnp.bfloat16)
    h = jnp.dot(ln, w1q.astype(jnp.bfloat16),
                preferred_element_type=jnp.float32) * s1 + b1
    g = h * jax.nn.sigmoid(1.702 * h)
    y = jnp.dot(g.astype(jnp.bfloat16), w2q.astype(jnp.bfloat16),
                preferred_element_type=jnp.float32) * s2 + b2
    return y + xf


# ------------------------- driver --------------------------------------------

if __name__ == "__main__":
    key = jax.random.PRNGKey(0)
    k_x, k_w1, k_b1, k_w2, k_b2, k_g, k_be = jax.random.split(key, 7)

    # Module-implied shapes: proj_in_dim = proj_out_dim = 768, hidden = 768*4.
    # Small batch / query count: B=2, num_query_token=16.
    B, NQ, D = 2, 16, 768
    H = D * 4

    # blip_embeddings[:, :num_query_token, :]  (synthetic)
    blip_embeddings = jax.random.normal(k_x, (B, NQ, D), dtype=jnp.float32)

    # ProjLayer parameters (deterministic synthetic init).
    w1 = jax.random.normal(k_w1, (D, H), dtype=jnp.float32) * 0.02
    b1 = jax.random.normal(k_b1, (H,), dtype=jnp.float32) * 0.01
    w2 = jax.random.normal(k_w2, (H, D), dtype=jnp.float32) * 0.02
    b2 = jax.random.normal(k_b2, (D,), dtype=jnp.float32) * 0.01
    gamma = 1.0 + 0.01 * jax.random.normal(k_g, (D,), dtype=jnp.float32)
    beta = 0.01 * jax.random.normal(k_be, (D,), dtype=jnp.float32)

    ctx_embeddings = proj_layer_pallas(blip_embeddings, w1, b1, w2, b2, gamma, beta)
    ctx_embeddings = jax.block_until_ready(ctx_embeddings)

    ref = proj_layer_ref(blip_embeddings, w1, b1, w2, b2, gamma, beta)
    ref = jax.block_until_ready(ref)

    assert ctx_embeddings.shape == (B, NQ, D)
    assert np.allclose(np.asarray(ctx_embeddings), np.asarray(ref), rtol=1e-2, atol=1e-2), \
        "Pallas ProjLayer output mismatch vs reference"

    print("KERNEL_OK")
</pallas_src>

<mosaic_0001>
module attributes {stable_mosaic.version = 11 : i64} {
  func.func @_proj_layer_kernel(%arg0: i32, %arg1: memref<32x768xf32, #tpu.memory_space<vmem>>, %arg2: memref<1x768x1536xi8, #tpu.memory_space<vmem>>, %arg3: memref<1x1536xf32, #tpu.memory_space<vmem>>, %arg4: memref<1x1536xf32, #tpu.memory_space<vmem>>, %arg5: memref<1536x768xi8, #tpu.memory_space<vmem>>, %arg6: memref<1x768xf32, #tpu.memory_space<vmem>>, %arg7: memref<1x768xf32, #tpu.memory_space<vmem>>, %arg8: memref<1x768xf32, #tpu.memory_space<vmem>>, %arg9: memref<1x768xf32, #tpu.memory_space<vmem>>, %arg10: memref<32x768xf32, #tpu.memory_space<vmem>>, %arg11: memref<32x768xbf16, #tpu.memory_space<vmem>>) attributes {dimension_semantics = [#tpu.dimension_semantics<arbitrary>], iteration_bounds = array<i64: 2>, scalar_prefetch = 0 : i64, scratch_operands = 1 : i64, tpu.core_type = #tpu.core_type<tc>, window_params = [{pipeline_mode = #tpu.pipeline_mode<synchronous>, transform_indices = @transform_0, window_bounds = array<i64: 32, 768>}, {transform_indices = @transform_1, window_bounds = array<i64: 1, 768, 1536>}, {transform_indices = @transform_2, window_bounds = array<i64: 1, 1536>}, {transform_indices = @transform_3, window_bounds = array<i64: 1, 1536>}, {transform_indices = @transform_4, window_bounds = array<i64: 1536, 768>}, {pipeline_mode = #tpu.pipeline_mode<synchronous>, transform_indices = @transform_5, window_bounds = array<i64: 1, 768>}, {pipeline_mode = #tpu.pipeline_mode<synchronous>, transform_indices = @transform_6, window_bounds = array<i64: 1, 768>}, {pipeline_mode = #tpu.pipeline_mode<synchronous>, transform_indices = @transform_7, window_bounds = array<i64: 1, 768>}, {pipeline_mode = #tpu.pipeline_mode<synchronous>, transform_indices = @transform_8, window_bounds = array<i64: 1, 768>}, {pipeline_mode = #tpu.pipeline_mode<synchronous>, transform_indices = @transform_9, window_bounds = array<i64: 32, 768>}]} {
    %c0_i32 = arith.constant 0 : i32
    %0 = arith.cmpi eq, %arg0, %c0_i32 : i32
    %1 = arith.extui %0 : i1 to i32
    %c0_i32_0 = arith.constant 0 : i32
    %2 = arith.cmpi ne, %1, %c0_i32_0 : i32
    scf.if %2 {
      %c0_19 = arith.constant 0 : index
      %c0_20 = arith.constant 0 : index
      %32 = vector.load %arg1[%c0_19, %c0_20] : memref<32x768xf32, #tpu.memory_space<vmem>>, vector<32x768xf32>
      %cst_21 = arith.constant dense<0.000000e+00> : vector<32xf32>
      %33 = vector.multi_reduction <add>, %32, %cst_21 [1] : vector<32x768xf32> to vector<32xf32>
      %34 = vector.shape_cast %33 : vector<32xf32> to vector<32x1xf32>
      %cst_22 = arith.constant 7.680000e+02 : f32
      %35 = vector.broadcast %cst_22 : f32 to vector<32x1xf32>
      %36 = arith.divf %34, %35 : vector<32x1xf32>
      %37 = vector.broadcast %36 : vector<32x1xf32> to vector<32x768xf32>
      %38 = arith.subf %32, %37 : vector<32x768xf32>
      %39 = arith.mulf %38, %38 : vector<32x768xf32>
      %cst_23 = arith.constant dense<0.000000e+00> : vector<32xf32>
      %40 = vector.multi_reduction <add>, %39, %cst_23 [1] : vector<32x768xf32> to vector<32xf32>
      %41 = vector.shape_cast %40 : vector<32xf32> to vector<32x1xf32>
      %cst_24 = arith.constant 7.680000e+02 : f32
      %42 = vector.broadcast %cst_24 : f32 to vector<32x1xf32>
      %43 = arith.divf %41, %42 : vector<32x1xf32>
      %44 = vector.broadcast %36 : vector<32x1xf32> to vector<32x768xf32>
      %45 = arith.subf %32, %44 : vector<32x768xf32>
      %cst_25 = arith.constant 9.99999996E-13 : f32
      %46 = vector.broadcast %cst_25 : f32 to vector<32x1xf32>
      %47 = arith.addf %43, %46 : vector<32x1xf32>
      %48 = math.rsqrt %47 : vector<32x1xf32>
      %49 = vector.broadcast %48 : vector<32x1xf32> to vector<32x768xf32>
      %50 = arith.mulf %45, %49 : vector<32x768xf32>
      %c0_26 = arith.constant 0 : index
      %c0_27 = arith.constant 0 : index
      %51 = vector.load %arg8[%c0_26, %c0_27] : memref<1x768xf32, #tpu.memory_space<vmem>>, vector<1x768xf32>
      %52 = vector.broadcast %51 : vector<1x768xf32> to vector<32x768xf32>
      %53 = arith.mulf %50, %52 : vector<32x768xf32>
      %c0_28 = arith.constant 0 : index
      %c0_29 = arith.constant 0 : index
      %54 = vector.load %arg9[%c0_28, %c0_29] : memref<1x768xf32, #tpu.memory_space<vmem>>, vector<1x768xf32>
      %55 = vector.broadcast %54 : vector<1x768xf32> to vector<32x768xf32>
      %56 = arith.addf %53, %55 : vector<32x768xf32>
      %57 = arith.truncf %56 : vector<32x768xf32> to vector<32x768xbf16>
      %c0_30 = arith.constant 0 : index
      %c0_31 = arith.constant 0 : index
      %58 = vector.load %arg11[%c0_30, %c0_31] : memref<32x768xbf16, #tpu.memory_space<vmem>>, vector<32x768xbf16>
      tpu.vector_store %arg11[%c0_30, %c0_31], %57 {strides = array<i32>} : memref<32x768xbf16, #tpu.memory_space<vmem>>, vector<32x768xbf16>,
      %cst_32 = arith.constant 0.000000e+00 : f32
      %59 = vector.broadcast %cst_32 : f32 to vector<32x768xf32>
      %c0_33 = arith.constant 0 : index
      %c0_34 = arith.constant 0 : index
      %60 = vector.load %arg10[%c0_33, %c0_34] : memref<32x768xf32, #tpu.memory_space<vmem>>, vector<32x768xf32>
      tpu.vector_store %arg10[%c0_33, %c0_34], %59 {strides = array<i32>} : memref<32x768xf32, #tpu.memory_space<vmem>>, vector<32x768xf32>,
    } else {
    }
    %c0 = arith.constant 0 : index
    %c0_1 = arith.constant 0 : index
    %c0_2 = arith.constant 0 : index
    %3 = vector.load %arg2[%c0, %c0_1, %c0_2] : memref<1x768x1536xi8, #tpu.memory_space<vmem>>, vector<1x768x1536xi8>
    %4 = vector.shape_cast %3 : vector<1x768x1536xi8> to vector<768x1536xi8>
    %5 = arith.sitofp %4 : vector<768x1536xi8> to vector<768x1536xbf16>
    %c0_3 = arith.constant 0 : index
    %c0_4 = arith.constant 0 : index
    %6 = vector.load %arg11[%c0_3, %c0_4] : memref<32x768xbf16, #tpu.memory_space<vmem>>, vector<32x768xbf16>
    %cst = arith.constant dense<0.000000e+00> : vector<32x1536xf32>
    %7 = tpu.matmul %6, %5, %cst {dimension_numbers = #tpu.dot_dimension_numbers<[1], [0], [0], [1], [0, 0, 1, 1], [], []>} : vector<32x768xbf16>, vector<768x1536xbf16>, vector<32x1536xf32> -> vector<32x1536xf32>
    %c0_5 = arith.constant 0 : index
    %c0_6 = arith.constant 0 : index
    %8 = vector.load %arg3[%c0_5, %c0_6] : memref<1x1536xf32, #tpu.memory_space<vmem>>, vector<1x1536xf32>
    %9 = vector.broadcast %8 : vector<1x1536xf32> to vector<32x1536xf32>
    %10 = arith.mulf %7, %9 : vector<32x1536xf32>
    %c0_7 = arith.constant 0 : index
    %c0_8 = arith.constant 0 : index
    %11 = vector.load %arg4[%c0_7, %c0_8] : memref<1x1536xf32, #tpu.memory_space<vmem>>, vector<1x1536xf32>
    %12 = vector.broadcast %11 : vector<1x1536xf32> to vector<32x1536xf32>
    %13 = arith.addf %10, %12 : vector<32x1536xf32>
    %cst_9 = arith.constant 1.702000e+00 : f32
    %14 = vector.broadcast %cst_9 : f32 to vector<32x1536xf32>
    %15 = arith.mulf %14, %13 : vector<32x1536xf32>
    %16 = arith.negf %15 : vector<32x1536xf32>
    %17 = math.exp %16 : vector<32x1536xf32>
    %cst_10 = arith.constant 1.000000e+00 : f32
    %18 = vector.broadcast %cst_10 : f32 to vector<32x1536xf32>
    %19 = arith.addf %18, %17 : vector<32x1536xf32>
    %20 = arith.divf %18, %19 : vector<32x1536xf32>
    %21 = arith.mulf %13, %20 : vector<32x1536xf32>
    %c0_11 = arith.constant 0 : index
    %c0_12 = arith.constant 0 : index
    %22 = vector.load %arg5[%c0_11, %c0_12] : memref<1536x768xi8, #tpu.memory_space<vmem>>, vector<1536x768xi8>
    %23 = arith.sitofp %22 : vector<1536x768xi8> to vector<1536x768xbf16>
    %c0_13 = arith.constant 0 : index
    %c0_14 = arith.constant 0 : index
    %24 = vector.load %arg10[%c0_13, %c0_14] : memref<32x768xf32, #tpu.memory_space<vmem>>, vector<32x768xf32>
    %25 = arith.truncf %21 : vector<32x1536xf32> to vector<32x1536xbf16>
    %cst_15 = arith.constant dense<0.000000e+00> : vector<32x768xf32>
    %26 = tpu.matmul %25, %23, %cst_15 {dimension_numbers = #tpu.dot_dimension_numbers<[1], [0], [0], [1], [0, 0, 1, 1], [], []>} : vector<32x1536xbf16>, vector<1536x768xbf16>, vector<32x768xf32> -> vector<32x768xf32>
    %27 = arith.addf %24, %26 : vector<32x768xf32>
    %c0_16 = arith.constant 0 : index
    %c0_17 = arith.constant 0 : index
    %28 = vector.load %arg10[%c0_16, %c0_17] : memref<32x768xf32, #tpu.memory_space<vmem>>, vector<32x768xf32>
    tpu.vector_store %arg10[%c0_16, %c0_17], %27 {strides = array<i32>} : memref<32x768xf32, #tpu.memory_space<vmem>>, vector<32x768xf32>,
    %c1_i32 = arith.constant 1 : i32
    %29 = arith.cmpi eq, %arg0, %c1_i32 : i32
    %30 = arith.extui %29 : i1 to i32
    %c0_i32_18 = arith.constant 0 : i32
    %31 = arith.cmpi ne, %30, %c0_i32_18 : i32
    scf.if %31 {
      %c0_19 = arith.constant 0 : index
      %c0_20 = arith.constant 0 : index
      %32 = vector.load %arg10[%c0_19, %c0_20] : memref<32x768xf32, #tpu.memory_space<vmem>>, vector<32x768xf32>
      %c0_21 = arith.constant 0 : index
      %c0_22 = arith.constant 0 : index
      %33 = vector.load %arg6[%c0_21, %c0_22] : memref<1x768xf32, #tpu.memory_space<vmem>>, vector<1x768xf32>
      %34 = vector.broadcast %33 : vector<1x768xf32> to vector<32x768xf32>
      %35 = arith.mulf %32, %34 : vector<32x768xf32>
      %c0_23 = arith.constant 0 : index
      %c0_24 = arith.constant 0 : index
      %36 = vector.load %arg7[%c0_23, %c0_24] : memref<1x768xf32, #tpu.memory_space<vmem>>, vector<1x768xf32>
      %37 = vector.broadcast %36 : vector<1x768xf32> to vector<32x768xf32>
      %38 = arith.addf %35, %37 : vector<32x768xf32>
      %c0_25 = arith.constant 0 : index
      %c0_26 = arith.constant 0 : index
      %39 = vector.load %arg1[%c0_25, %c0_26] : memref<32x768xf32, #tpu.memory_space<vmem>>, vector<32x768xf32>
      %40 = arith.addf %38, %39 : vector<32x768xf32>
      %c0_27 = arith.constant 0 : index
      %c0_28 = arith.constant 0 : index
      %41 = vector.load %arg10[%c0_27, %c0_28] : memref<32x768xf32, #tpu.memory_space<vmem>>, vector<32x768xf32>
      tpu.vector_store %arg10[%c0_27, %c0_28], %40 {strides = array<i32>} : memref<32x768xf32, #tpu.memory_space<vmem>>, vector<32x768xf32>,
    } else {
    }
    return
  }
  func.func @transform_0(%arg0: i32) -> (i32, i32) {
    %c0_i32 = arith.constant 0 : i32
    %c0_i32_0 = arith.constant 0 : i32
    %c0_i32_1 = arith.constant 0 : i32
    return %c0_i32, %c0_i32_0 : i32, i32
  }
  func.func @transform_1(%arg0: i32) -> (i32, i32, i32) {
    %c0_i32 = arith.constant 0 : i32
    %c0_i32_0 = arith.constant 0 : i32
    %c0_i32_1 = arith.constant 0 : i32
    return %arg0, %c0_i32, %c0_i32_0 : i32, i32, i32
  }
  func.func @transform_2(%arg0: i32) -> (i32, i32) {
    %c0_i32 = arith.constant 0 : i32
    %c0_i32_0 = arith.constant 0 : i32
    return %c0_i32, %arg0 : i32, i32
  }
  func.func @transform_3(%arg0: i32) -> (i32, i32) {
    %c0_i32 = arith.constant 0 : i32
    %c0_i32_0 = arith.constant 0 : i32
    return %c0_i32, %arg0 : i32, i32
  }
  func.func @transform_4(%arg0: i32) -> (i32, i32) {
    %c0_i32 = arith.constant 0 : i32
    %c0_i32_0 = arith.constant 0 : i32
    return %arg0, %c0_i32 : i32, i32
  }
  func.func @transform_5(%arg0: i32) -> (i32, i32) {
    %c0_i32 = arith.constant 0 : i32
    %c0_i32_0 = arith.constant 0 : i32
    %c0_i32_1 = arith.constant 0 : i32
    return %c0_i32, %c0_i32_0 : i32, i32
  }
  func.func @transform_6(%arg0: i32) -> (i32, i32) {
    %c0_i32 = arith.constant 0 : i32
    %c0_i32_0 = arith.constant 0 : i32
    %c0_i32_1 = arith.constant 0 : i32
    return %c0_i32, %c0_i32_0 : i32, i32
  }
  func.func @transform_7(%arg0: i32) -> (i32, i32) {
    %c0_i32 = arith.constant 0 : i32
    %c0_i32_0 = arith.constant 0 : i32
    %c0_i32_1 = arith.constant 0 : i32
    return %c0_i32, %c0_i32_0 : i32, i32
  }
  func.func @transform_8(%arg0: i32) -> (i32, i32) {
    %c0_i32 = arith.constant 0 : i32
    %c0_i32_0 = arith.constant 0 : i32
    %c0_i32_1 = arith.constant 0 : i32
    return %c0_i32, %c0_i32_0 : i32, i32
  }
  func.func @transform_9(%arg0: i32) -> (i32, i32) {
    %c0_i32 = arith.constant 0 : i32
    %c0_i32_0 = arith.constant 0 : i32
    %c0_i32_1 = arith.constant 0 : i32
    return %c0_i32, %c0_i32_0 : i32, i32
  }
}

</mosaic_0001>

<llo_original>
// kernel: tpu_custom_call.1
$region0: #{tpu_custom_call.1}
  #allocation0 [shape = 'u32[]', space=smem, size = 0x4, offset = 0x4, fixed_abs, tag = 'smem constant byte address 0x4 - core index']
  #allocation1 [shape = 'u32[144,128]{1,0:T(1,128)}', space=vmem, size = 0x12000, scoped, tag = 'internal scratch']
  #allocation2 [shape = 'bf16[32,768]{1,0:T(16,128)(2,1)}', space=vmem, size = 0xc000, scoped, tag = 'scratch operand']
  %s0 = inlined_call_operand.hbm [shape: f32[32,768], index: 0, kind: input, shape index: {}]
  %s1 = inlined_call_operand.hbm [shape: s8[2,768,1536], index: 1, kind: input, shape index: {}]
  %s2 = inlined_call_operand.hbm [shape: f32[1,3072], index: 2, kind: input, shape index: {}]
  %s3 = inlined_call_operand.hbm [shape: f32[1,3072], index: 3, kind: input, shape index: {}]
  %s4 = inlined_call_operand.hbm [shape: s8[3072,768], index: 4, kind: input, shape index: {}]
  %s5 = inlined_call_operand.hbm [shape: f32[1,768], index: 5, kind: input, shape index: {}]
  %s6 = inlined_call_operand.hbm [shape: f32[1,768], index: 6, kind: input, shape index: {}]
  %s7 = inlined_call_operand.hbm [shape: f32[1,768], index: 7, kind: input, shape index: {}]
  %s8 = inlined_call_operand.hbm [shape: f32[1,768], index: 8, kind: input, shape index: {}]
  %s9 = inlined_call_operand.hbm [shape: f32[32,768], index: 9, kind: output, shape index: {}]
  %s10 = sld [smem:[#allocation0]]
  $region113: #{tpu_custom_call.1} parent=0
    _
  %s12 = ssub.s32 1, %s10
  %s13 = scalar_select 0, %s12, %s10
  $region1: #{tpu_custom_call.1} parent=0
    #allocation3 [shape = 'u8[98304]{0}', space=vmem, size = 0x18000, scoped, tag = 'input window, operand 0, single buffered']
    #allocation4 [shape = 's32[2]{0}', space=sflag, size = 0x8, scoped, tag = 'scoped memory for tpu_custom_call.1']
    #allocation5 [shape = 's32[2]{0}', space=sflag, size = 0x8, scoped, tag = 'scoped memory for tpu_custom_call.1']
    #allocation6 [shape = 'u8[2359296]{0}', space=vmem, size = 0x240000, scoped, tag = 'input window, operand 1']
    #allocation7 [shape = 's32[2]{0}', space=sflag, size = 0x8, scoped, tag = 'scoped memory for tpu_custom_call.1']
    #allocation8 [shape = 'u8[12288]{0}', space=vmem, size = 0x3000, scoped, tag = 'input window, operand 2']
    #allocation9 [shape = 'u8[12288]{0}', space=vmem, size = 0x3000, scoped, tag = 'input window, operand 3']
    #allocation10 [shape = 's32[2]{0}', space=sflag, size = 0x8, scoped, tag = 'scoped memory for tpu_custom_call.1']
    #allocation11 [shape = 'u8[2359296]{0}', space=vmem, size = 0x240000, scoped, tag = 'input window, operand 4']
    #allocation12 [shape = 'u8[3072]{0}', space=vmem, size = 0xc00, scoped, tag = 'input window, operand 5, single buffered']
    #allocation13 [shape = 's32[1]{0}', space=sflag, size = 0x4, scoped, tag = 'scoped memory for tpu_custom_call.1']
    #allocation14 [shape = 'u8[3072]{0}', space=vmem, size = 0xc00, scoped, tag = 'input window, operand 6, single buffered']
    #allocation15 [shape = 'u8[3072]{0}', space=vmem, size = 0xc00, scoped, tag = 'input window, operand 7, single buffered']
    #allocation16 [shape = 's32[1]{0}', space=sflag, size = 0x4, scoped, tag = 'scoped memory for tpu_custom_call.1']
    #allocation17 [shape = 'u8[3072]{0}', space=vmem, size = 0xc00, scoped, tag = 'input window, operand 8, single buffered']
    #allocation18 [shape = 'u8[98304]{0}', space=vmem, size = 0x18000, scoped, tag = 'output window, operand 0, single buffered']
    %14 = vsyncpa [#allocation4], 0
    %15 = vsyncpa [#allocation7], 0
    %s16 = scalar_lea.sflag [#allocation7], 1
    %17 = vsyncpa %s16, 0
    %18 = vsyncpa [#allocation10], 0
    %s19 = scalar_lea.sflag [#allocation10], 1
    %20 = vsyncpa %s19, 0
    %21 = vsyncpa [#allocation13], 0
    %22 = vsyncpa [#allocation16], 0
    %23 = vsyncpa [#allocation5], 0
    loop: start=0, step=1, limit=4
    $region2: #{tpu_custom_call.1} parent=1 // loop_pre_header
      _
    $region3: #{tpu_custom_call.1} parent=1 // loop_header
      %s25 = sphi 0, %s29
      %p26 = scmp.ge.s32.totalorder %s25, 4
      %s33 = sphi 0, %s33
      %s35 = sphi 0, %s33
      %s36 = sphi 0, %s35
      %s50 = sphi 0, %s36
      %s56 = sphi 0, %s58
      %s59 = sphi 0, %s56
      %s60 = sphi 0, %s59
      %s76 = sphi 0, %s60
      %s82 = sphi 0, %s84
      %s85 = sphi 0, %s82
      %s86 = sphi 0, %s85
      %s102 = sphi 0, %s86
      %s108 = sphi 0, %s110
      %s111 = sphi 0, %s108
      %s112 = sphi 0, %s111
      %s128 = sphi 0, %s112
      %s134 = sphi 0, %s136
      %s137 = sphi 0, %s134
      %s138 = sphi 0, %s137
      %s154 = sphi 0, %s138
      %s158 = sphi 0, %s158
      %s160 = sphi 0, %s158
      %s161 = sphi 0, %s160
      %s175 = sphi 0, %s161
      %s179 = sphi 0, %s179
      %s181 = sphi 0, %s179
      %s182 = sphi 0, %s181
      %s196 = sphi 0, %s182
      %s200 = sphi 0, %s200
      %s202 = sphi 0, %s200
      %s203 = sphi 0, %s202
      %s217 = sphi 0, %s203
      %s221 = sphi 0, %s221
      %s223 = sphi 0, %s221
      %s224 = sphi 0, %s223
      %s238 = sphi 0, %s224
      %s242 = sphi 0, %s242
      %s244 = sphi 0, %s242
      %s245 = sphi 0, %s244
      %s259 = sphi 0, %s245
    $region4: #{tpu_custom_call.1} parent=1 // loop_header_branch
      %28 = sbr.rel (%p26) target = $region8
    $region5: #{tpu_custom_call.1} parent=1 // loop_body
      %s30 = ssub.s32 %s25, 1
      %s31 = ssub.s32 %s25, 2
      %s32 = sadd.s32 %s25, 1
      %s34 = sadd.s32 %s33, 1
      %p37 = scmp.eq.s32.totalorder %s25, 1
      %p38 = scmp.ne.s32.totalorder %s33, %s35
      %p39 = scmp.eq.s32.totalorder %s25, 0
      %p40 = por %p38, %p39
      %p41 = scmp.ne.s32.totalorder %s33, %s35
      %p42 = scmp.eq.s32.totalorder %s30, 1
      %p43 = por %p41, %p42
      %p44 = scmp.ne.s32.totalorder %s35, %s36
      %p45 = scmp.eq.s32.totalorder %s30, 0
      %p46 = por %p44, %p45
      %p47 = scmp.ne.s32.totalorder %s35, %s36
      %p48 = scmp.eq.s32.totalorder %s31, 1
      %p49 = por %p47, %p48
      %p51 = scmp.ne.s32.totalorder %s36, %s50
      %p52 = scmp.eq.s32.totalorder %s31, 0
      %p53 = por %p51, %p52
      %s54 = ssub.s32 %s25, %s32
      %p55 = scmp.eq.s32.totalorder %s54, 0
      %s57 = sadd.s32 %s56, 1
      %s58 = scalar_select %p55, %s56, %s57
      %p61 = pneg %p55
      %p62 = scmp.eq.s32.totalorder %s25, 1
      %p63 = por %p61, %p62
      %p64 = scmp.ne.s32.totalorder %s56, %s59
      %p65 = scmp.eq.s32.totalorder %s25, 0
      %p66 = por %p64, %p65
      %p67 = scmp.ne.s32.totalorder %s56, %s59
      %p68 = scmp.eq.s32.totalorder %s30, 1
      %p69 = por %p67, %p68
      %p70 = scmp.ne.s32.totalorder %s59, %s60
      %p71 = scmp.eq.s32.totalorder %s30, 0
      %p72 = por %p70, %p71
      %p73 = scmp.ne.s32.totalorder %s59, %s60
      %p74 = scmp.eq.s32.totalorder %s31, 1
      %p75 = por %p73, %p74
      %p77 = scmp.ne.s32.totalorder %s60, %s76
      %p78 = scmp.eq.s32.totalorder %s31, 0
      %p79 = por %p77, %p78
      %s80 = ssub.s32 %s25, %s32
      %p81 = scmp.eq.s32.totalorder %s80, 0
      %s83 = sadd.s32 %s82, 1
      %s84 = scalar_select %p81, %s82, %s83
      %p87 = pneg %p81
      %p88 = scmp.eq.s32.totalorder %s25, 1
      %p89 = por %p87, %p88
      %p90 = scmp.ne.s32.totalorder %s82, %s85
      %p91 = scmp.eq.s32.totalorder %s25, 0
      %p92 = por %p90, %p91
      %p93 = scmp.ne.s32.totalorder %s82, %s85
      %p94 = scmp.eq.s32.totalorder %s30, 1
      %p95 = por %p93, %p94
      %p96 = scmp.ne.s32.totalorder %s85, %s86
      %p97 = scmp.eq.s32.totalorder %s30, 0
      %p98 = por %p96, %p97
      %p99 = scmp.ne.s32.totalorder %s85, %s86
      %p100 = scmp.eq.s32.totalorder %s31, 1
      %p101 = por %p99, %p100
      %p103 = scmp.ne.s32.totalorder %s86, %s102
      %p104 = scmp.eq.s32.totalorder %s31, 0
      %p105 = por %p103, %p104
      %s106 = ssub.s32 %s25, %s32
      %p107 = scmp.eq.s32.totalorder %s106, 0
      %s109 = sadd.s32 %s108, 1
      %s110 = scalar_select %p107, %s108, %s109
      %p113 = pneg %p107
      %p114 = scmp.eq.s32.totalorder %s25, 1
      %p115 = por %p113, %p114
      %p116 = scmp.ne.s32.totalorder %s108, %s111
      %p117 = scmp.eq.s32.totalorder %s25, 0
      %p118 = por %p116, %p117
      %p119 = scmp.ne.s32.totalorder %s108, %s111
      %p120 = scmp.eq.s32.totalorder %s30, 1
      %p121 = por %p119, %p120
      %p122 = scmp.ne.s32.totalorder %s111, %s112
      %p123 = scmp.eq.s32.totalorder %s30, 0
      %p124 = por %p122, %p123
      %p125 = scmp.ne.s32.totalorder %s111, %s112
      %p126 = scmp.eq.s32.totalorder %s31, 1
      %p127 = por %p125, %p126
      %p129 = scmp.ne.s32.totalorder %s112, %s128
      %p130 = scmp.eq.s32.totalorder %s31, 0
      %p131 = por %p129, %p130
      %s132 = ssub.s32 %s25, %s32
      %p133 = scmp.eq.s32.totalorder %s132, 0
      %s135 = sadd.s32 %s134, 1
      %s136 = scalar_select %p133, %s134, %s135
      %p139 = pneg %p133
      %p140 = scmp.eq.s32.totalorder %s25, 1
      %p141 = por %p139, %p140
      %p142 = scmp.ne.s32.totalorder %s134, %s137
      %p143 = scmp.eq.s32.totalorder %s25, 0
      %p144 = por %p142, %p143
      %p145 = scmp.ne.s32.totalorder %s134, %s137
      %p146 = scmp.eq.s32.totalorder %s30, 1
      %p147 = por %p145, %p146
      %p148 = scmp.ne.s32.totalorder %s137, %s138
      %p149 = scmp.eq.s32.totalorder %s30, 0
      %p150 = por %p148, %p149
      %p151 = scmp.ne.s32.totalorder %s137, %s138
      %p152 = scmp.eq.s32.totalorder %s31, 1
      %p153 = por %p151, %p152
      %p155 = scmp.ne.s32.totalorder %s138, %s154
      %p156 = scmp.eq.s32.totalorder %s31, 0
      %p157 = por %p155, %p156
      %s159 = sadd.s32 %s158, 1
      %p162 = scmp.eq.s32.totalorder %s25, 1
      %p163 = scmp.ne.s32.totalorder %s158, %s160
      %p164 = scmp.eq.s32.totalorder %s25, 0
      %p165 = por %p163, %p164
      %p166 = scmp.ne.s32.totalorder %s158, %s160
      %p167 = scmp.eq.s32.totalorder %s30, 1
      %p168 = por %p166, %p167
      %p169 = scmp.ne.s32.totalorder %s160, %s161
      %p170 = scmp.eq.s32.totalorder %s30, 0
      %p171 = por %p169, %p170
      %p172 = scmp.ne.s32.totalorder %s160, %s161
      %p173 = scmp.eq.s32.totalorder %s31, 1
      %p174 = por %p172, %p173
      %p176 = scmp.ne.s32.totalorder %s161, %s175
      %p177 = scmp.eq.s32.totalorder %s31, 0
      %p178 = por %p176, %p177
      %s180 = sadd.s32 %s179, 1
      %p183 = scmp.eq.s32.totalorder %s25, 1
      %p184 = scmp.ne.s32.totalorder %s179, %s181
      %p185 = scmp.eq.s32.totalorder %s25, 0
      %p186 = por %p184, %p185
      %p187 = scmp.ne.s32.totalorder %s179, %s181
      %p188 = scmp.eq.s32.totalorder %s30, 1
      %p189 = por %p187, %p188
      %p190 = scmp.ne.s32.totalorder %s181, %s182
      %p191 = scmp.eq.s32.totalorder %s30, 0
      %p192 = por %p190, %p191
      %p193 = scmp.ne.s32.totalorder %s181, %s182
      %p194 = scmp.eq.s32.totalorder %s31, 1
      %p195 = por %p193, %p194
      %p197 = scmp.ne.s32.totalorder %s182, %s196
      %p198 = scmp.eq.s32.totalorder %s31, 0
      %p199 = por %p197, %p198
      %s201 = sadd.s32 %s200, 1
      %p204 = scmp.eq.s32.totalorder %s25, 1
      %p205 = scmp.ne.s32.totalorder %s200, %s202
      %p206 = scmp.eq.s32.totalorder %s25, 0
      %p207 = por %p205, %p206
      %p208 = scmp.ne.s32.totalorder %s200, %s202
      %p209 = scmp.eq.s32.totalorder %s30, 1
      %p210 = por %p208, %p209
      %p211 = scmp.ne.s32.totalorder %s202, %s203
      %p212 = scmp.eq.s32.totalorder %s30, 0
      %p213 = por %p211, %p212
      %p214 = scmp.ne.s32.totalorder %s202, %s203
      %p215 = scmp.eq.s32.totalorder %s31, 1
      %p216 = por %p214, %p215
      %p218 = scmp.ne.s32.totalorder %s203, %s217
      %p219 = scmp.eq.s32.totalorder %s31, 0
      %p220 = por %p218, %p219
      %s222 = sadd.s32 %s221, 1
      %p225 = scmp.eq.s32.totalorder %s25, 1
      %p226 = scmp.ne.s32.totalorder %s221, %s223
      %p227 = scmp.eq.s32.totalorder %s25, 0
      %p228 = por %p226, %p227
      %p229 = scmp.ne.s32.totalorder %s221, %s223
      %p230 = scmp.eq.s32.totalorder %s30, 1
      %p231 = por %p229, %p230
      %p232 = scmp.ne.s32.totalorder %s223, %s224
      %p233 = scmp.eq.s32.totalorder %s30, 0
      %p234 = por %p232, %p233
      %p235 = scmp.ne.s32.totalorder %s223, %s224
      %p236 = scmp.eq.s32.totalorder %s31, 1
      %p237 = por %p235, %p236
      %p239 = scmp.ne.s32.totalorder %s224, %s238
      %p240 = scmp.eq.s32.totalorder %s31, 0
      %p241 = por %p239, %p240
      %s243 = sadd.s32 %s242, 1
      %p246 = scmp.eq.s32.totalorder %s25, 1
      %p247 = scmp.ne.s32.totalorder %s242, %s244
      %p248 = scmp.eq.s32.totalorder %s25, 0
      %p249 = por %p247, %p248
      %p250 = scmp.ne.s32.totalorder %s242, %s244
      %p251 = scmp.eq.s32.totalorder %s30, 1
      %p252 = por %p250, %p251
      %p253 = scmp.ne.s32.totalorder %s244, %s245
      %p254 = scmp.eq.s32.totalorder %s30, 0
      %p255 = por %p253, %p254
      %p256 = scmp.ne.s32.totalorder %s244, %s245
      %p257 = scmp.eq.s32.totalorder %s31, 1
      %p258 = por %p256, %p257
      %p260 = scmp.ne.s32.totalorder %s245, %s259
      %p261 = scmp.eq.s32.totalorder %s31, 0
      %p262 = por %p260, %p261
      %p263 = scmp.le.s32.totalorder 1, %s25
      %p264 = scmp.lt.s32.totalorder %s25, 3
      %p265 = pnand %p263, %p264
      %p266 = pneg %p265
      // Predicated region
      $region9: #{tpu_custom_call.1} parent=5 // pred_check
        _
      $region10: #{tpu_custom_call.1} parent=5 // pred_check_branch
        %268 = sbr.rel (%p265) target = $region12
      $region11: #{tpu_custom_call.1} parent=5 // pred_region
        %s269 = ssub.s32 %s25, 1
        // Predicated region
        $region13: #{tpu_custom_call.1} parent=11 // pred_check
          %p270 = pneg %p46
        $region14: #{tpu_custom_call.1} parent=11 // pred_check_branch
          %272 = sbr.rel (%p270) target = $region16
        $region15: #{tpu_custom_call.1} parent=11 // pred_region
          %s274 = ssub.s32 3072, 3072
          %275 = vsyncadd [#allocation4], %s274
          %s276 = sshll.u32 [#allocation3], 4
          %s277 = int_to_ptr.vmem [resolvable:$true] %s276
          %282 = dma.hbm_to_vmem [thread:$0]  %s0, 3072, %s277, [#allocation4], 768, 768, 48
        $region16: #{tpu_custom_call.1} parent=11 // pred_fallthru
          _
        // Predicated region
        $region17: #{tpu_custom_call.1} parent=11 // pred_check
          %p283 = pneg %p171
        $region18: #{tpu_custom_call.1} parent=11 // pred_check_branch
          %285 = sbr.rel (%p283) target = $region20
        $region19: #{tpu_custom_call.1} parent=11 // pred_region
          %s287 = ssub.s32 96, 96
          %288 = vsyncadd [#allocation13], %s287
          %s290 = sshll.u32 [#allocation12], 4
          %s291 = int_to_ptr.vmem [resolvable:$true] %s290
          %293 = dma.hbm_to_vmem [thread:$0]  %s5, 96, %s291, [#allocation13]
        $region20: #{tpu_custom_call.1} parent=11 // pred_fallthru
          _
        // Predicated region
        $region21: #{tpu_custom_call.1} parent=11 // pred_check
          %p294 = pneg %p192
        $region22: #{tpu_custom_call.1} parent=11 // pred_check_branch
          %296 = sbr.rel (%p294) target = $region24
        $region23: #{tpu_custom_call.1} parent=11 // pred_region
          %s298 = ssub.s32 96, 96
          %299 = vsyncadd [#allocation13], %s298
          %s301 = sshll.u32 [#allocation14], 4
          %s302 = int_to_ptr.vmem [resolvable:$true] %s301
          %304 = dma.hbm_to_vmem [thread:$0]  %s6, 96, %s302, [#allocation13]
        $region24: #{tpu_custom_call.1} parent=11 // pred_fallthru
          _
        // Predicated region
        $region25: #{tpu_custom_call.1} parent=11 // pred_check
          %p305 = pneg %p213
        $region26: #{tpu_custom_call.1} parent=11 // pred_check_branch
          %307 = sbr.rel (%p305) target = $region28
        $region27: #{tpu_custom_call.1} parent=11 // pred_region
          %s309 = ssub.s32 96, 96
          %310 = vsyncadd [#allocation16], %s309
          %s312 = sshll.u32 [#allocation15], 4
          %s313 = int_to_ptr.vmem [resolvable:$true] %s312
          %315 = dma.hbm_to_vmem [thread:$0]  %s7, 96, %s313, [#allocation16]
        $region28: #{tpu_custom_call.1} parent=11 // pred_fallthru
          _
        // Predicated region
        $region29: #{tpu_custom_call.1} parent=11 // pred_check
          %p316 = pneg %p234
        $region30: #{tpu_custom_call.1} parent=11 // pred_check_branch
          %318 = sbr.rel (%p316) target = $region32
        $region31: #{tpu_custom_call.1} parent=11 // pred_region
          %s320 = ssub.s32 96, 96
          %321 = vsyncadd [#allocation16], %s320
          %s323 = sshll.u32 [#allocation17], 4
          %s324 = int_to_ptr.vmem [resolvable:$true] %s323
          %326 = dma.hbm_to_vmem [thread:$0]  %s8, 96, %s324, [#allocation16]
        $region32: #{tpu_custom_call.1} parent=11 // pred_fallthru
          _
      $region12: #{tpu_custom_call.1} parent=5 // pred_fallthru
        _
      %p327 = scmp.lt.s32.totalorder %s25, 2
      // Predicated region
      $region33: #{tpu_custom_call.1} parent=5 // pred_check
        %p328 = pneg %p327
      $region34: #{tpu_custom_call.1} parent=5 // pred_check_branch
        %330 = sbr.rel (%p328) target = $region36
      $region35: #{tpu_custom_call.1} parent=5 // pred_region
        // Predicated region
        $region37: #{tpu_custom_call.1} parent=35 // pred_check
          %p331 = pneg %p66
        $region38: #{tpu_custom_call.1} parent=35 // pred_check_branch
          %333 = sbr.rel (%p331) target = $region40
        $region39: #{tpu_custom_call.1} parent=35 // pred_region
          %s334 = sand.u32 %s25, 1
          %s335 = scalar_lea.sflag [#allocation7], %s334
          %s336 = sand.u32 %s56, 1
          %s337 = smul.addr %s336, 2304
          %s338 = scalar_lea.vmem [#allocation6], %s337
          %s340 = ssub.s32 36864, 36864
          %341 = vsyncadd %s335, %s340
          %s342 = smul.addr %s25, 288
          %s343 = smul.addr %s342, 128
          %s344 = scalar_lea.hbm %s1, %s343
          %s345 = sshll.u32 %s338, 4
          %s346 = int_to_ptr.vmem [resolvable:$true] %s345
          %351 = dma.hbm_to_vmem [thread:$0]  %s344, 36864, %s346, %s335, 1536, 1536, 96
        $region40: #{tpu_custom_call.1} parent=35 // pred_fallthru
          _
        // Predicated region
        $region41: #{tpu_custom_call.1} parent=35 // pred_check
          %p352 = pneg %p92
        $region42: #{tpu_custom_call.1} parent=35 // pred_check_branch
          %354 = sbr.rel (%p352) target = $region44
        $region43: #{tpu_custom_call.1} parent=35 // pred_region
          %s355 = sand.u32 %s25, 1
          %s356 = scalar_lea.sflag [#allocation7], %s355
          %s357 = sand.u32 %s82, 1
          %s358 = smul.addr %s357, 12
          %s359 = scalar_lea.vmem [#allocation8], %s358
          %s360 = smul.u32 12, %s25
          %s362 = ssub.s32 192, 192
          %363 = vsyncadd %s356, %s362
          %s364 = smul.addr %s360, 16
          %s365 = scalar_lea.hbm %s2, %s364
          %s367 = sshll.u32 %s359, 4
          %s368 = int_to_ptr.vmem [resolvable:$true] %s367
          %370 = dma.hbm_to_vmem [thread:$0]  %s365, 192, %s368, %s356
        $region44: #{tpu_custom_call.1} parent=35 // pred_fallthru
          _
        // Predicated region
        $region45: #{tpu_custom_call.1} parent=35 // pred_check
          %p371 = pneg %p118
        $region46: #{tpu_custom_call.1} parent=35 // pred_check_branch
          %373 = sbr.rel (%p371) target = $region48
        $region47: #{tpu_custom_call.1} parent=35 // pred_region
          %s374 = sand.u32 %s25, 1
          %s375 = scalar_lea.sflag [#allocation10], %s374
          %s376 = sand.u32 %s108, 1
          %s377 = smul.addr %s376, 12
          %s378 = scalar_lea.vmem [#allocation9], %s377
          %s379 = smul.u32 12, %s25
          %s381 = ssub.s32 192, 192
          %382 = vsyncadd %s375, %s381
          %s383 = smul.addr %s379, 16
          %s384 = scalar_lea.hbm %s3, %s383
          %s386 = sshll.u32 %s378, 4
          %s387 = int_to_ptr.vmem [resolvable:$true] %s386
          %389 = dma.hbm_to_vmem [thread:$0]  %s384, 192, %s387, %s375
        $region48: #{tpu_custom_call.1} parent=35 // pred_fallthru
          _
        // Predicated region
        $region49: #{tpu_custom_call.1} parent=35 // pred_check
          %p390 = pneg %p144
        $region50: #{tpu_custom_call.1} parent=35 // pred_check_branch
          %392 = sbr.rel (%p390) target = $region52
        $region51: #{tpu_custom_call.1} parent=35 // pred_region
          %s393 = sand.u32 %s25, 1
          %s394 = scalar_lea.sflag [#allocation10], %s393
          %s395 = sand.u32 %s134, 1
          %s396 = smul.addr %s395, 2304
          %s397 = scalar_lea.vmem [#allocation11], %s396
          %s398 = smul.u32 48, %s25
          %s400 = ssub.s32 36864, 36864
          %401 = vsyncadd %s394, %s400
          %s402 = smul.addr %s398, 6
          %s403 = smul.addr %s402, 128
          %s404 = scalar_lea.hbm %s4, %s403
          %s405 = sshll.u32 %s397, 4
          %s406 = int_to_ptr.vmem [resolvable:$true] %s405
          %411 = dma.hbm_to_vmem [thread:$0]  %s404, 36864, %s406, %s394, 768, 768, 48
        $region52: #{tpu_custom_call.1} parent=35 // pred_fallthru
          _
      $region36: #{tpu_custom_call.1} parent=5 // pred_fallthru
        _
      %p412 = scmp.le.s32.totalorder 1, %s25
      %p413 = scmp.lt.s32.totalorder %s25, 3
      %p414 = pnand %p412, %p413
      %p415 = pneg %p414
      // Predicated region
      $region53: #{tpu_custom_call.1} parent=5 // pred_check
        _
      $region54: #{tpu_custom_call.1} parent=5 // pred_check_branch
        %417 = sbr.rel (%p414) target = $region56
      $region55: #{tpu_custom_call.1} parent=5 // pred_region
        %s418 = ssub.s32 %s25, 1
        // Predicated region
        $region57: #{tpu_custom_call.1} parent=55 // pred_check
          %p419 = pneg %p46
        $region58: #{tpu_custom_call.1} parent=55 // pred_check_branch
          %421 = sbr.rel (%p419) target = $region60
        $region59: #{tpu_custom_call.1} parent=55 // pred_region
          %422 = dma.done [#allocation4], 3072
        $region60: #{tpu_custom_call.1} parent=55 // pred_fallthru
          _
        %s423 = sand.u32 %s30, 1
        %s424 = scalar_lea.sflag [#allocation7], %s423
        %s425 = sand.u32 %s59, 1
        %s426 = smul.addr %s425, 2304
        %s427 = scalar_lea.vmem [#allocation6], %s426
        // Predicated region
        $region61: #{tpu_custom_call.1} parent=55 // pred_check
          %p428 = pneg %p72
        $region62: #{tpu_custom_call.1} parent=55 // pred_check_branch
          %430 = sbr.rel (%p428) target = $region64
        $region63: #{tpu_custom_call.1} parent=55 // pred_region
          %431 = dma.done %s424, 36864
        $region64: #{tpu_custom_call.1} parent=55 // pred_fallthru
          _
        %s432 = sand.u32 %s30, 1
        %s433 = scalar_lea.sflag [#allocation7], %s432
        %s434 = sand.u32 %s85, 1
        %s435 = smul.addr %s434, 12
        %s436 = scalar_lea.vmem [#allocation8], %s435
        // Predicated region
        $region65: #{tpu_custom_call.1} parent=55 // pred_check
          %p437 = pneg %p98
        $region66: #{tpu_custom_call.1} parent=55 // pred_check_branch
          %439 = sbr.rel (%p437) target = $region68
        $region67: #{tpu_custom_call.1} parent=55 // pred_region
          %440 = dma.done %s433, 192
        $region68: #{tpu_custom_call.1} parent=55 // pred_fallthru
          _
        %s441 = sand.u32 %s30, 1
        %s442 = scalar_lea.sflag [#allocation10], %s441
        %s443 = sand.u32 %s111, 1
        %s444 = smul.addr %s443, 12
        %s445 = scalar_lea.vmem [#allocation9], %s444
        // Predicated region
        $region69: #{tpu_custom_call.1} parent=55 // pred_check
          %p446 = pneg %p124
        $region70: #{tpu_custom_call.1} parent=55 // pred_check_branch
          %448 = sbr.rel (%p446) target = $region72
        $region71: #{tpu_custom_call.1} parent=55 // pred_region
          %449 = dma.done %s442, 192
        $region72: #{tpu_custom_call.1} parent=55 // pred_fallthru
          _
        %s450 = sand.u32 %s30, 1
        %s451 = scalar_lea.sflag [#allocation10], %s450
        %s452 = sand.u32 %s137, 1
        %s453 = smul.addr %s452, 2304
        %s454 = scalar_lea.vmem [#allocation11], %s453
        // Predicated region
        $region73: #{tpu_custom_call.1} parent=55 // pred_check
          %p455 = pneg %p150
        $region74: #{tpu_custom_call.1} parent=55 // pred_check_branch
          %457 = sbr.rel (%p455) target = $region76
        $region75: #{tpu_custom_call.1} parent=55 // pred_region
          %458 = dma.done %s451, 36864
        $region76: #{tpu_custom_call.1} parent=55 // pred_fallthru
          _
        // Predicated region
        $region77: #{tpu_custom_call.1} parent=55 // pred_check
          %p459 = pneg %p171
        $region78: #{tpu_custom_call.1} parent=55 // pred_check_branch
          %461 = sbr.rel (%p459) target = $region80
        $region79: #{tpu_custom_call.1} parent=55 // pred_region
          %462 = dma.done [#allocation13], 96
        $region80: #{tpu_custom_call.1} parent=55 // pred_fallthru
          _
        // Predicated region
        $region81: #{tpu_custom_call.1} parent=55 // pred_check
          %p463 = pneg %p192
        $region82: #{tpu_custom_call.1} parent=55 // pred_check_branch
          %465 = sbr.rel (%p463) target = $region84
        $region83: #{tpu_custom_call.1} parent=55 // pred_region
          %466 = dma.done [#allocation13], 96
        $region84: #{tpu_custom_call.1} parent=55 // pred_fallthru
          _
        // Predicated region
        $region85: #{tpu_custom_call.1} parent=55 // pred_check
          %p467 = pneg %p213
        $region86: #{tpu_custom_call.1} parent=55 // pred_check_branch
          %469 = sbr.rel (%p467) target = $region88
        $region87: #{tpu_custom_call.1} parent=55 // pred_region
          %470 = dma.done [#allocation16], 96
        $region88: #{tpu_custom_call.1} parent=55 // pred_fallthru
          _
        // Predicated region
        $region89: #{tpu_custom_call.1} parent=55 // pred_check
          %p471 = pneg %p234
        $region90: #{tpu_custom_call.1} parent=55 // pred_check_branch
          %473 = sbr.rel (%p471) target = $region92
        $region91: #{tpu_custom_call.1} parent=55 // pred_region
          %474 = dma.done [#allocation16], 96
        $region92: #{tpu_custom_call.1} parent=55 // pred_fallthru
          _
        %p475 = pneg %p46
        %p476 = pneg %p43
        %s477 = sand.u32 %s30, 1
        %s478 = scalar_lea.sflag [#allocation7], %s477
        %s479 = sand.u32 %s59, 1
        %s480 = smul.addr %s479, 2304
        %s481 = scalar_lea.vmem [#allocation6], %s480
        %p482 = pneg %p72
        %p483 = pneg %p69
        %s484 = sand.u32 %s30, 1
        %s485 = scalar_lea.sflag [#allocation7], %s484
        %s486 = sand.u32 %s85, 1
        %s487 = smul.addr %s486, 12
        %s488 = scalar_lea.vmem [#allocation8], %s487
        %p489 = pneg %p98
        %p490 = pneg %p95
        %s491 = sand.u32 %s30, 1
        %s492 = scalar_lea.sflag [#allocation10], %s491
        %s493 = sand.u32 %s111, 1
        %s494 = smul.addr %s493, 12
        %s495 = scalar_lea.vmem [#allocation9], %s494
        %p496 = pneg %p124
        %p497 = pneg %p121
        %s498 = sand.u32 %s30, 1
        %s499 = scalar_lea.sflag [#allocation10], %s498
        %s500 = sand.u32 %s137, 1
        %s501 = smul.addr %s500, 2304
        %s502 = scalar_lea.vmem [#allocation11], %s501
        %p503 = pneg %p150
        %p504 = pneg %p147
        %p505 = pneg %p171
        %p506 = pneg %p168
        %p507 = pneg %p192
        %p508 = pneg %p189
        %p509 = pneg %p213
        %p510 = pneg %p210
        %p511 = pneg %p234
        %p512 = pneg %p231
        %p513 = pneg %p255
        %p514 = pneg %p252
        %s515 = smul.u32 12, %s30
        %s516 = smul.u32 12, %s30
        %s517 = smul.u32 48, %s30
        %p518 = scmp.eq.s32.totalorder %s30, 0
        // Predicated region
        $region93: #{tpu_custom_call.1} parent=55 // pred_check
          %p519 = pneg %p518
        $region94: #{tpu_custom_call.1} parent=55 // pred_check_branch
          %521 = sbr.rel (%p519) target = $region96
        $region95: #{tpu_custom_call.1} parent=55 // pred_region
          %v522 = vld [vmem:[#allocation3] sm:$0xff]
          %v523 = vld [vmem:[#allocation3 + $0x8] sm:$0xff]
          %v524 = vld [vmem:[#allocation3 + $0x10] sm:$0xff]
          %v525 = vld [vmem:[#allocation3 + $0x18] sm:$0xff]
          %v526 = vld [vmem:[#allocation3 + $0x20] sm:$0xff]
          %v527 = vld [vmem:[#allocation3 + $0x28] sm:$0xff]
          %v528 = vld [vmem:[#allocation3 + $0x30] sm:$0xff]
          %v529 = vld [vmem:[#allocation3 + $0x38] sm:$0xff]
          %v530 = vld [vmem:[#allocation3 + $0x40] sm:$0xff]
          %v531 = vld [vmem:[#allocation3 + $0x48] sm:$0xff]
          %v532 = vld [vmem:[#allocation3 + $0x50] sm:$0xff]
          %v533 = vld [vmem:[#allocation3 + $0x58] sm:$0xff]
          %v534 = vld [vmem:[#allocation3 + $0x60] sm:$0xff]
          %v535 = vld [vmem:[#allocation3 + $0x68] sm:$0xff]
          %v536 = vld [vmem:[#allocation3 + $0x70] sm:$0xff]
          %v537 = vld [vmem:[#allocation3 + $0x78] sm:$0xff]
          %v538 = vld [vmem:[#allocation3 + $0x80] sm:$0xff]
          %v539 = vld [vmem:[#allocation3 + $0x88] sm:$0xff]
          %v540 = vld [vmem:[#allocation3 + $0x90] sm:$0xff]
          %v541 = vld [vmem:[#allocation3 + $0x98] sm:$0xff]
          %v542 = vld [vmem:[#allocation3 + $0xa0] sm:$0xff]
          %v543 = vld [vmem:[#allocation3 + $0xa8] sm:$0xff]
          %v544 = vld [vmem:[#allocation3 + $0xb0] sm:$0xff]
          %v545 = vld [vmem:[#allocation3 + $0xb8] sm:$0xff]
          %v546 = vadd.f32 %v522, %v523
          %v547 = vadd.f32 %v546, %v524
          %v548 = vadd.f32 %v547, %v525
          %v549 = vadd.f32 %v548, %v526
          %v550 = vadd.f32 %v549, %v527
          %551 = vadd.xlane.f32.xlu0 %v550
          %v552 = vpop.xlane.xlu0 %551
          %v553 = vadd.f32 %v528, %v529
          %v554 = vadd.f32 %v553, %v530
          %v555 = vadd.f32 %v554, %v531
          %v556 = vadd.f32 %v555, %v532
          %v557 = vadd.f32 %v556, %v533
          %558 = vadd.xlane.f32.xlu0 %v557
          %v559 = vpop.xlane.xlu0 %558
          %v560 = vadd.f32 %v534, %v535
          %v561 = vadd.f32 %v560, %v536
          %v562 = vadd.f32 %v561, %v537
          %v563 = vadd.f32 %v562, %v538
          %v564 = vadd.f32 %v563, %v539
          %565 = vadd.xlane.f32.xlu0 %v564
          %v566 = vpop.xlane.xlu0 %565
          %v567 = vadd.f32 %v540, %v541
          %v568 = vadd.f32 %v567, %v542
          %v569 = vadd.f32 %v568, %v543
          %v570 = vadd.f32 %v569, %v544
          %v571 = vadd.f32 %v570, %v545
          %572 = vadd.xlane.f32.xlu0 %v571
          %v573 = vpop.xlane.xlu0 %572
          %v574 = vrcp.pop 768.0
          %v575 = vmul.f32 %v552, %v574
          %v576 = vmul.f32 %v559, %v574
          %v577 = vmul.f32 %v566, %v574
          %v578 = vmul.f32 %v573, %v574
          %v579 = vsub.f32 %v522, %v575
          %v580 = vsub.f32 %v523, %v575
          %v581 = vsub.f32 %v524, %v575
          %v582 = vsub.f32 %v525, %v575
          %v583 = vsub.f32 %v526, %v575
          %v584 = vsub.f32 %v527, %v575
          %v585 = vsub.f32 %v528, %v576
          %v586 = vsub.f32 %v529, %v576
          %v587 = vsub.f32 %v530, %v576
          %v588 = vsub.f32 %v531, %v576
          %v589 = vsub.f32 %v532, %v576
          %v590 = vsub.f32 %v533, %v576
          %v591 = vsub.f32 %v534, %v577
          %v592 = vsub.f32 %v535, %v577
          %v593 = vsub.f32 %v536, %v577
          %v594 = vsub.f32 %v537, %v577
          %v595 = vsub.f32 %v538, %v577
          %v596 = vsub.f32 %v539, %v577
          %v597 = vsub.f32 %v540, %v578
          %v598 = vsub.f32 %v541, %v578
          %v599 = vsub.f32 %v542, %v578
          %v600 = vsub.f32 %v543, %v578
          %v601 = vsub.f32 %v544, %v578
          %v602 = vsub.f32 %v545, %v578
          %v603 = vmul.f32 %v579, %v579
          %v604 = vmul.f32 %v580, %v580
          %v605 = vmul.f32 %v581, %v581
          %v606 = vmul.f32 %v582, %v582
          %v607 = vmul.f32 %v583, %v583
          %v608 = vmul.f32 %v584, %v584
          %v609 = vmul.f32 %v585, %v585
          %v610 = vmul.f32 %v586, %v586
          %v611 = vmul.f32 %v587, %v587
          %v612 = vmul.f32 %v588, %v588
          %v613 = vmul.f32 %v589, %v589
          %v614 = vmul.f32 %v590, %v590
          %v615 = vmul.f32 %v591, %v591
          %v616 = vmul.f32 %v592, %v592
          %v617 = vmul.f32 %v593, %v593
          %v618 = vmul.f32 %v594, %v594
          %v619 = vmul.f32 %v595, %v595
          %v620 = vmul.f32 %v596, %v596
          %v621 = vmul.f32 %v597, %v597
          %v622 = vmul.f32 %v598, %v598
          %v623 = vmul.f32 %v599, %v599
          %v624 = vmul.f32 %v600, %v600
          %v625 = vmul.f32 %v601, %v601
          %v626 = vmul.f32 %v602, %v602
          %v627 = vadd.f32 %v603, %v604
          %v628 = vadd.f32 %v627, %v605
          %v629 = vadd.f32 %v628, %v606
          %v630 = vadd.f32 %v629, %v607
          %v631 = vadd.f32 %v630, %v608
          %632 = vadd.xlane.f32.xlu0 %v631
          %v633 = vpop.xlane.xlu0 %632
          %v634 = vadd.f32 %v609, %v610
          %v635 = vadd.f32 %v634, %v611
          %v636 = vadd.f32 %v635, %v612
          %v637 = vadd.f32 %v636, %v613
          %v638 = vadd.f32 %v637, %v614
          %639 = vadd.xlane.f32.xlu0 %v638
          %v640 = vpop.xlane.xlu0 %639
          %v641 = vadd.f32 %v615, %v616
          %v642 = vadd.f32 %v641, %v617
          %v643 = vadd.f32 %v642, %v618
          %v644 = vadd.f32 %v643, %v619
          %v645 = vadd.f32 %v644, %v620
          %646 = vadd.xlane.f32.xlu0 %v645
          %v647 = vpop.xlane.xlu0 %646
          %v648 = vadd.f32 %v621, %v622
          %v649 = vadd.f32 %v648, %v623
          %v650 = vadd.f32 %v649, %v624
          %v651 = vadd.f32 %v650, %v625
          %v652 = vadd.f32 %v651, %v626
          %653 = vadd.xlane.f32.xlu0 %v652
          %v654 = vpop.xlane.xlu0 %653
          %v655 = vmul.f32 %v633, %v574
          %v656 = vmul.f32 %v640, %v574
          %v657 = vmul.f32 %v647, %v574
          %v658 = vmul.f32 %v654, %v574
          %v659 = vadd.f32 %v655, 1e-12
          %v660 = vadd.f32 %v656, 1e-12
          %v661 = vadd.f32 %v657, 1e-12
          %v662 = vadd.f32 %v658, 1e-12
          %v663 = vrsqrt.pop %v659
          %v664 = vrsqrt.pop %v660
          %v665 = vrsqrt.pop %v661
          %v666 = vrsqrt.pop %v662
          %v667 = vmul.f32 %v579, %v663
          %v668 = vmul.f32 %v580, %v663
          %v669 = vmul.f32 %v581, %v663
          %v670 = vmul.f32 %v582, %v663
          %v671 = vmul.f32 %v583, %v663
          %v672 = vmul.f32 %v584, %v663
          %v673 = vmul.f32 %v585, %v664
          %v674 = vmul.f32 %v586, %v664
          %v675 = vmul.f32 %v587, %v664
          %v676 = vmul.f32 %v588, %v664
          %v677 = vmul.f32 %v589, %v664
          %v678 = vmul.f32 %v590, %v664
          %v679 = vmul.f32 %v591, %v665
          %v680 = vmul.f32 %v592, %v665
          %v681 = vmul.f32 %v593, %v665
          %v682 = vmul.f32 %v594, %v665
          %v683 = vmul.f32 %v595, %v665
          %v684 = vmul.f32 %v596, %v665
          %v685 = vmul.f32 %v597, %v666
          %v686 = vmul.f32 %v598, %v666
          %v687 = vmul.f32 %v599, %v666
          %v688 = vmul.f32 %v600, %v666
          %v689 = vmul.f32 %v601, %v666
          %v690 = vmul.f32 %v602, %v666
          %v691 = vld [vmem:[#allocation15] sm:$0x3f]
          %v693 = vlaneseq
          %v694 = vshrl.u32 %v693, 7
          %v695 = vsub.s32 0, %v694
          %v696 = vrot.slane %v691, %v695
          %v697 = vlaneseq
          %v698 = vshrl.u32 %v697, 7
          %v699 = vsub.s32 1, %v698
          %v700 = vrot.slane %v691, %v699
          %v701 = vlaneseq
          %v702 = vshrl.u32 %v701, 7
          %v703 = vsub.s32 2, %v702
          %v704 = vrot.slane %v691, %v703
          %v705 = vlaneseq
          %v706 = vshrl.u32 %v705, 7
          %v707 = vsub.s32 3, %v706
          %v708 = vrot.slane %v691, %v707
          %v709 = vlaneseq
          %v710 = vshrl.u32 %v709, 7
          %v711 = vsub.s32 4, %v710
          %v712 = vrot.slane %v691, %v711
          %v713 = vlaneseq
          %v714 = vshrl.u32 %v713, 7
          %v715 = vsub.s32 5, %v714
          %v716 = vrot.slane %v691, %v715
          %v723 = vmul.f32 %v667, %v696
          %v724 = vmul.f32 %v668, %v700
          %v725 = vmul.f32 %v669, %v704
          %v726 = vmul.f32 %v670, %v708
          %v727 = vmul.f32 %v671, %v712
          %v728 = vmul.f32 %v672, %v716
          %v729 = vmul.f32 %v673, %v696
          %v730 = vmul.f32 %v674, %v700
          %v731 = vmul.f32 %v675, %v704
          %v732 = vmul.f32 %v676, %v708
          %v733 = vmul.f32 %v677, %v712
          %v734 = vmul.f32 %v678, %v716
          %v735 = vmul.f32 %v679, %v696
          %v736 = vmul.f32 %v680, %v700
          %v737 = vmul.f32 %v681, %v704
          %v738 = vmul.f32 %v682, %v708
          %v739 = vmul.f32 %v683, %v712
          %v740 = vmul.f32 %v684, %v716
          %v741 = vmul.f32 %v685, %v696
          %v742 = vmul.f32 %v686, %v700
          %v743 = vmul.f32 %v687, %v704
          %v744 = vmul.f32 %v688, %v708
          %v745 = vmul.f32 %v689, %v712
          %v746 = vmul.f32 %v690, %v716
          %v747 = vld [vmem:[#allocation17] sm:$0x3f]
          %v749 = vlaneseq
          %v750 = vshrl.u32 %v749, 7
          %v751 = vsub.s32 0, %v750
          %v752 = vrot.slane %v747, %v751
          %v753 = vlaneseq
          %v754 = vshrl.u32 %v753, 7
          %v755 = vsub.s32 1, %v754
          %v756 = vrot.slane %v747, %v755
          %v757 = vlaneseq
          %v758 = vshrl.u32 %v757, 7
          %v759 = vsub.s32 2, %v758
          %v760 = vrot.slane %v747, %v759
          %v761 = vlaneseq
          %v762 = vshrl.u32 %v761, 7
          %v763 = vsub.s32 3, %v762
          %v764 = vrot.slane %v747, %v763
          %v765 = vlaneseq
          %v766 = vshrl.u32 %v765, 7
          %v767 = vsub.s32 4, %v766
          %v768 = vrot.slane %v747, %v767
          %v769 = vlaneseq
          %v770 = vshrl.u32 %v769, 7
          %v771 = vsub.s32 5, %v770
          %v772 = vrot.slane %v747, %v771
          %v779 = vadd.f32 %v723, %v752
          %v780 = vadd.f32 %v724, %v756
          %v781 = vadd.f32 %v725, %v760
          %v782 = vadd.f32 %v726, %v764
          %v783 = vadd.f32 %v727, %v768
          %v784 = vadd.f32 %v728, %v772
          %v785 = vadd.f32 %v729, %v752
          %v786 = vadd.f32 %v730, %v756
          %v787 = vadd.f32 %v731, %v760
          %v788 = vadd.f32 %v732, %v764
          %v789 = vadd.f32 %v733, %v768
          %v790 = vadd.f32 %v734, %v772
          %v791 = vadd.f32 %v735, %v752
          %v792 = vadd.f32 %v736, %v756
          %v793 = vadd.f32 %v737, %v760
          %v794 = vadd.f32 %v738, %v764
          %v795 = vadd.f32 %v739, %v768
          %v796 = vadd.f32 %v740, %v772
          %v797 = vadd.f32 %v741, %v752
          %v798 = vadd.f32 %v742, %v756
          %v799 = vadd.f32 %v743, %v760
          %v800 = vadd.f32 %v744, %v764
          %v801 = vadd.f32 %v745, %v768
          %v802 = vadd.f32 %v746, %v772
          %v803 = vpack.c.bf16 %v785, %v779
          %v804 = vpack.c.bf16 %v786, %v780
          %v805 = vpack.c.bf16 %v787, %v781
          %v806 = vpack.c.bf16 %v788, %v782
          %v807 = vpack.c.bf16 %v789, %v783
          %v808 = vpack.c.bf16 %v790, %v784
          %v809 = vpack.c.bf16 %v797, %v791
          %v810 = vpack.c.bf16 %v798, %v792
          %v811 = vpack.c.bf16 %v799, %v793
          %v812 = vpack.c.bf16 %v800, %v794
          %v813 = vpack.c.bf16 %v801, %v795
          %v814 = vpack.c.bf16 %v802, %v796
          %815 = vst [vmem:[#allocation2] sm:$0xff] %v803
          %816 = vst [vmem:[#allocation2 + $0x8] sm:$0xff] %v804
          %817 = vst [vmem:[#allocation2 + $0x10] sm:$0xff] %v805
          %818 = vst [vmem:[#allocation2 + $0x18] sm:$0xff] %v806
          %819 = vst [vmem:[#allocation2 + $0x20] sm:$0xff] %v807
          %820 = vst [vmem:[#allocation2 + $0x28] sm:$0xff] %v808
          %821 = vst [vmem:[#allocation2 + $0x30] sm:$0xff] %v809
          %822 = vst [vmem:[#allocation2 + $0x38] sm:$0xff] %v810
          %823 = vst [vmem:[#allocation2 + $0x40] sm:$0xff] %v811
          %824 = vst [vmem:[#allocation2 + $0x48] sm:$0xff] %v812
          %825 = vst [vmem:[#allocation2 + $0x50] sm:$0xff] %v813
          %826 = vst [vmem:[#allocation2 + $0x58] sm:$0xff] %v814
          %827 = vst [vmem:[#allocation18] sm:$0xff] 0.0
          %828 = vst [vmem:[#allocation18 + $0x8] sm:$0xff] 0.0
          %829 = vst [vmem:[#allocation18 + $0x10] sm:$0xff] 0.0
          %830 = vst [vmem:[#allocation18 + $0x18] sm:$0xff] 0.0
          %831 = vst [vmem:[#allocation18 + $0x20] sm:$0xff] 0.0
          %832 = vst [vmem:[#allocation18 + $0x28] sm:$0xff] 0.0
          %833 = vst [vmem:[#allocation18 + $0x30] sm:$0xff] 0.0
          %834 = vst [vmem:[#allocation18 + $0x38] sm:$0xff] 0.0
          %835 = vst [vmem:[#allocation18 + $0x40] sm:$0xff] 0.0
          %836 = vst [vmem:[#allocation18 + $0x48] sm:$0xff] 0.0
          %837 = vst [vmem:[#allocation18 + $0x50] sm:$0xff] 0.0
          %838 = vst [vmem:[#allocation18 + $0x58] sm:$0xff] 0.0
          %839 = vst [vmem:[#allocation18 + $0x60] sm:$0xff] 0.0
          %840 = vst [vmem:[#allocation18 + $0x68] sm:$0xff] 0.0
          %841 = vst [vmem:[#allocation18 + $0x70] sm:$0xff] 0.0
          %842 = vst [vmem:[#allocation18 + $0x78] sm:$0xff] 0.0
          %843 = vst [vmem:[#allocation18 + $0x80] sm:$0xff] 0.0
          %844 = vst [vmem:[#allocation18 + $0x88] sm:$0xff] 0.0
          %845 = vst [vmem:[#allocation18 + $0x90] sm:$0xff] 0.0
          %846 = vst [vmem:[#allocation18 + $0x98] sm:$0xff] 0.0
          %847 = vst [vmem:[#allocation18 + $0xa0] sm:$0xff] 0.0
          %848 = vst [vmem:[#allocation18 + $0xa8] sm:$0xff] 0.0
          %849 = vst [vmem:[#allocation18 + $0xb0] sm:$0xff] 0.0
          %850 = vst [vmem:[#allocation18 + $0xb8] sm:$0xff] 0.0
        $region96: #{tpu_custom_call.1} parent=55 // pred_fallthru
          _
        %v851 = vld [vmem:[%s427] sm:$0xff]
        %v852 = vld [vmem:[%s427 + $0x8] sm:$0xff]
        %v853 = vld [vmem:[%s427 + $0x10] sm:$0xff]
        %v854 = vld [vmem:[%s427 + $0x18] sm:$0xff]
        %v855 = vld [vmem:[%s427 + $0x20] sm:$0xff]
        %v856 = vld [vmem:[%s427 + $0x28] sm:$0xff]
        %v857 = vld [vmem:[%s427 + $0x30] sm:$0xff]
        %v858 = vld [vmem:[%s427 + $0x38] sm:$0xff]
        %v859 = vld [vmem:[%s427 + $0x40] sm:$0xff]
        %v860 = vld [vmem:[%s427 + $0x48] sm:$0xff]
        %v861 = vld [vmem:[%s427 + $0x50] sm:$0xff]
        %v862 = vld [vmem:[%s427 + $0x58] sm:$0xff]
        %v863 = vld [vmem:[%s427 + $0x60] sm:$0xff]
        %v864 = vld [vmem:[%s427 + $0x68] sm:$0xff]
        %v865 = vld [vmem:[%s427 + $0x70] sm:$0xff]
        %v866 = vld [vmem:[%s427 + $0x78] sm:$0xff]
        %v867 = vld [vmem:[%s427 + $0x80] sm:$0xff]
        %v868 = vld [vmem:[%s427 + $0x88] sm:$0xff]
        %v869 = vld [vmem:[%s427 + $0x90] sm:$0xff]
        %v870 = vld [vmem:[%s427 + $0x98] sm:$0xff]
        %v871 = vld [vmem:[%s427 + $0xa0] sm:$0xff]
        %v872 = vld [vmem:[%s427 + $0xa8] sm:$0xff]
        %v873 = vld [vmem:[%s427 + $0xb0] sm:$0xff]
        %v874 = vld [vmem:[%s427 + $0xb8] sm:$0xff]
        %v875 = vld [vmem:[%s427 + $0xc0] sm:$0xff]
        %v876 = vld [vmem:[%s427 + $0xc8] sm:$0xff]
        %v877 = vld [vmem:[%s427 + $0xd0] sm:$0xff]
        %v878 = vld [vmem:[%s427 + $0xd8] sm:$0xff]
        %v879 = vld [vmem:[%s427 + $0xe0] sm:$0xff]
        %v880 = vld [vmem:[%s427 + $0xe8] sm:$0xff]
        %v881 = vld [vmem:[%s427 + $0xf0] sm:$0xff]
        %v882 = vld [vmem:[%s427 + $0xf8] sm:$0xff]
        %v883 = vld [vmem:[%s427 + $0x100] sm:$0xff]
        %v884 = vld [vmem:[%s427 + $0x108] sm:$0xff]
        %v885 = vld [vmem:[%s427 + $0x110] sm:$0xff]
        %v886 = vld [vmem:[%s427 + $0x118] sm:$0xff]
        %v887 = vld [vmem:[%s427 + $0x120] sm:$0xff]
        %v888 = vld [vmem:[%s427 + $0x128] sm:$0xff]
        %v889 = vld [vmem:[%s427 + $0x130] sm:$0xff]
        %v890 = vld [vmem:[%s427 + $0x138] sm:$0xff]
        %v891 = vld [vmem:[%s427 + $0x140] sm:$0xff]
        %v892 = vld [vmem:[%s427 + $0x148] sm:$0xff]
        %v893 = vld [vmem:[%s427 + $0x150] sm:$0xff]
        %v894 = vld [vmem:[%s427 + $0x158] sm:$0xff]
        %v895 = vld [vmem:[%s427 + $0x160] sm:$0xff]
        %v896 = vld [vmem:[%s427 + $0x168] sm:$0xff]
        %v897 = vld [vmem:[%s427 + $0x170] sm:$0xff]
        %v898 = vld [vmem:[%s427 + $0x178] sm:$0xff]
        %v899 = vld [vmem:[%s427 + $0x180] sm:$0xff]
        %v900 = vld [vmem:[%s427 + $0x188] sm:$0xff]
        %v901 = vld [vmem:[%s427 + $0x190] sm:$0xff]
        %v902 = vld [vmem:[%s427 + $0x198] sm:$0xff]
        %v903 = vld [vmem:[%s427 + $0x1a0] sm:$0xff]
        %v904 = vld [vmem:[%s427 + $0x1a8] sm:$0xff]
        %v905 = vld [vmem:[%s427 + $0x1b0] sm:$0xff]
        %v906 = vld [vmem:[%s427 + $0x1b8] sm:$0xff]
        %v907 = vld [vmem:[%s427 + $0x1c0] sm:$0xff]
        %v908 = vld [vmem:[%s427 + $0x1c8] sm:$0xff]
        %v909 = vld [vmem:[%s427 + $0x1d0] sm:$0xff]
        %v910 = vld [vmem:[%s427 + $0x1d8] sm:$0xff]
        %v911 = vld [vmem:[%s427 + $0x1e0] sm:$0xff]
        %v912 = vld [vmem:[%s427 + $0x1e8] sm:$0xff]
        %v913 = vld [vmem:[%s427 + $0x1f0] sm:$0xff]
        %v914 = vld [vmem:[%s427 + $0x1f8] sm:$0xff]
        %v915 = vld [vmem:[%s427 + $0x200] sm:$0xff]
        %v916 = vld [vmem:[%s427 + $0x208] sm:$0xff]
        %v917 = vld [vmem:[%s427 + $0x210] sm:$0xff]
        %v918 = vld [vmem:[%s427 + $0x218] sm:$0xff]
        %v919 = vld [vmem:[%s427 + $0x220] sm:$0xff]
        %v920 = vld [vmem:[%s427 + $0x228] sm:$0xff]
        %v921 = vld [vmem:[%s427 + $0x230] sm:$0xff]
        %v922 = vld [vmem:[%s427 + $0x238] sm:$0xff]
        %v923 = vld [vmem:[%s427 + $0x240] sm:$0xff]
        %v924 = vld [vmem:[%s427 + $0x248] sm:$0xff]
        %v925 = vld [vmem:[%s427 + $0x250] sm:$0xff]
        %v926 = vld [vmem:[%s427 + $0x258] sm:$0xff]
        %v927 = vld [vmem:[%s427 + $0x260] sm:$0xff]
        %v928 = vld [vmem:[%s427 + $0x268] sm:$0xff]
        %v929 = vld [vmem:[%s427 + $0x270] sm:$0xff]
        %v930 = vld [vmem:[%s427 + $0x278] sm:$0xff]
        %v931 = vld [vmem:[%s427 + $0x280] sm:$0xff]
        %v932 = vld [vmem:[%s427 + $0x288] sm:$0xff]
        %v933 = vld [vmem:[%s427 + $0x290] sm:$0xff]
        %v934 = vld [vmem:[%s427 + $0x298] sm:$0xff]
        %v935 = vld [vmem:[%s427 + $0x2a0] sm:$0xff]
        %v936 = vld [vmem:[%s427 + $0x2a8] sm:$0xff]
        %v937 = vld [vmem:[%s427 + $0x2b0] sm:$0xff]
        %v938 = vld [vmem:[%s427 + $0x2b8] sm:$0xff]
        %v939 = vld [vmem:[%s427 + $0x2c0] sm:$0xff]
        %v940 = vld [vmem:[%s427 + $0x2c8] sm:$0xff]
        %v941 = vld [vmem:[%s427 + $0x2d0] sm:$0xff]
        %v942 = vld [vmem:[%s427 + $0x2d8] sm:$0xff]
        %v943 = vld [vmem:[%s427 + $0x2e0] sm:$0xff]
        %v944 = vld [vmem:[%s427 + $0x2e8] sm:$0xff]
        %v945 = vld [vmem:[%s427 + $0x2f0] sm:$0xff]
        %v946 = vld [vmem:[%s427 + $0x2f8] sm:$0xff]
        %v947 = vld [vmem:[%s427 + $0x300] sm:$0xff]
        %v948 = vld [vmem:[%s427 + $0x308] sm:$0xff]
        %v949 = vld [vmem:[%s427 + $0x310] sm:$0xff]
        %v950 = vld [vmem:[%s427 + $0x318] sm:$0xff]
        %v951 = vld [vmem:[%s427 + $0x320] sm:$0xff]
        %v952 = vld [vmem:[%s427 + $0x328] sm:$0xff]
        %v953 = vld [vmem:[%s427 + $0x330] sm:$0xff]
        %v954 = vld [vmem:[%s427 + $0x338] sm:$0xff]
        %v955 = vld [vmem:[%s427 + $0x340] sm:$0xff]
        %v956 = vld [vmem:[%s427 + $0x348] sm:$0xff]
        %v957 = vld [vmem:[%s427 + $0x350] sm:$0xff]
        %v958 = vld [vmem:[%s427 + $0x358] sm:$0xff]
        %v959 = vld [vmem:[%s427 + $0x360] sm:$0xff]
        %v960 = vld [vmem:[%s427 + $0x368] sm:$0xff]
        %v961 = vld [vmem:[%s427 + $0x370] sm:$0xff]
        %v962 = vld [vmem:[%s427 + $0x378] sm:$0xff]
        %v963 = vld [vmem:[%s427 + $0x380] sm:$0xff]
        %v964 = vld [vmem:[%s427 + $0x388] sm:$0xff]
        %v965 = vld [vmem:[%s427 + $0x390] sm:$0xff]
        %v966 = vld [vmem:[%s427 + $0x398] sm:$0xff]
        %v967 = vld [vmem:[%s427 + $0x3a0] sm:$0xff]
        %v968 = vld [vmem:[%s427 + $0x3a8] sm:$0xff]
        %v969 = vld [vmem:[%s427 + $0x3b0] sm:$0xff]
        %v970 = vld [vmem:[%s427 + $0x3b8] sm:$0xff]
        %v971 = vld [vmem:[%s427 + $0x3c0] sm:$0xff]
        %v972 = vld [vmem:[%s427 + $0x3c8] sm:$0xff]
        %v973 = vld [vmem:[%s427 + $0x3d0] sm:$0xff]
        %v974 = vld [vmem:[%s427 + $0x3d8] sm:$0xff]
        %v975 = vld [vmem:[%s427 + $0x3e0] sm:$0xff]
        %v976 = vld [vmem:[%s427 + $0x3e8] sm:$0xff]
        %v977 = vld [vmem:[%s427 + $0x3f0] sm:$0xff]
        %v978 = vld [vmem:[%s427 + $0x3f8] sm:$0xff]
        %v979 = vld [vmem:[%s427 + $0x400] sm:$0xff]
        %v980 = vld [vmem:[%s427 + $0x408] sm:$0xff]
        %v981 = vld [vmem:[%s427 + $0x410] sm:$0xff]
        %v982 = vld [vmem:[%s427 + $0x418] sm:$0xff]
        %v983 = vld [vmem:[%s427 + $0x420] sm:$0xff]
        %v984 = vld [vmem:[%s427 + $0x428] sm:$0xff]
        %v985 = vld [vmem:[%s427 + $0x430] sm:$0xff]
        %v986 = vld [vmem:[%s427 + $0x438] sm:$0xff]
        %v987 = vld [vmem:[%s427 + $0x440] sm:$0xff]
        %v988 = vld [vmem:[%s427 + $0x448] sm:$0xff]
        %v989 = vld [vmem:[%s427 + $0x450] sm:$0xff]
        %v990 = vld [vmem:[%s427 + $0x458] sm:$0xff]
        %v991 = vld [vmem:[%s427 + $0x460] sm:$0xff]
        %v992 = vld [vmem:[%s427 + $0x468] sm:$0xff]
        %v993 = vld [vmem:[%s427 + $0x470] sm:$0xff]
        %v994 = vld [vmem:[%s427 + $0x478] sm:$0xff]
        %v995 = vld [vmem:[%s427 + $0x480] sm:$0xff]
        %v996 = vld [vmem:[%s427 + $0x488] sm:$0xff]
        %v997 = vld [vmem:[%s427 + $0x490] sm:$0xff]
        %v998 = vld [vmem:[%s427 + $0x498] sm:$0xff]
        %v999 = vld [vmem:[%s427 + $0x4a0] sm:$0xff]
        %v1000 = vld [vmem:[%s427 + $0x4a8] sm:$0xff]
        %v1001 = vld [vmem:[%s427 + $0x4b0] sm:$0xff]
        %v1002 = vld [vmem:[%s427 + $0x4b8] sm:$0xff]
        %v1003 = vld [vmem:[%s427 + $0x4c0] sm:$0xff]
        %v1004 = vld [vmem:[%s427 + $0x4c8] sm:$0xff]
        %v1005 = vld [vmem:[%s427 + $0x4d0] sm:$0xff]
        %v1006 = vld [vmem:[%s427 + $0x4d8] sm:$0xff]
        %v1007 = vld [vmem:[%s427 + $0x4e0] sm:$0xff]
        %v1008 = vld [vmem:[%s427 + $0x4e8] sm:$0xff]
        %v1009 = vld [vmem:[%s427 + $0x4f0] sm:$0xff]
        %v1010 = vld [vmem:[%s427 + $0x4f8] sm:$0xff]
        %v1011 = vld [vmem:[%s427 + $0x500] sm:$0xff]
        %v1012 = vld [vmem:[%s427 + $0x508] sm:$0xff]
        %v1013 = vld [vmem:[%s427 + $0x510] sm:$0xff]
        %v1014 = vld [vmem:[%s427 + $0x518] sm:$0xff]
        %v1015 = vld [vmem:[%s427 + $0x520] sm:$0xff]
        %v1016 = vld [vmem:[%s427 + $0x528] sm:$0xff]
        %v1017 = vld [vmem:[%s427 + $0x530] sm:$0xff]
        %v1018 = vld [vmem:[%s427 + $0x538] sm:$0xff]
        %v1019 = vld [vmem:[%s427 + $0x540] sm:$0xff]
        %v1020 = vld [vmem:[%s427 + $0x548] sm:$0xff]
        %v1021 = vld [vmem:[%s427 + $0x550] sm:$0xff]
        %v1022 = vld [vmem:[%s427 + $0x558] sm:$0xff]
        %v1023 = vld [vmem:[%s427 + $0x560] sm:$0xff]
        %v1024 = vld [vmem:[%s427 + $0x568] sm:$0xff]
        %v1025 = vld [vmem:[%s427 + $0x570] sm:$0xff]
        %v1026 = vld [vmem:[%s427 + $0x578] sm:$0xff]
        %v1027 = vld [vmem:[%s427 + $0x580] sm:$0xff]
        %v1028 = vld [vmem:[%s427 + $0x588] sm:$0xff]
        %v1029 = vld [vmem:[%s427 + $0x590] sm:$0xff]
        %v1030 = vld [vmem:[%s427 + $0x598] sm:$0xff]
        %v1031 = vld [vmem:[%s427 + $0x5a0] sm:$0xff]
        %v1032 = vld [vmem:[%s427 + $0x5a8] sm:$0xff]
        %v1033 = vld [vmem:[%s427 + $0x5b0] sm:$0xff]
        %v1034 = vld [vmem:[%s427 + $0x5b8] sm:$0xff]
        %v1035 = vld [vmem:[%s427 + $0x5c0] sm:$0xff]
        %v1036 = vld [vmem:[%s427 + $0x5c8] sm:$0xff]
        %v1037 = vld [vmem:[%s427 + $0x5d0] sm:$0xff]
        %v1038 = vld [vmem:[%s427 + $0x5d8] sm:$0xff]
        %v1039 = vld [vmem:[%s427 + $0x5e0] sm:$0xff]
        %v1040 = vld [vmem:[%s427 + $0x5e8] sm:$0xff]
        %v1041 = vld [vmem:[%s427 + $0x5f0] sm:$0xff]
        %v1042 = vld [vmem:[%s427 + $0x5f8] sm:$0xff]
        %v1043 = vld [vmem:[%s427 + $0x600] sm:$0xff]
        %v1044 = vld [vmem:[%s427 + $0x608] sm:$0xff]
        %v1045 = vld [vmem:[%s427 + $0x610] sm:$0xff]
        %v1046 = vld [vmem:[%s427 + $0x618] sm:$0xff]
        %v1047 = vld [vmem:[%s427 + $0x620] sm:$0xff]
        %v1048 = vld [vmem:[%s427 + $0x628] sm:$0xff]
        %v1049 = vld [vmem:[%s427 + $0x630] sm:$0xff]
        %v1050 = vld [vmem:[%s427 + $0x638] sm:$0xff]
        %v1051 = vld [vmem:[%s427 + $0x640] sm:$0xff]
        %v1052 = vld [vmem:[%s427 + $0x648] sm:$0xff]
        %v1053 = vld [vmem:[%s427 + $0x650] sm:$0xff]
        %v1054 = vld [vmem:[%s427 + $0x658] sm:$0xff]
        %v1055 = vld [vmem:[%s427 + $0x660] sm:$0xff]
        %v1056 = vld [vmem:[%s427 + $0x668] sm:$0xff]
        %v1057 = vld [vmem:[%s427 + $0x670] sm:$0xff]
        %v1058 = vld [vmem:[%s427 + $0x678] sm:$0xff]
        %v1059 = vld [vmem:[%s427 + $0x680] sm:$0xff]
        %v1060 = vld [vmem:[%s427 + $0x688] sm:$0xff]
        %v1061 = vld [vmem:[%s427 + $0x690] sm:$0xff]
        %v1062 = vld [vmem:[%s427 + $0x698] sm:$0xff]
        %v1063 = vld [vmem:[%s427 + $0x6a0] sm:$0xff]
        %v1064 = vld [vmem:[%s427 + $0x6a8] sm:$0xff]
        %v1065 = vld [vmem:[%s427 + $0x6b0] sm:$0xff]
        %v1066 = vld [vmem:[%s427 + $0x6b8] sm:$0xff]
        %v1067 = vld [vmem:[%s427 + $0x6c0] sm:$0xff]
        %v1068 = vld [vmem:[%s427 + $0x6c8] sm:$0xff]
        %v1069 = vld [vmem:[%s427 + $0x6d0] sm:$0xff]
        %v1070 = vld [vmem:[%s427 + $0x6d8] sm:$0xff]
        %v1071 = vld [vmem:[%s427 + $0x6e0] sm:$0xff]
        %v1072 = vld [vmem:[%s427 + $0x6e8] sm:$0xff]
        %v1073 = vld [vmem:[%s427 + $0x6f0] sm:$0xff]
        %v1074 = vld [vmem:[%s427 + $0x6f8] sm:$0xff]
        %v1075 = vld [vmem:[%s427 + $0x700] sm:$0xff]
        %v1076 = vld [vmem:[%s427 + $0x708] sm:$0xff]
        %v1077 = vld [vmem:[%s427 + $0x710] sm:$0xff]
        %v1078 = vld [vmem:[%s427 + $0x718] sm:$0xff]
        %v1079 = vld [vmem:[%s427 + $0x720] sm:$0xff]
        %v1080 = vld [vmem:[%s427 + $0x728] sm:$0xff]
        %v1081 = vld [vmem:[%s427 + $0x730] sm:$0xff]
        %v1082 = vld [vmem:[%s427 + $0x738] sm:$0xff]
        %v1083 = vld [vmem:[%s427 + $0x740] sm:$0xff]
        %v1084 = vld [vmem:[%s427 + $0x748] sm:$0xff]
        %v1085 = vld [vmem:[%s427 + $0x750] sm:$0xff]
        %v1086 = vld [vmem:[%s427 + $0x758] sm:$0xff]
        %v1087 = vld [vmem:[%s427 + $0x760] sm:$0xff]
        %v1088 = vld [vmem:[%s427 + $0x768] sm:$0xff]
        %v1089 = vld [vmem:[%s427 + $0x770] sm:$0xff]
        %v1090 = vld [vmem:[%s427 + $0x778] sm:$0xff]
        %v1091 = vld [vmem:[%s427 + $0x780] sm:$0xff]
        %v1092 = vld [vmem:[%s427 + $0x788] sm:$0xff]
        %v1093 = vld [vmem:[%s427 + $0x790] sm:$0xff]
        %v1094 = vld [vmem:[%s427 + $0x798] sm:$0xff]
        %v1095 = vld [vmem:[%s427 + $0x7a0] sm:$0xff]
        %v1096 = vld [vmem:[%s427 + $0x7a8] sm:$0xff]
        %v1097 = vld [vmem:[%s427 + $0x7b0] sm:$0xff]
        %v1098 = vld [vmem:[%s427 + $0x7b8] sm:$0xff]
        %v1099 = vld [vmem:[%s427 + $0x7c0] sm:$0xff]
        %v1100 = vld [vmem:[%s427 + $0x7c8] sm:$0xff]
        %v1101 = vld [vmem:[%s427 + $0x7d0] sm:$0xff]
        %v1102 = vld [vmem:[%s427 + $0x7d8] sm:$0xff]
        %v1103 = vld [vmem:[%s427 + $0x7e0] sm:$0xff]
        %v1104 = vld [vmem:[%s427 + $0x7e8] sm:$0xff]
        %v1105 = vld [vmem:[%s427 + $0x7f0] sm:$0xff]
        %v1106 = vld [vmem:[%s427 + $0x7f8] sm:$0xff]
        %v1107 = vld [vmem:[%s427 + $0x800] sm:$0xff]
        %v1108 = vld [vmem:[%s427 + $0x808] sm:$0xff]
        %v1109 = vld [vmem:[%s427 + $0x810] sm:$0xff]
        %v1110 = vld [vmem:[%s427 + $0x818] sm:$0xff]
        %v1111 = vld [vmem:[%s427 + $0x820] sm:$0xff]
        %v1112 = vld [vmem:[%s427 + $0x828] sm:$0xff]
        %v1113 = vld [vmem:[%s427 + $0x830] sm:$0xff]
        %v1114 = vld [vmem:[%s427 + $0x838] sm:$0xff]
        %v1115 = vld [vmem:[%s427 + $0x840] sm:$0xff]
        %v1116 = vld [vmem:[%s427 + $0x848] sm:$0xff]
        %v1117 = vld [vmem:[%s427 + $0x850] sm:$0xff]
        %v1118 = vld [vmem:[%s427 + $0x858] sm:$0xff]
        %v1119 = vld [vmem:[%s427 + $0x860] sm:$0xff]
        %v1120 = vld [vmem:[%s427 + $0x868] sm:$0xff]
        %v1121 = vld [vmem:[%s427 + $0x870] sm:$0xff]
        %v1122 = vld [vmem:[%s427 + $0x878] sm:$0xff]
        %v1123 = vld [vmem:[%s427 + $0x880] sm:$0xff]
        %v1124 = vld [vmem:[%s427 + $0x888] sm:$0xff]
        %v1125 = vld [vmem:[%s427 + $0x890] sm:$0xff]
        %v1126 = vld [vmem:[%s427 + $0x898] sm:$0xff]
        %v1127 = vld [vmem:[%s427 + $0x8a0] sm:$0xff]
        %v1128 = vld [vmem:[%s427 + $0x8a8] sm:$0xff]
        %v1129 = vld [vmem:[%s427 + $0x8b0] sm:$0xff]
        %v1130 = vld [vmem:[%s427 + $0x8b8] sm:$0xff]
        %v1131 = vld [vmem:[%s427 + $0x8c0] sm:$0xff]
        %v1132 = vld [vmem:[%s427 + $0x8c8] sm:$0xff]
        %v1133 = vld [vmem:[%s427 + $0x8d0] sm:$0xff]
        %v1134 = vld [vmem:[%s427 + $0x8d8] sm:$0xff]
        %v1135 = vld [vmem:[%s427 + $0x8e0] sm:$0xff]
        %v1136 = vld [vmem:[%s427 + $0x8e8] sm:$0xff]
        %v1137 = vld [vmem:[%s427 + $0x8f0] sm:$0xff]
        %v1138 = vld [vmem:[%s427 + $0x8f8] sm:$0xff]
        %v1139 = vunpack.c.l.s8.bf16 %v851
        %v1140 = vunpack.c.l.s8.bf16 %v852
        %v1141 = vunpack.c.l.s8.bf16 %v853
        %v1142 = vunpack.c.l.s8.bf16 %v854
        %v1143 = vunpack.c.l.s8.bf16 %v855
        %v1144 = vunpack.c.l.s8.bf16 %v856
        %v1145 = vunpack.c.l.s8.bf16 %v857
        %v1146 = vunpack.c.l.s8.bf16 %v858
        %v1147 = vunpack.c.l.s8.bf16 %v859
        %v1148 = vunpack.c.l.s8.bf16 %v860
        %v1149 = vunpack.c.l.s8.bf16 %v861
        %v1150 = vunpack.c.l.s8.bf16 %v862
        %v1151 = vunpack.c.h.s8.bf16 %v851
        %v1152 = vunpack.c.h.s8.bf16 %v852
        %v1153 = vunpack.c.h.s8.bf16 %v853
        %v1154 = vunpack.c.h.s8.bf16 %v854
        %v1155 = vunpack.c.h.s8.bf16 %v855
        %v1156 = vunpack.c.h.s8.bf16 %v856
        %v1157 = vunpack.c.h.s8.bf16 %v857
        %v1158 = vunpack.c.h.s8.bf16 %v858
        %v1159 = vunpack.c.h.s8.bf16 %v859
        %v1160 = vunpack.c.h.s8.bf16 %v860
        %v1161 = vunpack.c.h.s8.bf16 %v861
        %v1162 = vunpack.c.h.s8.bf16 %v862
        %v1163 = vunpack.c.l.s8.bf16 %v863
        %v1164 = vunpack.c.l.s8.bf16 %v864
        %v1165 = vunpack.c.l.s8.bf16 %v865
        %v1166 = vunpack.c.l.s8.bf16 %v866
        %v1167 = vunpack.c.l.s8.bf16 %v867
        %v1168 = vunpack.c.l.s8.bf16 %v868
        %v1169 = vunpack.c.l.s8.bf16 %v869
        %v1170 = vunpack.c.l.s8.bf16 %v870
        %v1171 = vunpack.c.l.s8.bf16 %v871
        %v1172 = vunpack.c.l.s8.bf16 %v872
        %v1173 = vunpack.c.l.s8.bf16 %v873
        %v1174 = vunpack.c.l.s8.bf16 %v874
        %v1175 = vunpack.c.h.s8.bf16 %v863
        %v1176 = vunpack.c.h.s8.bf16 %v864
        %v1177 = vunpack.c.h.s8.bf16 %v865
        %v1178 = vunpack.c.h.s8.bf16 %v866
        %v1179 = vunpack.c.h.s8.bf16 %v867
        %v1180 = vunpack.c.h.s8.bf16 %v868
        %v1181 = vunpack.c.h.s8.bf16 %v869
        %v1182 = vunpack.c.h.s8.bf16 %v870
        %v1183 = vunpack.c.h.s8.bf16 %v871
        %v1184 = vunpack.c.h.s8.bf16 %v872
        %v1185 = vunpack.c.h.s8.bf16 %v873
        %v1186 = vunpack.c.h.s8.bf16 %v874
        %v1187 = vunpack.c.l.s8.bf16 %v875
        %v1188 = vunpack.c.l.s8.bf16 %v876
        %v1189 = vunpack.c.l.s8.bf16 %v877
        %v1190 = vunpack.c.l.s8.bf16 %v878
        %v1191 = vunpack.c.l.s8.bf16 %v879
        %v1192 = vunpack.c.l.s8.bf16 %v880
        %v1193 = vunpack.c.l.s8.bf16 %v881
        %v1194 = vunpack.c.l.s8.bf16 %v882
        %v1195 = vunpack.c.l.s8.bf16 %v883
        %v1196 = vunpack.c.l.s8.bf16 %v884
        %v1197 = vunpack.c.l.s8.bf16 %v885
        %v1198 = vunpack.c.l.s8.bf16 %v886
        %v1199 = vunpack.c.h.s8.bf16 %v875
        %v1200 = vunpack.c.h.s8.bf16 %v876
        %v1201 = vunpack.c.h.s8.bf16 %v877
        %v1202 = vunpack.c.h.s8.bf16 %v878
        %v1203 = vunpack.c.h.s8.bf16 %v879
        %v1204 = vunpack.c.h.s8.bf16 %v880
        %v1205 = vunpack.c.h.s8.bf16 %v881
        %v1206 = vunpack.c.h.s8.bf16 %v882
        %v1207 = vunpack.c.h.s8.bf16 %v883
        %v1208 = vunpack.c.h.s8.bf16 %v884
        %v1209 = vunpack.c.h.s8.bf16 %v885
        %v1210 = vunpack.c.h.s8.bf16 %v886
        %v1211 = vunpack.c.l.s8.bf16 %v887
        %v1212 = vunpack.c.l.s8.bf16 %v888
        %v1213 = vunpack.c.l.s8.bf16 %v889
        %v1214 = vunpack.c.l.s8.bf16 %v890
        %v1215 = vunpack.c.l.s8.bf16 %v891
        %v1216 = vunpack.c.l.s8.bf16 %v892
        %v1217 = vunpack.c.l.s8.bf16 %v893
        %v1218 = vunpack.c.l.s8.bf16 %v894
        %v1219 = vunpack.c.l.s8.bf16 %v895
        %v1220 = vunpack.c.l.s8.bf16 %v896
        %v1221 = vunpack.c.l.s8.bf16 %v897
        %v1222 = vunpack.c.l.s8.bf16 %v898
        %v1223 = vunpack.c.h.s8.bf16 %v887
        %v1224 = vunpack.c.h.s8.bf16 %v888
        %v1225 = vunpack.c.h.s8.bf16 %v889
        %v1226 = vunpack.c.h.s8.bf16 %v890
        %v1227 = vunpack.c.h.s8.bf16 %v891
        %v1228 = vunpack.c.h.s8.bf16 %v892
        %v1229 = vunpack.c.h.s8.bf16 %v893
        %v1230 = vunpack.c.h.s8.bf16 %v894
        %v1231 = vunpack.c.h.s8.bf16 %v895
        %v1232 = vunpack.c.h.s8.bf16 %v896
        %v1233 = vunpack.c.h.s8.bf16 %v897
        %v1234 = vunpack.c.h.s8.bf16 %v898
        %v1235 = vunpack.c.l.s8.bf16 %v899
        %v1236 = vunpack.c.l.s8.bf16 %v900
        %v1237 = vunpack.c.l.s8.bf16 %v901
        %v1238 = vunpack.c.l.s8.bf16 %v902
        %v1239 = vunpack.c.l.s8.bf16 %v903
        %v1240 = vunpack.c.l.s8.bf16 %v904
        %v1241 = vunpack.c.l.s8.bf16 %v905
        %v1242 = vunpack.c.l.s8.bf16 %v906
        %v1243 = vunpack.c.l.s8.bf16 %v907
        %v1244 = vunpack.c.l.s8.bf16 %v908
        %v1245 = vunpack.c.l.s8.bf16 %v909
        %v1246 = vunpack.c.l.s8.bf16 %v910
        %v1247 = vunpack.c.h.s8.bf16 %v899
        %v1248 = vunpack.c.h.s8.bf16 %v900
        %v1249 = vunpack.c.h.s8.bf16 %v901
        %v1250 = vunpack.c.h.s8.bf16 %v902
        %v1251 = vunpack.c.h.s8.bf16 %v903
        %v1252 = vunpack.c.h.s8.bf16 %v904
        %v1253 = vunpack.c.h.s8.bf16 %v905
        %v1254 = vunpack.c.h.s8.bf16 %v906
        %v1255 = vunpack.c.h.s8.bf16 %v907
        %v1256 = vunpack.c.h.s8.bf16 %v908
        %v1257 = vunpack.c.h.s8.bf16 %v909
        %v1258 = vunpack.c.h.s8.bf16 %v910
        %v1259 = vunpack.c.l.s8.bf16 %v911
        %v1260 = vunpack.c.l.s8.bf16 %v912
        %v1261 = vunpack.c.l.s8.bf16 %v913
        %v1262 = vunpack.c.l.s8.bf16 %v914
        %v1263 = vunpack.c.l.s8.bf16 %v915
        %v1264 = vunpack.c.l.s8.bf16 %v916
        %v1265 = vunpack.c.l.s8.bf16 %v917
        %v1266 = vunpack.c.l.s8.bf16 %v918
        %v1267 = vunpack.c.l.s8.bf16 %v919
        %v1268 = vunpack.c.l.s8.bf16 %v920
        %v1269 = vunpack.c.l.s8.bf16 %v921
        %v1270 = vunpack.c.l.s8.bf16 %v922
        %v1271 = vunpack.c.h.s8.bf16 %v911
        %v1272 = vunpack.c.h.s8.bf16 %v912
        %v1273 = vunpack.c.h.s8.bf16 %v913
        %v1274 = vunpack.c.h.s8.bf16 %v914
        %v1275 = vunpack.c.h.s8.bf16 %v915
        %v1276 = vunpack.c.h.s8.bf16 %v916
        %v1277 = vunpack.c.h.s8.bf16 %v917
        %v1278 = vunpack.c.h.s8.bf16 %v918
        %v1279 = vunpack.c.h.s8.bf16 %v919
        %v1280 = vunpack.c.h.s8.bf16 %v920
        %v1281 = vunpack.c.h.s8.bf16 %v921
        %v1282 = vunpack.c.h.s8.bf16 %v922
        %v1283 = vunpack.c.l.s8.bf16 %v923
        %v1284 = vunpack.c.l.s8.bf16 %v924
        %v1285 = vunpack.c.l.s8.bf16 %v925
        %v1286 = vunpack.c.l.s8.bf16 %v926
        %v1287 = vunpack.c.l.s8.bf16 %v927
        %v1288 = vunpack.c.l.s8.bf16 %v928
        %v1289 = vunpack.c.l.s8.bf16 %v929
        %v1290 = vunpack.c.l.s8.bf16 %v930
        %v1291 = vunpack.c.l.s8.bf16 %v931
        %v1292 = vunpack.c.l.s8.bf16 %v932
        %v1293 = vunpack.c.l.s8.bf16 %v933
        %v1294 = vunpack.c.l.s8.bf16 %v934
        %v1295 = vunpack.c.h.s8.bf16 %v923
        %v1296 = vunpack.c.h.s8.bf16 %v924
        %v1297 = vunpack.c.h.s8.bf16 %v925
        %v1298 = vunpack.c.h.s8.bf16 %v926
        %v1299 = vunpack.c.h.s8.bf16 %v927
        %v1300 = vunpack.c.h.s8.bf16 %v928
        %v1301 = vunpack.c.h.s8.bf16 %v929
        %v1302 = vunpack.c.h.s8.bf16 %v930
        %v1303 = vunpack.c.h.s8.bf16 %v931
        %v1304 = vunpack.c.h.s8.bf16 %v932
        %v1305 = vunpack.c.h.s8.bf16 %v933
        %v1306 = vunpack.c.h.s8.bf16 %v934
        %v1307 = vunpack.c.l.s8.bf16 %v935
        %v1308 = vunpack.c.l.s8.bf16 %v936
        %v1309 = vunpack.c.l.s8.bf16 %v937
        %v1310 = vunpack.c.l.s8.bf16 %v938
        %v1311 = vunpack.c.l.s8.bf16 %v939
        %v1312 = vunpack.c.l.s8.bf16 %v940
        %v1313 = vunpack.c.l.s8.bf16 %v941
        %v1314 = vunpack.c.l.s8.bf16 %v942
        %v1315 = vunpack.c.l.s8.bf16 %v943
        %v1316 = vunpack.c.l.s8.bf16 %v944
        %v1317 = vunpack.c.l.s8.bf16 %v945
        %v1318 = vunpack.c.l.s8.bf16 %v946
        %v1319 = vunpack.c.h.s8.bf16 %v935
        %v1320 = vunpack.c.h.s8.bf16 %v936
        %v1321 = vunpack.c.h.s8.bf16 %v937
        %v1322 = vunpack.c.h.s8.bf16 %v938
        %v1323 = vunpack.c.h.s8.bf16 %v939
        %v1324 = vunpack.c.h.s8.bf16 %v940
        %v1325 = vunpack.c.h.s8.bf16 %v941
        %v1326 = vunpack.c.h.s8.bf16 %v942
        %v1327 = vunpack.c.h.s8.bf16 %v943
        %v1328 = vunpack.c.h.s8.bf16 %v944
        %v1329 = vunpack.c.h.s8.bf16 %v945
        %v1330 = vunpack.c.h.s8.bf16 %v946
        %v1331 = vunpack.c.l.s8.bf16 %v947
        %v1332 = vunpack.c.l.s8.bf16 %v948
        %v1333 = vunpack.c.l.s8.bf16 %v949
        %v1334 = vunpack.c.l.s8.bf16 %v950
        %v1335 = vunpack.c.l.s8.bf16 %v951
        %v1336 = vunpack.c.l.s8.bf16 %v952
        %v1337 = vunpack.c.l.s8.bf16 %v953
        %v1338 = vunpack.c.l.s8.bf16 %v954
        %v1339 = vunpack.c.l.s8.bf16 %v955
        %v1340 = vunpack.c.l.s8.bf16 %v956
        %v1341 = vunpack.c.l.s8.bf16 %v957
        %v1342 = vunpack.c.l.s8.bf16 %v958
        %v1343 = vunpack.c.h.s8.bf16 %v947
        %v1344 = vunpack.c.h.s8.bf16 %v948
        %v1345 = vunpack.c.h.s8.bf16 %v949
        %v1346 = vunpack.c.h.s8.bf16 %v950
        %v1347 = vunpack.c.h.s8.bf16 %v951
        %v1348 = vunpack.c.h.s8.bf16 %v952
        %v1349 = vunpack.c.h.s8.bf16 %v953
        %v1350 = vunpack.c.h.s8.bf16 %v954
        %v1351 = vunpack.c.h.s8.bf16 %v955
        %v1352 = vunpack.c.h.s8.bf16 %v956
        %v1353 = vunpack.c.h.s8.bf16 %v957
        %v1354 = vunpack.c.h.s8.bf16 %v958
        %v1355 = vunpack.c.l.s8.bf16 %v959
        %v1356 = vunpack.c.l.s8.bf16 %v960
        %v1357 = vunpack.c.l.s8.bf16 %v961
        %v1358 = vunpack.c.l.s8.bf16 %v962
        %v1359 = vunpack.c.l.s8.bf16 %v963
        %v1360 = vunpack.c.l.s8.bf16 %v964
        %v1361 = vunpack.c.l.s8.bf16 %v965
        %v1362 = vunpack.c.l.s8.bf16 %v966
        %v1363 = vunpack.c.l.s8.bf16 %v967
        %v1364 = vunpack.c.l.s8.bf16 %v968
        %v1365 = vunpack.c.l.s8.bf16 %v969
        %v1366 = vunpack.c.l.s8.bf16 %v970
        %v1367 = vunpack.c.h.s8.bf16 %v959
        %v1368 = vunpack.c.h.s8.bf16 %v960
        %v1369 = vunpack.c.h.s8.bf16 %v961
        %v1370 = vunpack.c.h.s8.bf16 %v962
        %v1371 = vunpack.c.h.s8.bf16 %v963
        %v1372 = vunpack.c.h.s8.bf16 %v964
        %v1373 = vunpack.c.h.s8.bf16 %v965
        %v1374 = vunpack.c.h.s8.bf16 %v966
        %v1375 = vunpack.c.h.s8.bf16 %v967
        %v1376 = vunpack.c.h.s8.bf16 %v968
        %v1377 = vunpack.c.h.s8.bf16 %v969
        %v1378 = vunpack.c.h.s8.bf16 %v970
        %v1379 = vunpack.c.l.s8.bf16 %v971
        %v1380 = vunpack.c.l.s8.bf16 %v972
        %v1381 = vunpack.c.l.s8.bf16 %v973
        %v1382 = vunpack.c.l.s8.bf16 %v974
        %v1383 = vunpack.c.l.s8.bf16 %v975
        %v1384 = vunpack.c.l.s8.bf16 %v976
        %v1385 = vunpack.c.l.s8.bf16 %v977
        %v1386 = vunpack.c.l.s8.bf16 %v978
        %v1387 = vunpack.c.l.s8.bf16 %v979
        %v1388 = vunpack.c.l.s8.bf16 %v980
        %v1389 = vunpack.c.l.s8.bf16 %v981
        %v1390 = vunpack.c.l.s8.bf16 %v982
        %v1391 = vunpack.c.h.s8.bf16 %v971
        %v1392 = vunpack.c.h.s8.bf16 %v972
        %v1393 = vunpack.c.h.s8.bf16 %v973
        %v1394 = vunpack.c.h.s8.bf16 %v974
        %v1395 = vunpack.c.h.s8.bf16 %v975
        %v1396 = vunpack.c.h.s8.bf16 %v976
        %v1397 = vunpack.c.h.s8.bf16 %v977
        %v1398 = vunpack.c.h.s8.bf16 %v978
        %v1399 = vunpack.c.h.s8.bf16 %v979
        %v1400 = vunpack.c.h.s8.bf16 %v980
        %v1401 = vunpack.c.h.s8.bf16 %v981
        %v1402 = vunpack.c.h.s8.bf16 %v982
        %v1403 = vunpack.c.l.s8.bf16 %v983
        %v1404 = vunpack.c.l.s8.bf16 %v984
        %v1405 = vunpack.c.l.s8.bf16 %v985
        %v1406 = vunpack.c.l.s8.bf16 %v986
        %v1407 = vunpack.c.l.s8.bf16 %v987
        %v1408 = vunpack.c.l.s8.bf16 %v988
        %v1409 = vunpack.c.l.s8.bf16 %v989
        %v1410 = vunpack.c.l.s8.bf16 %v990
        %v1411 = vunpack.c.l.s8.bf16 %v991
        %v1412 = vunpack.c.l.s8.bf16 %v992
        %v1413 = vunpack.c.l.s8.bf16 %v993
        %v1414 = vunpack.c.l.s8.bf16 %v994
        %v1415 = vunpack.c.h.s8.bf16 %v983
        %v1416 = vunpack.c.h.s8.bf16 %v984
        %v1417 = vunpack.c.h.s8.bf16 %v985
        %v1418 = vunpack.c.h.s8.bf16 %v986
        %v1419 = vunpack.c.h.s8.bf16 %v987
        %v1420 = vunpack.c.h.s8.bf16 %v988
        %v1421 = vunpack.c.h.s8.bf16 %v989
        %v1422 = vunpack.c.h.s8.bf16 %v990
        %v1423 = vunpack.c.h.s8.bf16 %v991
        %v1424 = vunpack.c.h.s8.bf16 %v992
        %v1425 = vunpack.c.h.s8.bf16 %v993
        %v1426 = vunpack.c.h.s8.bf16 %v994
        %v1427 = vunpack.c.l.s8.bf16 %v995
        %v1428 = vunpack.c.l.s8.bf16 %v996
        %v1429 = vunpack.c.l.s8.bf16 %v997
        %v1430 = vunpack.c.l.s8.bf16 %v998
        %v1431 = vunpack.c.l.s8.bf16 %v999
        %v1432 = vunpack.c.l.s8.bf16 %v1000
        %v1433 = vunpack.c.l.s8.bf16 %v1001
        %v1434 = vunpack.c.l.s8.bf16 %v1002
        %v1435 = vunpack.c.l.s8.bf16 %v1003
        %v1436 = vunpack.c.l.s8.bf16 %v1004
        %v1437 = vunpack.c.l.s8.bf16 %v1005
        %v1438 = vunpack.c.l.s8.bf16 %v1006
        %v1439 = vunpack.c.h.s8.bf16 %v995
        %v1440 = vunpack.c.h.s8.bf16 %v996
        %v1441 = vunpack.c.h.s8.bf16 %v997
        %v1442 = vunpack.c.h.s8.bf16 %v998
        %v1443 = vunpack.c.h.s8.bf16 %v999
        %v1444 = vunpack.c.h.s8.bf16 %v1000
        %v1445 = vunpack.c.h.s8.bf16 %v1001
        %v1446 = vunpack.c.h.s8.bf16 %v1002
        %v1447 = vunpack.c.h.s8.bf16 %v1003
        %v1448 = vunpack.c.h.s8.bf16 %v1004
        %v1449 = vunpack.c.h.s8.bf16 %v1005
        %v1450 = vunpack.c.h.s8.bf16 %v1006
        %v1451 = vunpack.c.l.s8.bf16 %v1007
        %v1452 = vunpack.c.l.s8.bf16 %v1008
        %v1453 = vunpack.c.l.s8.bf16 %v1009
        %v1454 = vunpack.c.l.s8.bf16 %v1010
        %v1455 = vunpack.c.l.s8.bf16 %v1011
        %v1456 = vunpack.c.l.s8.bf16 %v1012
        %v1457 = vunpack.c.l.s8.bf16 %v1013
        %v1458 = vunpack.c.l.s8.bf16 %v1014
        %v1459 = vunpack.c.l.s8.bf16 %v1015
        %v1460 = vunpack.c.l.s8.bf16 %v1016
        %v1461 = vunpack.c.l.s8.bf16 %v1017
        %v1462 = vunpack.c.l.s8.bf16 %v1018
        %v1463 = vunpack.c.h.s8.bf16 %v1007
        %v1464 = vunpack.c.h.s8.bf16 %v1008
        %v1465 = vunpack.c.h.s8.bf16 %v1009
        %v1466 = vunpack.c.h.s8.bf16 %v1010
        %v1467 = vunpack.c.h.s8.bf16 %v1011
        %v1468 = vunpack.c.h.s8.bf16 %v1012
        %v1469 = vunpack.c.h.s8.bf16 %v1013
        %v1470 = vunpack.c.h.s8.bf16 %v1014
        %v1471 = vunpack.c.h.s8.bf16 %v1015
        %v1472 = vunpack.c.h.s8.bf16 %v1016
        %v1473 = vunpack.c.h.s8.bf16 %v1017
        %v1474 = vunpack.c.h.s8.bf16 %v1018
        %v1475 = vunpack.c.l.s8.bf16 %v1019
        %v1476 = vunpack.c.l.s8.bf16 %v1020
        %v1477 = vunpack.c.l.s8.bf16 %v1021
        %v1478 = vunpack.c.l.s8.bf16 %v1022
        %v1479 = vunpack.c.l.s8.bf16 %v1023
        %v1480 = vunpack.c.l.s8.bf16 %v1024
        %v1481 = vunpack.c.l.s8.bf16 %v1025
        %v1482 = vunpack.c.l.s8.bf16 %v1026
        %v1483 = vunpack.c.l.s8.bf16 %v1027
        %v1484 = vunpack.c.l.s8.bf16 %v1028
        %v1485 = vunpack.c.l.s8.bf16 %v1029
        %v1486 = vunpack.c.l.s8.bf16 %v1030
        %v1487 = vunpack.c.h.s8.bf16 %v1019
        %v1488 = vunpack.c.h.s8.bf16 %v1020
        %v1489 = vunpack.c.h.s8.bf16 %v1021
        %v1490 = vunpack.c.h.s8.bf16 %v1022
        %v1491 = vunpack.c.h.s8.bf16 %v1023
        %v1492 = vunpack.c.h.s8.bf16 %v1024
        %v1493 = vunpack.c.h.s8.bf16 %v1025
        %v1494 = vunpack.c.h.s8.bf16 %v1026
        %v1495 = vunpack.c.h.s8.bf16 %v1027
        %v1496 = vunpack.c.h.s8.bf16 %v1028
        %v1497 = vunpack.c.h.s8.bf16 %v1029
        %v1498 = vunpack.c.h.s8.bf16 %v1030
        %v1499 = vunpack.c.l.s8.bf16 %v1031
        %v1500 = vunpack.c.l.s8.bf16 %v1032
        %v1501 = vunpack.c.l.s8.bf16 %v1033
        %v1502 = vunpack.c.l.s8.bf16 %v1034
        %v1503 = vunpack.c.l.s8.bf16 %v1035
        %v1504 = vunpack.c.l.s8.bf16 %v1036
        %v1505 = vunpack.c.l.s8.bf16 %v1037
        %v1506 = vunpack.c.l.s8.bf16 %v1038
        %v1507 = vunpack.c.l.s8.bf16 %v1039
        %v1508 = vunpack.c.l.s8.bf16 %v1040
        %v1509 = vunpack.c.l.s8.bf16 %v1041
        %v1510 = vunpack.c.l.s8.bf16 %v1042
        %v1511 = vunpack.c.h.s8.bf16 %v1031
        %v1512 = vunpack.c.h.s8.bf16 %v1032
        %v1513 = vunpack.c.h.s8.bf16 %v1033
        %v1514 = vunpack.c.h.s8.bf16 %v1034
        %v1515 = vunpack.c.h.s8.bf16 %v1035
        %v1516 = vunpack.c.h.s8.bf16 %v1036
        %v1517 = vunpack.c.h.s8.bf16 %v1037
        %v1518 = vunpack.c.h.s8.bf16 %v1038
        %v1519 = vunpack.c.h.s8.bf16 %v1039
        %v1520 = vunpack.c.h.s8.bf16 %v1040
        %v1521 = vunpack.c.h.s8.bf16 %v1041
        %v1522 = vunpack.c.h.s8.bf16 %v1042
        %v1523 = vunpack.c.l.s8.bf16 %v1043
        %v1524 = vunpack.c.l.s8.bf16 %v1044
        %v1525 = vunpack.c.l.s8.bf16 %v1045
        %v1526 = vunpack.c.l.s8.bf16 %v1046
        %v1527 = vunpack.c.l.s8.bf16 %v1047
        %v1528 = vunpack.c.l.s8.bf16 %v1048
        %v1529 = vunpack.c.l.s8.bf16 %v1049
        %v1530 = vunpack.c.l.s8.bf16 %v1050
        %v1531 = vunpack.c.l.s8.bf16 %v1051
        %v1532 = vunpack.c.l.s8.bf16 %v1052
        %v1533 = vunpack.c.l.s8.bf16 %v1053
        %v1534 = vunpack.c.l.s8.bf16 %v1054
        %v1535 = vunpack.c.h.s8.bf16 %v1043
        %v1536 = vunpack.c.h.s8.bf16 %v1044
        %v1537 = vunpack.c.h.s8.bf16 %v1045
        %v1538 = vunpack.c.h.s8.bf16 %v1046
        %v1539 = vunpack.c.h.s8.bf16 %v1047
        %v1540 = vunpack.c.h.s8.bf16 %v1048
        %v1541 = vunpack.c.h.s8.bf16 %v1049
        %v1542 = vunpack.c.h.s8.bf16 %v1050
        %v1543 = vunpack.c.h.s8.bf16 %v1051
        %v1544 = vunpack.c.h.s8.bf16 %v1052
        %v1545 = vunpack.c.h.s8.bf16 %v1053
        %v1546 = vunpack.c.h.s8.bf16 %v1054
        %v1547 = vunpack.c.l.s8.bf16 %v1055
        %v1548 = vunpack.c.l.s8.bf16 %v1056
        %v1549 = vunpack.c.l.s8.bf16 %v1057
        %v1550 = vunpack.c.l.s8.bf16 %v1058
        %v1551 = vunpack.c.l.s8.bf16 %v1059
        %v1552 = vunpack.c.l.s8.bf16 %v1060
        %v1553 = vunpack.c.l.s8.bf16 %v1061
        %v1554 = vunpack.c.l.s8.bf16 %v1062
        %v1555 = vunpack.c.l.s8.bf16 %v1063
        %v1556 = vunpack.c.l.s8.bf16 %v1064
        %v1557 = vunpack.c.l.s8.bf16 %v1065
        %v1558 = vunpack.c.l.s8.bf16 %v1066
        %v1559 = vunpack.c.h.s8.bf16 %v1055
        %v1560 = vunpack.c.h.s8.bf16 %v1056
        %v1561 = vunpack.c.h.s8.bf16 %v1057
        %v1562 = vunpack.c.h.s8.bf16 %v1058
        %v1563 = vunpack.c.h.s8.bf16 %v1059
        %v1564 = vunpack.c.h.s8.bf16 %v1060
        %v1565 = vunpack.c.h.s8.bf16 %v1061
        %v1566 = vunpack.c.h.s8.bf16 %v1062
        %v1567 = vunpack.c.h.s8.bf16 %v1063
        %v1568 = vunpack.c.h.s8.bf16 %v1064
        %v1569 = vunpack.c.h.s8.bf16 %v1065
        %v1570 = vunpack.c.h.s8.bf16 %v1066
        %v1571 = vunpack.c.l.s8.bf16 %v1067
        %v1572 = vunpack.c.l.s8.bf16 %v1068
        %v1573 = vunpack.c.l.s8.bf16 %v1069
        %v1574 = vunpack.c.l.s8.bf16 %v1070
        %v1575 = vunpack.c.l.s8.bf16 %v1071
        %v1576 = vunpack.c.l.s8.bf16 %v1072
        %v1577 = vunpack.c.l.s8.bf16 %v1073
        %v1578 = vunpack.c.l.s8.bf16 %v1074
        %v1579 = vunpack.c.l.s8.bf16 %v1075
        %v1580 = vunpack.c.l.s8.bf16 %v1076
        %v1581 = vunpack.c.l.s8.bf16 %v1077
        %v1582 = vunpack.c.l.s8.bf16 %v1078
        %v1583 = vunpack.c.h.s8.bf16 %v1067
        %v1584 = vunpack.c.h.s8.bf16 %v1068
        %v1585 = vunpack.c.h.s8.bf16 %v1069
        %v1586 = vunpack.c.h.s8.bf16 %v1070
        %v1587 = vunpack.c.h.s8.bf16 %v1071
        %v1588 = vunpack.c.h.s8.bf16 %v1072
        %v1589 = vunpack.c.h.s8.bf16 %v1073
        %v1590 = vunpack.c.h.s8.bf16 %v1074
        %v1591 = vunpack.c.h.s8.bf16 %v1075
        %v1592 = vunpack.c.h.s8.bf16 %v1076
        %v1593 = vunpack.c.h.s8.bf16 %v1077
        %v1594 = vunpack.c.h.s8.bf16 %v1078
        %v1595 = vunpack.c.l.s8.bf16 %v1079
        %v1596 = vunpack.c.l.s8.bf16 %v1080
        %v1597 = vunpack.c.l.s8.bf16 %v1081
        %v1598 = vunpack.c.l.s8.bf16 %v1082
        %v1599 = vunpack.c.l.s8.bf16 %v1083
        %v1600 = vunpack.c.l.s8.bf16 %v1084
        %v1601 = vunpack.c.l.s8.bf16 %v1085
        %v1602 = vunpack.c.l.s8.bf16 %v1086
        %v1603 = vunpack.c.l.s8.bf16 %v1087
        %v1604 = vunpack.c.l.s8.bf16 %v1088
        %v1605 = vunpack.c.l.s8.bf16 %v1089
        %v1606 = vunpack.c.l.s8.bf16 %v1090
        %v1607 = vunpack.c.h.s8.bf16 %v1079
        %v1608 = vunpack.c.h.s8.bf16 %v1080
        %v1609 = vunpack.c.h.s8.bf16 %v1081
        %v1610 = vunpack.c.h.s8.bf16 %v1082
        %v1611 = vunpack.c.h.s8.bf16 %v1083
        %v1612 = vunpack.c.h.s8.bf16 %v1084
        %v1613 = vunpack.c.h.s8.bf16 %v1085
        %v1614 = vunpack.c.h.s8.bf16 %v1086
        %v1615 = vunpack.c.h.s8.bf16 %v1087
        %v1616 = vunpack.c.h.s8.bf16 %v1088
        %v1617 = vunpack.c.h.s8.bf16 %v1089
        %v1618 = vunpack.c.h.s8.bf16 %v1090
        %v1619 = vunpack.c.l.s8.bf16 %v1091
        %v1620 = vunpack.c.l.s8.bf16 %v1092
        %v1621 = vunpack.c.l.s8.bf16 %v1093
        %v1622 = vunpack.c.l.s8.bf16 %v1094
        %v1623 = vunpack.c.l.s8.bf16 %v1095
        %v1624 = vunpack.c.l.s8.bf16 %v1096
        %v1625 = vunpack.c.l.s8.bf16 %v1097
        %v1626 = vunpack.c.l.s8.bf16 %v1098
        %v1627 = vunpack.c.l.s8.bf16 %v1099
        %v1628 = vunpack.c.l.s8.bf16 %v1100
        %v1629 = vunpack.c.l.s8.bf16 %v1101
        %v1630 = vunpack.c.l.s8.bf16 %v1102
        %v1631 = vunpack.c.h.s8.bf16 %v1091
        %v1632 = vunpack.c.h.s8.bf16 %v1092
        %v1633 = vunpack.c.h.s8.bf16 %v1093
        %v1634 = vunpack.c.h.s8.bf16 %v1094
        %v1635 = vunpack.c.h.s8.bf16 %v1095
        %v1636 = vunpack.c.h.s8.bf16 %v1096
        %v1637 = vunpack.c.h.s8.bf16 %v1097
        %v1638 = vunpack.c.h.s8.bf16 %v1098
        %v1639 = vunpack.c.h.s8.bf16 %v1099
        %v1640 = vunpack.c.h.s8.bf16 %v1100
        %v1641 = vunpack.c.h.s8.bf16 %v1101
        %v1642 = vunpack.c.h.s8.bf16 %v1102
        %v1643 = vunpack.c.l.s8.bf16 %v1103
        %v1644 = vunpack.c.l.s8.bf16 %v1104
        %v1645 = vunpack.c.l.s8.bf16 %v1105
        %v1646 = vunpack.c.l.s8.bf16 %v1106
        %v1647 = vunpack.c.l.s8.bf16 %v1107
        %v1648 = vunpack.c.l.s8.bf16 %v1108
        %v1649 = vunpack.c.l.s8.bf16 %v1109
        %v1650 = vunpack.c.l.s8.bf16 %v1110
        %v1651 = vunpack.c.l.s8.bf16 %v1111
        %v1652 = vunpack.c.l.s8.bf16 %v1112
        %v1653 = vunpack.c.l.s8.bf16 %v1113
        %v1654 = vunpack.c.l.s8.bf16 %v1114
        %v1655 = vunpack.c.h.s8.bf16 %v1103
        %v1656 = vunpack.c.h.s8.bf16 %v1104
        %v1657 = vunpack.c.h.s8.bf16 %v1105
        %v1658 = vunpack.c.h.s8.bf16 %v1106
        %v1659 = vunpack.c.h.s8.bf16 %v1107
        %v1660 = vunpack.c.h.s8.bf16 %v1108
        %v1661 = vunpack.c.h.s8.bf16 %v1109
        %v1662 = vunpack.c.h.s8.bf16 %v1110
        %v1663 = vunpack.c.h.s8.bf16 %v1111
        %v1664 = vunpack.c.h.s8.bf16 %v1112
        %v1665 = vunpack.c.h.s8.bf16 %v1113
        %v1666 = vunpack.c.h.s8.bf16 %v1114
        %v1667 = vunpack.c.l.s8.bf16 %v1115
        %v1668 = vunpack.c.l.s8.bf16 %v1116
        %v1669 = vunpack.c.l.s8.bf16 %v1117
        %v1670 = vunpack.c.l.s8.bf16 %v1118
        %v1671 = vunpack.c.l.s8.bf16 %v1119
        %v1672 = vunpack.c.l.s8.bf16 %v1120
        %v1673 = vunpack.c.l.s8.bf16 %v1121
        %v1674 = vunpack.c.l.s8.bf16 %v1122
        %v1675 = vunpack.c.l.s8.bf16 %v1123
        %v1676 = vunpack.c.l.s8.bf16 %v1124
        %v1677 = vunpack.c.l.s8.bf16 %v1125
        %v1678 = vunpack.c.l.s8.bf16 %v1126
        %v1679 = vunpack.c.h.s8.bf16 %v1115
        %v1680 = vunpack.c.h.s8.bf16 %v1116
        %v1681 = vunpack.c.h.s8.bf16 %v1117
        %v1682 = vunpack.c.h.s8.bf16 %v1118
        %v1683 = vunpack.c.h.s8.bf16 %v1119
        %v1684 = vunpack.c.h.s8.bf16 %v1120
        %v1685 = vunpack.c.h.s8.bf16 %v1121
        %v1686 = vunpack.c.h.s8.bf16 %v1122
        %v1687 = vunpack.c.h.s8.bf16 %v1123
        %v1688 = vunpack.c.h.s8.bf16 %v1124
        %v1689 = vunpack.c.h.s8.bf16 %v1125
        %v1690 = vunpack.c.h.s8.bf16 %v1126
        %v1691 = vunpack.c.l.s8.bf16 %v1127
        %v1692 = vunpack.c.l.s8.bf16 %v1128
        %v1693 = vunpack.c.l.s8.bf16 %v1129
        %v1694 = vunpack.c.l.s8.bf16 %v1130
        %v1695 = vunpack.c.l.s8.bf16 %v1131
        %v1696 = vunpack.c.l.s8.bf16 %v1132
        %v1697 = vunpack.c.l.s8.bf16 %v1133
        %v1698 = vunpack.c.l.s8.bf16 %v1134
        %v1699 = vunpack.c.l.s8.bf16 %v1135
        %v1700 = vunpack.c.l.s8.bf16 %v1136
        %v1701 = vunpack.c.l.s8.bf16 %v1137
        %v1702 = vunpack.c.l.s8.bf16 %v1138
        %v1703 = vunpack.c.h.s8.bf16 %v1127
        %v1704 = vunpack.c.h.s8.bf16 %v1128
        %v1705 = vunpack.c.h.s8.bf16 %v1129
        %v1706 = vunpack.c.h.s8.bf16 %v1130
        %v1707 = vunpack.c.h.s8.bf16 %v1131
        %v1708 = vunpack.c.h.s8.bf16 %v1132
        %v1709 = vunpack.c.h.s8.bf16 %v1133
        %v1710 = vunpack.c.h.s8.bf16 %v1134
        %v1711 = vunpack.c.h.s8.bf16 %v1135
        %v1712 = vunpack.c.h.s8.bf16 %v1136
        %v1713 = vunpack.c.h.s8.bf16 %v1137
        %v1714 = vunpack.c.h.s8.bf16 %v1138
        %v1715 = vld [vmem:[#allocation2] sm:$0xff]
        %v1716 = vld [vmem:[#allocation2 + $0x8] sm:$0xff]
        %v1717 = vld [vmem:[#allocation2 + $0x10] sm:$0xff]
        %v1718 = vld [vmem:[#allocation2 + $0x18] sm:$0xff]
        %v1719 = vld [vmem:[#allocation2 + $0x20] sm:$0xff]
        %v1720 = vld [vmem:[#allocation2 + $0x28] sm:$0xff]
        %v1721 = vld [vmem:[#allocation2 + $0x30] sm:$0xff]
        %v1722 = vld [vmem:[#allocation2 + $0x38] sm:$0xff]
        %v1723 = vld [vmem:[#allocation2 + $0x40] sm:$0xff]
        %v1724 = vld [vmem:[#allocation2 + $0x48] sm:$0xff]
        %v1725 = vld [vmem:[#allocation2 + $0x50] sm:$0xff]
        %v1726 = vld [vmem:[#allocation2 + $0x58] sm:$0xff]
        %1727 = vmatprep.subr.bf16.mxu0 %v1140
        %1728 = vmatpush1.bf16.msra.mxu0 %v1139
        %1729 = vmatprep.subr.bf16.mxu0 %v1152
        %1730 = vmatpush1.bf16.msra.mxu0 %v1151
        %1731 = vmatprep.subr.bf16.mxu0 %v1164
        %1732 = vmatpush1.bf16.msra.mxu0 %v1163
        %1733 = vmatprep.subr.bf16.mxu0 %v1176
        %1734 = vmatpush1.bf16.msra.mxu0 %v1175
        %1735 = vmatprep.subr.bf16.mxu0 %v1188
        %1736 = vmatpush1.bf16.msra.mxu0 %v1187
        %1737 = vmatprep.subr.bf16.mxu0 %v1200
        %1738 = vmatpush1.bf16.msra.mxu0 %v1199
        %1739 = vmatprep.subr.bf16.mxu0 %v1212
        %1740 = vmatpush1.bf16.msra.mxu0 %v1211
        %1741 = vmatprep.subr.bf16.mxu0 %v1224
        %1742 = vmatpush1.bf16.msra.mxu0 %v1223
        %1743 = vmatprep.subr.bf16.mxu0 %v1236
        %1744 = vmatpush1.bf16.msra.mxu0 %v1235
        %1745 = vmatprep.subr.bf16.mxu0 %v1248
        %1746 = vmatpush1.bf16.msra.mxu0 %v1247
        %1747 = vmatprep.subr.bf16.mxu0 %v1260
        %1748 = vmatpush1.bf16.msra.mxu0 %v1259
        %1749 = vmatprep.subr.bf16.mxu0 %v1272
        %1750 = vmatpush1.bf16.msra.mxu0 %v1271
        %1751 = vmatprep.subr.bf16.mxu0 %v1284
        %1752 = vmatpush1.bf16.msra.mxu0 %v1283
        %1753 = vmatprep.subr.bf16.mxu0 %v1296
        %1754 = vmatpush1.bf16.msra.mxu0 %v1295
        %1755 = vmatprep.subr.bf16.mxu0 %v1308
        %1756 = vmatpush1.bf16.msra.mxu0 %v1307
        %1757 = vmatprep.subr.bf16.mxu0 %v1320
        %1758 = vmatpush1.bf16.msra.mxu0 %v1319
        %1759 = vmatprep.mubr.bf16.mxu0 %v1716
        %1760 = vmatmul.mubr.bf16.gmra.mrb[0].mxu0 %v1715
        %v1761 = vpop.f32.mrb[0].mxu0
        %v1762 = vadd.f32 0.0, %v1761
        %v1763 = vpop.f32.mrb[0].mxu0
        %v1764 = vadd.f32 0.0, %v1763
        %v1765 = vpop.f32.mrb[0].mxu0
        %v1766 = vadd.f32 0.0, %v1765
        %v1767 = vpop.f32.mrb[0].mxu0
        %v1768 = vadd.f32 0.0, %v1767
        %1769 = vmatprep.mubr.bf16.mxu0 %v1722
        %1770 = vmatmul.mubr.bf16.gmra.mrb[0].mxu0 %v1721
        %v1771 = vpop.f32.mrb[0].mxu0
        %v1772 = vadd.f32 0.0, %v1771
        %v1773 = vpop.f32.mrb[0].mxu0
        %v1774 = vadd.f32 0.0, %v1773
        %v1775 = vpop.f32.mrb[0].mxu0
        %v1776 = vadd.f32 0.0, %v1775
        %v1777 = vpop.f32.mrb[0].mxu0
        %v1778 = vadd.f32 0.0, %v1777
        %1779 = vdwg.mxu0
        %1780 = vmatprep.subr.bf16.mxu0 %v1332
        %1781 = vmatpush1.bf16.msra.mxu0 %v1331
        %1782 = vmatprep.subr.bf16.mxu0 %v1344
        %1783 = vmatpush1.bf16.msra.mxu0 %v1343
        %1784 = vmatprep.subr.bf16.mxu0 %v1356
        %1785 = vmatpush1.bf16.msra.mxu0 %v1355
        %1786 = vmatprep.subr.bf16.mxu0 %v1368
        %1787 = vmatpush1.bf16.msra.mxu0 %v1367
        %1788 = vmatprep.subr.bf16.mxu0 %v1380
        %1789 = vmatpush1.bf16.msra.mxu0 %v1379
        %1790 = vmatprep.subr.bf16.mxu0 %v1392
        %1791 = vmatpush1.bf16.msra.mxu0 %v1391
        %1792 = vmatprep.subr.bf16.mxu0 %v1404
        %1793 = vmatpush1.bf16.msra.mxu0 %v1403
        %1794 = vmatprep.subr.bf16.mxu0 %v1416
        %1795 = vmatpush1.bf16.msra.mxu0 %v1415
        %1796 = vmatprep.subr.bf16.mxu0 %v1428
        %1797 = vmatpush1.bf16.msra.mxu0 %v1427
        %1798 = vmatprep.subr.bf16.mxu0 %v1440
        %1799 = vmatpush1.bf16.msra.mxu0 %v1439
        %1800 = vmatprep.subr.bf16.mxu0 %v1452
        %1801 = vmatpush1.bf16.msra.mxu0 %v1451
        %1802 = vmatprep.subr.bf16.mxu0 %v1464
        %1803 = vmatpush1.bf16.msra.mxu0 %v1463
        %1804 = vmatprep.subr.bf16.mxu0 %v1476
        %1805 = vmatpush1.bf16.msra.mxu0 %v1475
        %1806 = vmatprep.subr.bf16.mxu0 %v1488
        %1807 = vmatpush1.bf16.msra.mxu0 %v1487
        %1808 = vmatprep.subr.bf16.mxu0 %v1500
        %1809 = vmatpush1.bf16.msra.mxu0 %v1499
        %1810 = vmatprep.subr.bf16.mxu0 %v1512
        %1811 = vmatpush1.bf16.msra.mxu0 %v1511
        %1812 = vmatprep.mubr.bf16.mxu0 %v1718
        %1813 = vmatmul.mubr.bf16.gmra.mrb[0].mxu0 %v1717
        %v1814 = vpop.f32.mrb[0].mxu0
        %v1815 = vadd.f32 %v1762, %v1814
        %v1816 = vpop.f32.mrb[0].mxu0
        %v1817 = vadd.f32 %v1764, %v1816
        %v1818 = vpop.f32.mrb[0].mxu0
        %v1819 = vadd.f32 %v1766, %v1818
        %v1820 = vpop.f32.mrb[0].mxu0
        %v1821 = vadd.f32 %v1768, %v1820
        %1822 = vmatprep.mubr.bf16.mxu0 %v1724
        %1823 = vmatmul.mubr.bf16.gmra.mrb[0].mxu0 %v1723
        %v1824 = vpop.f32.mrb[0].mxu0
        %v1825 = vadd.f32 %v1772, %v1824
        %v1826 = vpop.f32.mrb[0].mxu0
        %v1827 = vadd.f32 %v1774, %v1826
        %v1828 = vpop.f32.mrb[0].mxu0
        %v1829 = vadd.f32 %v1776, %v1828
        %v1830 = vpop.f32.mrb[0].mxu0
        %v1831 = vadd.f32 %v1778, %v1830
        %1832 = vdwg.mxu0
        %1833 = vmatprep.subr.bf16.mxu0 %v1524
        %1834 = vmatpush1.bf16.msra.mxu0 %v1523
        %1835 = vmatprep.subr.bf16.mxu0 %v1536
        %1836 = vmatpush1.bf16.msra.mxu0 %v1535
        %1837 = vmatprep.subr.bf16.mxu0 %v1548
        %1838 = vmatpush1.bf16.msra.mxu0 %v1547
        %1839 = vmatprep.subr.bf16.mxu0 %v1560
        %1840 = vmatpush1.bf16.msra.mxu0 %v1559
        %1841 = vmatprep.subr.bf16.mxu0 %v1572
        %1842 = vmatpush1.bf16.msra.mxu0 %v1571
        %1843 = vmatprep.subr.bf16.mxu0 %v1584
        %1844 = vmatpush1.bf16.msra.mxu0 %v1583
        %1845 = vmatprep.subr.bf16.mxu0 %v1596
        %1846 = vmatpush1.bf16.msra.mxu0 %v1595
        %1847 = vmatprep.subr.bf16.mxu0 %v1608
        %1848 = vmatpush1.bf16.msra.mxu0 %v1607
        %1849 = vmatprep.subr.bf16.mxu0 %v1620
        %1850 = vmatpush1.bf16.msra.mxu0 %v1619
        %1851 = vmatprep.subr.bf16.mxu0 %v1632
        %1852 = vmatpush1.bf16.msra.mxu0 %v1631
        %1853 = vmatprep.subr.bf16.mxu0 %v1644
        %1854 = vmatpush1.bf16.msra.mxu0 %v1643
        %1855 = vmatprep.subr.bf16.mxu0 %v1656
        %1856 = vmatpush1.bf16.msra.mxu0 %v1655
        %1857 = vmatprep.subr.bf16.mxu0 %v1668
        %1858 = vmatpush1.bf16.msra.mxu0 %v1667
        %1859 = vmatprep.subr.bf16.mxu0 %v1680
        %1860 = vmatpush1.bf16.msra.mxu0 %v1679
        %1861 = vmatprep.subr.bf16.mxu0 %v1692
        %1862 = vmatpush1.bf16.msra.mxu0 %v1691
        %1863 = vmatprep.subr.bf16.mxu0 %v1704
        %1864 = vmatpush1.bf16.msra.mxu0 %v1703
        %1865 = vmatprep.mubr.bf16.mxu0 %v1720
        %1866 = vmatmul.mubr.bf16.gmra.mrb[0].mxu0 %v1719
        %v1867 = vpop.f32.mrb[0].mxu0
        %v1868 = vadd.f32 %v1815, %v1867
        %v1869 = vpop.f32.mrb[0].mxu0
        %v1870 = vadd.f32 %v1817, %v1869
        %v1871 = vpop.f32.mrb[0].mxu0
        %v1872 = vadd.f32 %v1819, %v1871
        %v1873 = vpop.f32.mrb[0].mxu0
        %v1874 = vadd.f32 %v1821, %v1873
        %1875 = vmatprep.mubr.bf16.mxu0 %v1726
        %1876 = vmatmul.mubr.bf16.gmra.mrb[0].mxu0 %v1725
        %v1877 = vpop.f32.mrb[0].mxu0
        %v1878 = vadd.f32 %v1825, %v1877
        %v1879 = vpop.f32.mrb[0].mxu0
        %v1880 = vadd.f32 %v1827, %v1879
        %v1881 = vpop.f32.mrb[0].mxu0
        %v1882 = vadd.f32 %v1829, %v1881
        %v1883 = vpop.f32.mrb[0].mxu0
        %v1884 = vadd.f32 %v1831, %v1883
        %1885 = vdwg.mxu0
        %1886 = vmatprep.subr.bf16.mxu0 %v1142
        %1887 = vmatpush1.bf16.msra.mxu0 %v1141
        %1888 = vmatprep.subr.bf16.mxu0 %v1154
        %1889 = vmatpush1.bf16.msra.mxu0 %v1153
        %1890 = vmatprep.subr.bf16.mxu0 %v1166
        %1891 = vmatpush1.bf16.msra.mxu0 %v1165
        %1892 = vmatprep.subr.bf16.mxu0 %v1178
        %1893 = vmatpush1.bf16.msra.mxu0 %v1177
        %1894 = vmatprep.subr.bf16.mxu0 %v1190
        %1895 = vmatpush1.bf16.msra.mxu0 %v1189
        %1896 = vmatprep.subr.bf16.mxu0 %v1202
        %1897 = vmatpush1.bf16.msra.mxu0 %v1201
        %1898 = vmatprep.subr.bf16.mxu0 %v1214
        %1899 = vmatpush1.bf16.msra.mxu0 %v1213
        %1900 = vmatprep.subr.bf16.mxu0 %v1226
        %1901 = vmatpush1.bf16.msra.mxu0 %v1225
        %1902 = vmatprep.subr.bf16.mxu0 %v1238
        %1903 = vmatpush1.bf16.msra.mxu0 %v1237
        %1904 = vmatprep.subr.bf16.mxu0 %v1250
        %1905 = vmatpush1.bf16.msra.mxu0 %v1249
        %1906 = vmatprep.subr.bf16.mxu0 %v1262
        %1907 = vmatpush1.bf16.msra.mxu0 %v1261
        %1908 = vmatprep.subr.bf16.mxu0 %v1274
        %1909 = vmatpush1.bf16.msra.mxu0 %v1273
        %1910 = vmatprep.subr.bf16.mxu0 %v1286
        %1911 = vmatpush1.bf16.msra.mxu0 %v1285
        %1912 = vmatprep.subr.bf16.mxu0 %v1298
        %1913 = vmatpush1.bf16.msra.mxu0 %v1297
        %1914 = vmatprep.subr.bf16.mxu0 %v1310
        %1915 = vmatpush1.bf16.msra.mxu0 %v1309
        %1916 = vmatprep.subr.bf16.mxu0 %v1322
        %1917 = vmatpush1.bf16.msra.mxu0 %v1321
        %1918 = vmatprep.mubr.bf16.mxu0 %v1716
        %1919 = vmatmul.mubr.bf16.gmra.mrb[0].mxu0 %v1715
        %v1920 = vpop.f32.mrb[0].mxu0
        %v1921 = vadd.f32 0.0, %v1920
        %v1922 = vpop.f32.mrb[0].mxu0
        %v1923 = vadd.f32 0.0, %v1922
        %v1924 = vpop.f32.mrb[0].mxu0
        %v1925 = vadd.f32 0.0, %v1924
        %v1926 = vpop.f32.mrb[0].mxu0
        %v1927 = vadd.f32 0.0, %v1926
        %1928 = vmatprep.mubr.bf16.mxu0 %v1722
        %1929 = vmatmul.mubr.bf16.gmra.mrb[0].mxu0 %v1721
        %v1930 = vpop.f32.mrb[0].mxu0
        %v1931 = vadd.f32 0.0, %v1930
        %v1932 = vpop.f32.mrb[0].mxu0
        %v1933 = vadd.f32 0.0, %v1932
        %v1934 = vpop.f32.mrb[0].mxu0
        %v1935 = vadd.f32 0.0, %v1934
        %v1936 = vpop.f32.mrb[0].mxu0
        %v1937 = vadd.f32 0.0, %v1936
        %1938 = vdwg.mxu0
        %1939 = vmatprep.subr.bf16.mxu0 %v1334
        %1940 = vmatpush1.bf16.msra.mxu0 %v1333
        %1941 = vmatprep.subr.bf16.mxu0 %v1346
        %1942 = vmatpush1.bf16.msra.mxu0 %v1345
        %1943 = vmatprep.subr.bf16.mxu0 %v1358
        %1944 = vmatpush1.bf16.msra.mxu0 %v1357
        %1945 = vmatprep.subr.bf16.mxu0 %v1370
        %1946 = vmatpush1.bf16.msra.mxu0 %v1369
        %1947 = vmatprep.subr.bf16.mxu0 %v1382
        %1948 = vmatpush1.bf16.msra.mxu0 %v1381
        %1949 = vmatprep.subr.bf16.mxu0 %v1394
        %1950 = vmatpush1.bf16.msra.mxu0 %v1393
        %1951 = vmatprep.subr.bf16.mxu0 %v1406
        %1952 = vmatpush1.bf16.msra.mxu0 %v1405
        %1953 = vmatprep.subr.bf16.mxu0 %v1418
        %1954 = vmatpush1.bf16.msra.mxu0 %v1417
        %1955 = vmatprep.subr.bf16.mxu0 %v1430
        %1956 = vmatpush1.bf16.msra.mxu0 %v1429
        %1957 = vmatprep.subr.bf16.mxu0 %v1442
        %1958 = vmatpush1.bf16.msra.mxu0 %v1441
        %1959 = vmatprep.subr.bf16.mxu0 %v1454
        %1960 = vmatpush1.bf16.msra.mxu0 %v1453
        %1961 = vmatprep.subr.bf16.mxu0 %v1466
        %1962 = vmatpush1.bf16.msra.mxu0 %v1465
        %1963 = vmatprep.subr.bf16.mxu0 %v1478
        %1964 = vmatpush1.bf16.msra.mxu0 %v1477
        %1965 = vmatprep.subr.bf16.mxu0 %v1490
        %1966 = vmatpush1.bf16.msra.mxu0 %v1489
        %1967 = vmatprep.subr.bf16.mxu0 %v1502
        %1968 = vmatpush1.bf16.msra.mxu0 %v1501
        %1969 = vmatprep.subr.bf16.mxu0 %v1514
        %1970 = vmatpush1.bf16.msra.mxu0 %v1513
        %1971 = vmatprep.mubr.bf16.mxu0 %v1718
        %1972 = vmatmul.mubr.bf16.gmra.mrb[0].mxu0 %v1717
        %v1973 = vpop.f32.mrb[0].mxu0
        %v1974 = vadd.f32 %v1921, %v1973
        %v1975 = vpop.f32.mrb[0].mxu0
        %v1976 = vadd.f32 %v1923, %v1975
        %v1977 = vpop.f32.mrb[0].mxu0
        %v1978 = vadd.f32 %v1925, %v1977
        %v1979 = vpop.f32.mrb[0].mxu0
        %v1980 = vadd.f32 %v1927, %v1979
        %1981 = vmatprep.mubr.bf16.mxu0 %v1724
        %1982 = vmatmul.mubr.bf16.gmra.mrb[0].mxu0 %v1723
        %v1983 = vpop.f32.mrb[0].mxu0
        %v1984 = vadd.f32 %v1931, %v1983
        %v1985 = vpop.f32.mrb[0].mxu0
        %v1986 = vadd.f32 %v1933, %v1985
        %v1987 = vpop.f32.mrb[0].mxu0
        %v1988 = vadd.f32 %v1935, %v1987
        %v1989 = vpop.f32.mrb[0].mxu0
        %v1990 = vadd.f32 %v1937, %v1989
        %1991 = vdwg.mxu0
        %1992 = vmatprep.subr.bf16.mxu0 %v1526
        %1993 = vmatpush1.bf16.msra.mxu0 %v1525
        %1994 = vmatprep.subr.bf16.mxu0 %v1538
        %1995 = vmatpush1.bf16.msra.mxu0 %v1537
        %1996 = vmatprep.subr.bf16.mxu0 %v1550
        %1997 = vmatpush1.bf16.msra.mxu0 %v1549
        %1998 = vmatprep.subr.bf16.mxu0 %v1562
        %1999 = vmatpush1.bf16.msra.mxu0 %v1561
        %2000 = vmatprep.subr.bf16.mxu0 %v1574
        %2001 = vmatpush1.bf16.msra.mxu0 %v1573
        %2002 = vmatprep.subr.bf16.mxu0 %v1586
        %2003 = vmatpush1.bf16.msra.mxu0 %v1585
        %2004 = vmatprep.subr.bf16.mxu0 %v1598
        %2005 = vmatpush1.bf16.msra.mxu0 %v1597
        %2006 = vmatprep.subr.bf16.mxu0 %v1610
        %2007 = vmatpush1.bf16.msra.mxu0 %v1609
        %2008 = vmatprep.subr.bf16.mxu0 %v1622
        %2009 = vmatpush1.bf16.msra.mxu0 %v1621
        %2010 = vmatprep.subr.bf16.mxu0 %v1634
        %2011 = vmatpush1.bf16.msra.mxu0 %v1633
        %2012 = vmatprep.subr.bf16.mxu0 %v1646
        %2013 = vmatpush1.bf16.msra.mxu0 %v1645
        %2014 = vmatprep.subr.bf16.mxu0 %v1658
        %2015 = vmatpush1.bf16.msra.mxu0 %v1657
        %2016 = vmatprep.subr.bf16.mxu0 %v1670
        %2017 = vmatpush1.bf16.msra.mxu0 %v1669
        %2018 = vmatprep.subr.bf16.mxu0 %v1682
        %2019 = vmatpush1.bf16.msra.mxu0 %v1681
        %2020 = vmatprep.subr.bf16.mxu0 %v1694
        %2021 = vmatpush1.bf16.msra.mxu0 %v1693
        %2022 = vmatprep.subr.bf16.mxu0 %v1706
        %2023 = vmatpush1.bf16.msra.mxu0 %v1705
        %2024 = vmatprep.mubr.bf16.mxu0 %v1720
        %2025 = vmatmul.mubr.bf16.gmra.mrb[0].mxu0 %v1719
        %v2026 = vpop.f32.mrb[0].mxu0
        %v2027 = vadd.f32 %v1974, %v2026
        %v2028 = vpop.f32.mrb[0].mxu0
        %v2029 = vadd.f32 %v1976, %v2028
        %v2030 = vpop.f32.mrb[0].mxu0
        %v2031 = vadd.f32 %v1978, %v2030
        %v2032 = vpop.f32.mrb[0].mxu0
        %v2033 = vadd.f32 %v1980, %v2032
        %2034 = vmatprep.mubr.bf16.mxu0 %v1726
        %2035 = vmatmul.mubr.bf16.gmra.mrb[0].mxu0 %v1725
        %v2036 = vpop.f32.mrb[0].mxu0
        %v2037 = vadd.f32 %v1984, %v2036
        %v2038 = vpop.f32.mrb[0].mxu0
        %v2039 = vadd.f32 %v1986, %v2038
        %v2040 = vpop.f32.mrb[0].mxu0
        %v2041 = vadd.f32 %v1988, %v2040
        %v2042 = vpop.f32.mrb[0].mxu0
        %v2043 = vadd.f32 %v1990, %v2042
        %2044 = vdwg.mxu0
        %2045 = vmatprep.subr.bf16.mxu0 %v1144
        %2046 = vmatpush1.bf16.msra.mxu0 %v1143
        %2047 = vmatprep.subr.bf16.mxu0 %v1156
        %2048 = vmatpush1.bf16.msra.mxu0 %v1155
        %2049 = vmatprep.subr.bf16.mxu0 %v1168
        %2050 = vmatpush1.bf16.msra.mxu0 %v1167
        %2051 = vmatprep.subr.bf16.mxu0 %v1180
        %2052 = vmatpush1.bf16.msra.mxu0 %v1179
        %2053 = vmatprep.subr.bf16.mxu0 %v1192
        %2054 = vmatpush1.bf16.msra.mxu0 %v1191
        %2055 = vmatprep.subr.bf16.mxu0 %v1204
        %2056 = vmatpush1.bf16.msra.mxu0 %v1203
        %2057 = vmatprep.subr.bf16.mxu0 %v1216
        %2058 = vmatpush1.bf16.msra.mxu0 %v1215
        %2059 = vmatprep.subr.bf16.mxu0 %v1228
        %2060 = vmatpush1.bf16.msra.mxu0 %v1227
        %2061 = vmatprep.subr.bf16.mxu0 %v1240
        %2062 = vmatpush1.bf16.msra.mxu0 %v1239
        %2063 = vmatprep.subr.bf16.mxu0 %v1252
        %2064 = vmatpush1.bf16.msra.mxu0 %v1251
        %2065 = vmatprep.subr.bf16.mxu0 %v1264
        %2066 = vmatpush1.bf16.msra.mxu0 %v1263
        %2067 = vmatprep.subr.bf16.mxu0 %v1276
        %2068 = vmatpush1.bf16.msra.mxu0 %v1275
        %2069 = vmatprep.subr.bf16.mxu0 %v1288
        %2070 = vmatpush1.bf16.msra.mxu0 %v1287
        %2071 = vmatprep.subr.bf16.mxu0 %v1300
        %2072 = vmatpush1.bf16.msra.mxu0 %v1299
        %2073 = vmatprep.subr.bf16.mxu0 %v1312
        %2074 = vmatpush1.bf16.msra.mxu0 %v1311
        %2075 = vmatprep.subr.bf16.mxu0 %v1324
        %2076 = vmatpush1.bf16.msra.mxu0 %v1323
        %2077 = vmatprep.mubr.bf16.mxu0 %v1716
        %2078 = vmatmul.mubr.bf16.gmra.mrb[0].mxu0 %v1715
        %v2079 = vpop.f32.mrb[0].mxu0
        %v2080 = vadd.f32 0.0, %v2079
        %v2081 = vpop.f32.mrb[0].mxu0
        %v2082 = vadd.f32 0.0, %v2081
        %v2083 = vpop.f32.mrb[0].mxu0
        %v2084 = vadd.f32 0.0, %v2083
        %v2085 = vpop.f32.mrb[0].mxu0
        %v2086 = vadd.f32 0.0, %v2085
        %2087 = vmatprep.mubr.bf16.mxu0 %v1722
        %2088 = vmatmul.mubr.bf16.gmra.mrb[0].mxu0 %v1721
        %v2089 = vpop.f32.mrb[0].mxu0
        %v2090 = vadd.f32 0.0, %v2089
        %v2091 = vpop.f32.mrb[0].mxu0
        %v2092 = vadd.f32 0.0, %v2091
        %v2093 = vpop.f32.mrb[0].mxu0
        %v2094 = vadd.f32 0.0, %v2093
        %v2095 = vpop.f32.mrb[0].mxu0
        %v2096 = vadd.f32 0.0, %v2095
        %2097 = vdwg.mxu0
        %2098 = vmatprep.subr.bf16.mxu0 %v1336
        %2099 = vmatpush1.bf16.msra.mxu0 %v1335
        %2100 = vmatprep.subr.bf16.mxu0 %v1348
        %2101 = vmatpush1.bf16.msra.mxu0 %v1347
        %2102 = vmatprep.subr.bf16.mxu0 %v1360
        %2103 = vmatpush1.bf16.msra.mxu0 %v1359
        %2104 = vmatprep.subr.bf16.mxu0 %v1372
        %2105 = vmatpush1.bf16.msra.mxu0 %v1371
        %2106 = vmatprep.subr.bf16.mxu0 %v1384
        %2107 = vmatpush1.bf16.msra.mxu0 %v1383
        %2108 = vmatprep.subr.bf16.mxu0 %v1396
        %2109 = vmatpush1.bf16.msra.mxu0 %v1395
        %2110 = vmatprep.subr.bf16.mxu0 %v1408
        %2111 = vmatpush1.bf16.msra.mxu0 %v1407
        %2112 = vmatprep.subr.bf16.mxu0 %v1420
        %2113 = vmatpush1.bf16.msra.mxu0 %v1419
        %2114 = vmatprep.subr.bf16.mxu0 %v1432
        %2115 = vmatpush1.bf16.msra.mxu0 %v1431
        %2116 = vmatprep.subr.bf16.mxu0 %v1444
        %2117 = vmatpush1.bf16.msra.mxu0 %v1443
        %2118 = vmatprep.subr.bf16.mxu0 %v1456
        %2119 = vmatpush1.bf16.msra.mxu0 %v1455
        %2120 = vmatprep.subr.bf16.mxu0 %v1468
        %2121 = vmatpush1.bf16.msra.mxu0 %v1467
        %2122 = vmatprep.subr.bf16.mxu0 %v1480
        %2123 = vmatpush1.bf16.msra.mxu0 %v1479
        %2124 = vmatprep.subr.bf16.mxu0 %v1492
        %2125 = vmatpush1.bf16.msra.mxu0 %v1491
        %2126 = vmatprep.subr.bf16.mxu0 %v1504
        %2127 = vmatpush1.bf16.msra.mxu0 %v1503
        %2128 = vmatprep.subr.bf16.mxu0 %v1516
        %2129 = vmatpush1.bf16.msra.mxu0 %v1515
        %2130 = vmatprep.mubr.bf16.mxu0 %v1718
        %2131 = vmatmul.mubr.bf16.gmra.mrb[0].mxu0 %v1717
        %v2132 = vpop.f32.mrb[0].mxu0
        %v2133 = vadd.f32 %v2080, %v2132
        %v2134 = vpop.f32.mrb[0].mxu0
        %v2135 = vadd.f32 %v2082, %v2134
        %v2136 = vpop.f32.mrb[0].mxu0
        %v2137 = vadd.f32 %v2084, %v2136
        %v2138 = vpop.f32.mrb[0].mxu0
        %v2139 = vadd.f32 %v2086, %v2138
        %2140 = vmatprep.mubr.bf16.mxu0 %v1724
        %2141 = vmatmul.mubr.bf16.gmra.mrb[0].mxu0 %v1723
        %v2142 = vpop.f32.mrb[0].mxu0
        %v2143 = vadd.f32 %v2090, %v2142
        %v2144 = vpop.f32.mrb[0].mxu0
        %v2145 = vadd.f32 %v2092, %v2144
        %v2146 = vpop.f32.mrb[0].mxu0
        %v2147 = vadd.f32 %v2094, %v2146
        %v2148 = vpop.f32.mrb[0].mxu0
        %v2149 = vadd.f32 %v2096, %v2148
        %2150 = vdwg.mxu0
        %2151 = vmatprep.subr.bf16.mxu0 %v1528
        %2152 = vmatpush1.bf16.msra.mxu0 %v1527
        %2153 = vmatprep.subr.bf16.mxu0 %v1540
        %2154 = vmatpush1.bf16.msra.mxu0 %v1539
        %2155 = vmatprep.subr.bf16.mxu0 %v1552
        %2156 = vmatpush1.bf16.msra.mxu0 %v1551
        %2157 = vmatprep.subr.bf16.mxu0 %v1564
        %2158 = vmatpush1.bf16.msra.mxu0 %v1563
        %2159 = vmatprep.subr.bf16.mxu0 %v1576
        %2160 = vmatpush1.bf16.msra.mxu0 %v1575
        %2161 = vmatprep.subr.bf16.mxu0 %v1588
        %2162 = vmatpush1.bf16.msra.mxu0 %v1587
        %2163 = vmatprep.subr.bf16.mxu0 %v1600
        %2164 = vmatpush1.bf16.msra.mxu0 %v1599
        %2165 = vmatprep.subr.bf16.mxu0 %v1612
        %2166 = vmatpush1.bf16.msra.mxu0 %v1611
        %2167 = vmatprep.subr.bf16.mxu0 %v1624
        %2168 = vmatpush1.bf16.msra.mxu0 %v1623
        %2169 = vmatprep.subr.bf16.mxu0 %v1636
        %2170 = vmatpush1.bf16.msra.mxu0 %v1635
        %2171 = vmatprep.subr.bf16.mxu0 %v1648
        %2172 = vmatpush1.bf16.msra.mxu0 %v1647
        %2173 = vmatprep.subr.bf16.mxu0 %v1660
        %2174 = vmatpush1.bf16.msra.mxu0 %v1659
        %2175 = vmatprep.subr.bf16.mxu0 %v1672
        %2176 = vmatpush1.bf16.msra.mxu0 %v1671
        %2177 = vmatprep.subr.bf16.mxu0 %v1684
        %2178 = vmatpush1.bf16.msra.mxu0 %v1683
        %2179 = vmatprep.subr.bf16.mxu0 %v1696
        %2180 = vmatpush1.bf16.msra.mxu0 %v1695
        %2181 = vmatprep.subr.bf16.mxu0 %v1708
        %2182 = vmatpush1.bf16.msra.mxu0 %v1707
        %2183 = vmatprep.mubr.bf16.mxu0 %v1720
        %2184 = vmatmul.mubr.bf16.gmra.mrb[0].mxu0 %v1719
        %v2185 = vpop.f32.mrb[0].mxu0
        %v2186 = vadd.f32 %v2133, %v2185
        %v2187 = vpop.f32.mrb[0].mxu0
        %v2188 = vadd.f32 %v2135, %v2187
        %v2189 = vpop.f32.mrb[0].mxu0
        %v2190 = vadd.f32 %v2137, %v2189
        %v2191 = vpop.f32.mrb[0].mxu0
        %v2192 = vadd.f32 %v2139, %v2191
        %2193 = vmatprep.mubr.bf16.mxu0 %v1726
        %2194 = vmatmul.mubr.bf16.gmra.mrb[0].mxu0 %v1725
        %v2195 = vpop.f32.mrb[0].mxu0
        %v2196 = vadd.f32 %v2143, %v2195
        %v2197 = vpop.f32.mrb[0].mxu0
        %v2198 = vadd.f32 %v2145, %v2197
        %v2199 = vpop.f32.mrb[0].mxu0
        %v2200 = vadd.f32 %v2147, %v2199
        %v2201 = vpop.f32.mrb[0].mxu0
        %v2202 = vadd.f32 %v2149, %v2201
        %2203 = vdwg.mxu0
        %2204 = vmatprep.subr.bf16.mxu0 %v1146
        %2205 = vmatpush1.bf16.msra.mxu0 %v1145
        %2206 = vmatprep.subr.bf16.mxu0 %v1158
        %2207 = vmatpush1.bf16.msra.mxu0 %v1157
        %2208 = vmatprep.subr.bf16.mxu0 %v1170
        %2209 = vmatpush1.bf16.msra.mxu0 %v1169
        %2210 = vmatprep.subr.bf16.mxu0 %v1182
        %2211 = vmatpush1.bf16.msra.mxu0 %v1181
        %2212 = vmatprep.subr.bf16.mxu0 %v1194
        %2213 = vmatpush1.bf16.msra.mxu0 %v1193
        %2214 = vmatprep.subr.bf16.mxu0 %v1206
        %2215 = vmatpush1.bf16.msra.mxu0 %v1205
        %2216 = vmatprep.subr.bf16.mxu0 %v1218
        %2217 = vmatpush1.bf16.msra.mxu0 %v1217
        %2218 = vmatprep.subr.bf16.mxu0 %v1230
        %2219 = vmatpush1.bf16.msra.mxu0 %v1229
        %2220 = vmatprep.subr.bf16.mxu0 %v1242
        %2221 = vmatpush1.bf16.msra.mxu0 %v1241
        %2222 = vmatprep.subr.bf16.mxu0 %v1254
        %2223 = vmatpush1.bf16.msra.mxu0 %v1253
        %2224 = vmatprep.subr.bf16.mxu0 %v1266
        %2225 = vmatpush1.bf16.msra.mxu0 %v1265
        %2226 = vmatprep.subr.bf16.mxu0 %v1278
        %2227 = vmatpush1.bf16.msra.mxu0 %v1277
        %2228 = vmatprep.subr.bf16.mxu0 %v1290
        %2229 = vmatpush1.bf16.msra.mxu0 %v1289
        %2230 = vmatprep.subr.bf16.mxu0 %v1302
        %2231 = vmatpush1.bf16.msra.mxu0 %v1301
        %2232 = vmatprep.subr.bf16.mxu0 %v1314
        %2233 = vmatpush1.bf16.msra.mxu0 %v1313
        %2234 = vmatprep.subr.bf16.mxu0 %v1326
        %2235 = vmatpush1.bf16.msra.mxu0 %v1325
        %2236 = vmatprep.mubr.bf16.mxu0 %v1716
        %2237 = vmatmul.mubr.bf16.gmra.mrb[0].mxu0 %v1715
        %v2238 = vpop.f32.mrb[0].mxu0
        %v2239 = vadd.f32 0.0, %v2238
        %v2240 = vpop.f32.mrb[0].mxu0
        %v2241 = vadd.f32 0.0, %v2240
        %v2242 = vpop.f32.mrb[0].mxu0
        %v2243 = vadd.f32 0.0, %v2242
        %v2244 = vpop.f32.mrb[0].mxu0
        %v2245 = vadd.f32 0.0, %v2244
        %2246 = vmatprep.mubr.bf16.mxu0 %v1722
        %2247 = vmatmul.mubr.bf16.gmra.mrb[0].mxu0 %v1721
        %v2248 = vpop.f32.mrb[0].mxu0
        %v2249 = vadd.f32 0.0, %v2248
        %v2250 = vpop.f32.mrb[0].mxu0
        %v2251 = vadd.f32 0.0, %v2250
        %v2252 = vpop.f32.mrb[0].mxu0
        %v2253 = vadd.f32 0.0, %v2252
        %v2254 = vpop.f32.mrb[0].mxu0
        %v2255 = vadd.f32 0.0, %v2254
        %2256 = vdwg.mxu0
        %2257 = vmatprep.subr.bf16.mxu0 %v1338
        %2258 = vmatpush1.bf16.msra.mxu0 %v1337
        %2259 = vmatprep.subr.bf16.mxu0 %v1350
        %2260 = vmatpush1.bf16.msra.mxu0 %v1349
        %2261 = vmatprep.subr.bf16.mxu0 %v1362
        %2262 = vmatpush1.bf16.msra.mxu0 %v1361
        %2263 = vmatprep.subr.bf16.mxu0 %v1374
        %2264 = vmatpush1.bf16.msra.mxu0 %v1373
        %2265 = vmatprep.subr.bf16.mxu0 %v1386
        %2266 = vmatpush1.bf16.msra.mxu0 %v1385
        %2267 = vmatprep.subr.bf16.mxu0 %v1398
        %2268 = vmatpush1.bf16.msra.mxu0 %v1397
        %2269 = vmatprep.subr.bf16.mxu0 %v1410
        %2270 = vmatpush1.bf16.msra.mxu0 %v1409
        %2271 = vmatprep.subr.bf16.mxu0 %v1422
        %2272 = vmatpush1.bf16.msra.mxu0 %v1421
        %2273 = vmatprep.subr.bf16.mxu0 %v1434
        %2274 = vmatpush1.bf16.msra.mxu0 %v1433
        %2275 = vmatprep.subr.bf16.mxu0 %v1446
        %2276 = vmatpush1.bf16.msra.mxu0 %v1445
        %2277 = vmatprep.subr.bf16.mxu0 %v1458
        %2278 = vmatpush1.bf16.msra.mxu0 %v1457
        %2279 = vmatprep.subr.bf16.mxu0 %v1470
        %2280 = vmatpush1.bf16.msra.mxu0 %v1469
        %2281 = vmatprep.subr.bf16.mxu0 %v1482
        %2282 = vmatpush1.bf16.msra.mxu0 %v1481
        %2283 = vmatprep.subr.bf16.mxu0 %v1494
        %2284 = vmatpush1.bf16.msra.mxu0 %v1493
        %2285 = vmatprep.subr.bf16.mxu0 %v1506
        %2286 = vmatpush1.bf16.msra.mxu0 %v1505
        %2287 = vmatprep.subr.bf16.mxu0 %v1518
        %2288 = vmatpush1.bf16.msra.mxu0 %v1517
        %2289 = vmatprep.mubr.bf16.mxu0 %v1718
        %2290 = vmatmul.mubr.bf16.gmra.mrb[0].mxu0 %v1717
        %v2291 = vpop.f32.mrb[0].mxu0
        %v2292 = vadd.f32 %v2239, %v2291
        %v2293 = vpop.f32.mrb[0].mxu0
        %v2294 = vadd.f32 %v2241, %v2293
        %v2295 = vpop.f32.mrb[0].mxu0
        %v2296 = vadd.f32 %v2243, %v2295
        %v2297 = vpop.f32.mrb[0].mxu0
        %v2298 = vadd.f32 %v2245, %v2297
        %2299 = vmatprep.mubr.bf16.mxu0 %v1724
        %2300 = vmatmul.mubr.bf16.gmra.mrb[0].mxu0 %v1723
        %v2301 = vpop.f32.mrb[0].mxu0
        %v2302 = vadd.f32 %v2249, %v2301
        %v2303 = vpop.f32.mrb[0].mxu0
        %v2304 = vadd.f32 %v2251, %v2303
        %v2305 = vpop.f32.mrb[0].mxu0
        %v2306 = vadd.f32 %v2253, %v2305
        %v2307 = vpop.f32.mrb[0].mxu0
        %v2308 = vadd.f32 %v2255, %v2307
        %2309 = vdwg.mxu0
        %2310 = vmatprep.subr.bf16.mxu0 %v1530
        %2311 = vmatpush1.bf16.msra.mxu0 %v1529
        %2312 = vmatprep.subr.bf16.mxu0 %v1542
        %2313 = vmatpush1.bf16.msra.mxu0 %v1541
        %2314 = vmatprep.subr.bf16.mxu0 %v1554
        %2315 = vmatpush1.bf16.msra.mxu0 %v1553
        %2316 = vmatprep.subr.bf16.mxu0 %v1566
        %2317 = vmatpush1.bf16.msra.mxu0 %v1565
        %2318 = vmatprep.subr.bf16.mxu0 %v1578
        %2319 = vmatpush1.bf16.msra.mxu0 %v1577
        %2320 = vmatprep.subr.bf16.mxu0 %v1590
        %2321 = vmatpush1.bf16.msra.mxu0 %v1589
        %2322 = vmatprep.subr.bf16.mxu0 %v1602
        %2323 = vmatpush1.bf16.msra.mxu0 %v1601
        %2324 = vmatprep.subr.bf16.mxu0 %v1614
        %2325 = vmatpush1.bf16.msra.mxu0 %v1613
        %2326 = vmatprep.subr.bf16.mxu0 %v1626
        %2327 = vmatpush1.bf16.msra.mxu0 %v1625
        %2328 = vmatprep.subr.bf16.mxu0 %v1638
        %2329 = vmatpush1.bf16.msra.mxu0 %v1637
        %2330 = vmatprep.subr.bf16.mxu0 %v1650
        %2331 = vmatpush1.bf16.msra.mxu0 %v1649
        %2332 = vmatprep.subr.bf16.mxu0 %v1662
        %2333 = vmatpush1.bf16.msra.mxu0 %v1661
        %2334 = vmatprep.subr.bf16.mxu0 %v1674
        %2335 = vmatpush1.bf16.msra.mxu0 %v1673
        %2336 = vmatprep.subr.bf16.mxu0 %v1686
        %2337 = vmatpush1.bf16.msra.mxu0 %v1685
        %2338 = vmatprep.subr.bf16.mxu0 %v1698
        %2339 = vmatpush1.bf16.msra.mxu0 %v1697
        %2340 = vmatprep.subr.bf16.mxu0 %v1710
        %2341 = vmatpush1.bf16.msra.mxu0 %v1709
        %2342 = vmatprep.mubr.bf16.mxu0 %v1720
        %2343 = vmatmul.mubr.bf16.gmra.mrb[0].mxu0 %v1719
        %v2344 = vpop.f32.mrb[0].mxu0
        %v2345 = vadd.f32 %v2292, %v2344
        %v2346 = vpop.f32.mrb[0].mxu0
        %v2347 = vadd.f32 %v2294, %v2346
        %v2348 = vpop.f32.mrb[0].mxu0
        %v2349 = vadd.f32 %v2296, %v2348
        %v2350 = vpop.f32.mrb[0].mxu0
        %v2351 = vadd.f32 %v2298, %v2350
        %2352 = vmatprep.mubr.bf16.mxu0 %v1726
        %2353 = vmatmul.mubr.bf16.gmra.mrb[0].mxu0 %v1725
        %v2354 = vpop.f32.mrb[0].mxu0
        %v2355 = vadd.f32 %v2302, %v2354
        %v2356 = vpop.f32.mrb[0].mxu0
        %v2357 = vadd.f32 %v2304, %v2356
        %v2358 = vpop.f32.mrb[0].mxu0
        %v2359 = vadd.f32 %v2306, %v2358
        %v2360 = vpop.f32.mrb[0].mxu0
        %v2361 = vadd.f32 %v2308, %v2360
        %2362 = vdwg.mxu0
        %2363 = vmatprep.subr.bf16.mxu0 %v1148
        %2364 = vmatpush1.bf16.msra.mxu0 %v1147
        %2365 = vmatprep.subr.bf16.mxu0 %v1160
        %2366 = vmatpush1.bf16.msra.mxu0 %v1159
        %2367 = vmatprep.subr.bf16.mxu0 %v1172
        %2368 = vmatpush1.bf16.msra.mxu0 %v1171
        %2369 = vmatprep.subr.bf16.mxu0 %v1184
        %2370 = vmatpush1.bf16.msra.mxu0 %v1183
        %2371 = vmatprep.subr.bf16.mxu0 %v1196
        %2372 = vmatpush1.bf16.msra.mxu0 %v1195
        %2373 = vmatprep.subr.bf16.mxu0 %v1208
        %2374 = vmatpush1.bf16.msra.mxu0 %v1207
        %2375 = vmatprep.subr.bf16.mxu0 %v1220
        %2376 = vmatpush1.bf16.msra.mxu0 %v1219
        %2377 = vmatprep.subr.bf16.mxu0 %v1232
        %2378 = vmatpush1.bf16.msra.mxu0 %v1231
        %2379 = vmatprep.subr.bf16.mxu0 %v1244
        %2380 = vmatpush1.bf16.msra.mxu0 %v1243
        %2381 = vmatprep.subr.bf16.mxu0 %v1256
        %2382 = vmatpush1.bf16.msra.mxu0 %v1255
        %2383 = vmatprep.subr.bf16.mxu0 %v1268
        %2384 = vmatpush1.bf16.msra.mxu0 %v1267
        %2385 = vmatprep.subr.bf16.mxu0 %v1280
        %2386 = vmatpush1.bf16.msra.mxu0 %v1279
        %2387 = vmatprep.subr.bf16.mxu0 %v1292
        %2388 = vmatpush1.bf16.msra.mxu0 %v1291
        %2389 = vmatprep.subr.bf16.mxu0 %v1304
        %2390 = vmatpush1.bf16.msra.mxu0 %v1303
        %2391 = vmatprep.subr.bf16.mxu0 %v1316
        %2392 = vmatpush1.bf16.msra.mxu0 %v1315
        %2393 = vmatprep.subr.bf16.mxu0 %v1328
        %2394 = vmatpush1.bf16.msra.mxu0 %v1327
        %2395 = vmatprep.mubr.bf16.mxu0 %v1716
        %2396 = vmatmul.mubr.bf16.gmra.mrb[0].mxu0 %v1715
        %v2397 = vpop.f32.mrb[0].mxu0
        %v2398 = vadd.f32 0.0, %v2397
        %v2399 = vpop.f32.mrb[0].mxu0
        %v2400 = vadd.f32 0.0, %v2399
        %v2401 = vpop.f32.mrb[0].mxu0
        %v2402 = vadd.f32 0.0, %v2401
        %v2403 = vpop.f32.mrb[0].mxu0
        %v2404 = vadd.f32 0.0, %v2403
        %2405 = vmatprep.mubr.bf16.mxu0 %v1722
        %2406 = vmatmul.mubr.bf16.gmra.mrb[0].mxu0 %v1721
        %v2407 = vpop.f32.mrb[0].mxu0
        %v2408 = vadd.f32 0.0, %v2407
        %v2409 = vpop.f32.mrb[0].mxu0
        %v2410 = vadd.f32 0.0, %v2409
        %v2411 = vpop.f32.mrb[0].mxu0
        %v2412 = vadd.f32 0.0, %v2411
        %v2413 = vpop.f32.mrb[0].mxu0
        %v2414 = vadd.f32 0.0, %v2413
        %2415 = vdwg.mxu0
        %2416 = vmatprep.subr.bf16.mxu0 %v1340
        %2417 = vmatpush1.bf16.msra.mxu0 %v1339
        %2418 = vmatprep.subr.bf16.mxu0 %v1352
        %2419 = vmatpush1.bf16.msra.mxu0 %v1351
        %2420 = vmatprep.subr.bf16.mxu0 %v1364
        %2421 = vmatpush1.bf16.msra.mxu0 %v1363
        %2422 = vmatprep.subr.bf16.mxu0 %v1376
        %2423 = vmatpush1.bf16.msra.mxu0 %v1375
        %2424 = vmatprep.subr.bf16.mxu0 %v1388
        %2425 = vmatpush1.bf16.msra.mxu0 %v1387
        %2426 = vmatprep.subr.bf16.mxu0 %v1400
        %2427 = vmatpush1.bf16.msra.mxu0 %v1399
        %2428 = vmatprep.subr.bf16.mxu0 %v1412
        %2429 = vmatpush1.bf16.msra.mxu0 %v1411
        %2430 = vmatprep.subr.bf16.mxu0 %v1424
        %2431 = vmatpush1.bf16.msra.mxu0 %v1423
        %2432 = vmatprep.subr.bf16.mxu0 %v1436
        %2433 = vmatpush1.bf16.msra.mxu0 %v1435
        %2434 = vmatprep.subr.bf16.mxu0 %v1448
        %2435 = vmatpush1.bf16.msra.mxu0 %v1447
        %2436 = vmatprep.subr.bf16.mxu0 %v1460
        %2437 = vmatpush1.bf16.msra.mxu0 %v1459
        %2438 = vmatprep.subr.bf16.mxu0 %v1472
        %2439 = vmatpush1.bf16.msra.mxu0 %v1471
        %2440 = vmatprep.subr.bf16.mxu0 %v1484
        %2441 = vmatpush1.bf16.msra.mxu0 %v1483
        %2442 = vmatprep.subr.bf16.mxu0 %v1496
        %2443 = vmatpush1.bf16.msra.mxu0 %v1495
        %2444 = vmatprep.subr.bf16.mxu0 %v1508
        %2445 = vmatpush1.bf16.msra.mxu0 %v1507
        %2446 = vmatprep.subr.bf16.mxu0 %v1520
        %2447 = vmatpush1.bf16.msra.mxu0 %v1519
        %2448 = vmatprep.mubr.bf16.mxu0 %v1718
        %2449 = vmatmul.mubr.bf16.gmra.mrb[0].mxu0 %v1717
        %v2450 = vpop.f32.mrb[0].mxu0
        %v2451 = vadd.f32 %v2398, %v2450
        %v2452 = vpop.f32.mrb[0].mxu0
        %v2453 = vadd.f32 %v2400, %v2452
        %v2454 = vpop.f32.mrb[0].mxu0
        %v2455 = vadd.f32 %v2402, %v2454
        %v2456 = vpop.f32.mrb[0].mxu0
        %v2457 = vadd.f32 %v2404, %v2456
        %2458 = vmatprep.mubr.bf16.mxu0 %v1724
        %2459 = vmatmul.mubr.bf16.gmra.mrb[0].mxu0 %v1723
        %v2460 = vpop.f32.mrb[0].mxu0
        %v2461 = vadd.f32 %v2408, %v2460
        %v2462 = vpop.f32.mrb[0].mxu0
        %v2463 = vadd.f32 %v2410, %v2462
        %v2464 = vpop.f32.mrb[0].mxu0
        %v2465 = vadd.f32 %v2412, %v2464
        %v2466 = vpop.f32.mrb[0].mxu0
        %v2467 = vadd.f32 %v2414, %v2466
        %2468 = vdwg.mxu0
        %2469 = vmatprep.subr.bf16.mxu0 %v1532
        %2470 = vmatpush1.bf16.msra.mxu0 %v1531
        %2471 = vmatprep.subr.bf16.mxu0 %v1544
        %2472 = vmatpush1.bf16.msra.mxu0 %v1543
        %2473 = vmatprep.subr.bf16.mxu0 %v1556
        %2474 = vmatpush1.bf16.msra.mxu0 %v1555
        %2475 = vmatprep.subr.bf16.mxu0 %v1568
        %2476 = vmatpush1.bf16.msra.mxu0 %v1567
        %2477 = vmatprep.subr.bf16.mxu0 %v1580
        %2478 = vmatpush1.bf16.msra.mxu0 %v1579
        %2479 = vmatprep.subr.bf16.mxu0 %v1592
        %2480 = vmatpush1.bf16.msra.mxu0 %v1591
        %2481 = vmatprep.subr.bf16.mxu0 %v1604
        %2482 = vmatpush1.bf16.msra.mxu0 %v1603
        %2483 = vmatprep.subr.bf16.mxu0 %v1616
        %2484 = vmatpush1.bf16.msra.mxu0 %v1615
        %2485 = vmatprep.subr.bf16.mxu0 %v1628
        %2486 = vmatpush1.bf16.msra.mxu0 %v1627
        %2487 = vmatprep.subr.bf16.mxu0 %v1640
        %2488 = vmatpush1.bf16.msra.mxu0 %v1639
        %2489 = vmatprep.subr.bf16.mxu0 %v1652
        %2490 = vmatpush1.bf16.msra.mxu0 %v1651
        %2491 = vmatprep.subr.bf16.mxu0 %v1664
        %2492 = vmatpush1.bf16.msra.mxu0 %v1663
        %2493 = vmatprep.subr.bf16.mxu0 %v1676
        %2494 = vmatpush1.bf16.msra.mxu0 %v1675
        %2495 = vmatprep.subr.bf16.mxu0 %v1688
        %2496 = vmatpush1.bf16.msra.mxu0 %v1687
        %2497 = vmatprep.subr.bf16.mxu0 %v1700
        %2498 = vmatpush1.bf16.msra.mxu0 %v1699
        %2499 = vmatprep.subr.bf16.mxu0 %v1712
        %2500 = vmatpush1.bf16.msra.mxu0 %v1711
        %2501 = vmatprep.mubr.bf16.mxu0 %v1720
        %2502 = vmatmul.mubr.bf16.gmra.mrb[0].mxu0 %v1719
        %v2503 = vpop.f32.mrb[0].mxu0
        %v2504 = vadd.f32 %v2451, %v2503
        %v2505 = vpop.f32.mrb[0].mxu0
        %v2506 = vadd.f32 %v2453, %v2505
        %v2507 = vpop.f32.mrb[0].mxu0
        %v2508 = vadd.f32 %v2455, %v2507
        %v2509 = vpop.f32.mrb[0].mxu0
        %v2510 = vadd.f32 %v2457, %v2509
        %2511 = vmatprep.mubr.bf16.mxu0 %v1726
        %2512 = vmatmul.mubr.bf16.gmra.mrb[0].mxu0 %v1725
        %v2513 = vpop.f32.mrb[0].mxu0
        %v2514 = vadd.f32 %v2461, %v2513
        %v2515 = vpop.f32.mrb[0].mxu0
        %v2516 = vadd.f32 %v2463, %v2515
        %v2517 = vpop.f32.mrb[0].mxu0
        %v2518 = vadd.f32 %v2465, %v2517
        %v2519 = vpop.f32.mrb[0].mxu0
        %v2520 = vadd.f32 %v2467, %v2519
        %2521 = vdwg.mxu0
        %2522 = vmatprep.subr.bf16.mxu0 %v1150
        %2523 = vmatpush1.bf16.msra.mxu0 %v1149
        %2524 = vmatprep.subr.bf16.mxu0 %v1162
        %2525 = vmatpush1.bf16.msra.mxu0 %v1161
        %2526 = vmatprep.subr.bf16.mxu0 %v1174
        %2527 = vmatpush1.bf16.msra.mxu0 %v1173
        %2528 = vmatprep.subr.bf16.mxu0 %v1186
        %2529 = vmatpush1.bf16.msra.mxu0 %v1185
        %2530 = vmatprep.subr.bf16.mxu0 %v1198
        %2531 = vmatpush1.bf16.msra.mxu0 %v1197
        %2532 = vmatprep.subr.bf16.mxu0 %v1210
        %2533 = vmatpush1.bf16.msra.mxu0 %v1209
        %2534 = vmatprep.subr.bf16.mxu0 %v1222
        %2535 = vmatpush1.bf16.msra.mxu0 %v1221
        %2536 = vmatprep.subr.bf16.mxu0 %v1234
        %2537 = vmatpush1.bf16.msra.mxu0 %v1233
        %2538 = vmatprep.subr.bf16.mxu0 %v1246
        %2539 = vmatpush1.bf16.msra.mxu0 %v1245
        %2540 = vmatprep.subr.bf16.mxu0 %v1258
        %2541 = vmatpush1.bf16.msra.mxu0 %v1257
        %2542 = vmatprep.subr.bf16.mxu0 %v1270
        %2543 = vmatpush1.bf16.msra.mxu0 %v1269
        %2544 = vmatprep.subr.bf16.mxu0 %v1282
        %2545 = vmatpush1.bf16.msra.mxu0 %v1281
        %2546 = vmatprep.subr.bf16.mxu0 %v1294
        %2547 = vmatpush1.bf16.msra.mxu0 %v1293
        %2548 = vmatprep.subr.bf16.mxu0 %v1306
        %2549 = vmatpush1.bf16.msra.mxu0 %v1305
        %2550 = vmatprep.subr.bf16.mxu0 %v1318
        %2551 = vmatpush1.bf16.msra.mxu0 %v1317
        %2552 = vmatprep.subr.bf16.mxu0 %v1330
        %2553 = vmatpush1.bf16.msra.mxu0 %v1329
        %2554 = vmatprep.mubr.bf16.mxu0 %v1716
        %2555 = vmatmul.mubr.bf16.gmra.mrb[0].mxu0 %v1715
        %v2556 = vpop.f32.mrb[0].mxu0
        %v2557 = vadd.f32 0.0, %v2556
        %v2558 = vpop.f32.mrb[0].mxu0
        %v2559 = vadd.f32 0.0, %v2558
        %v2560 = vpop.f32.mrb[0].mxu0
        %v2561 = vadd.f32 0.0, %v2560
        %v2562 = vpop.f32.mrb[0].mxu0
        %v2563 = vadd.f32 0.0, %v2562
        %2564 = vmatprep.mubr.bf16.mxu0 %v1722
        %2565 = vmatmul.mubr.bf16.gmra.mrb[0].mxu0 %v1721
        %v2566 = vpop.f32.mrb[0].mxu0
        %v2567 = vadd.f32 0.0, %v2566
        %v2568 = vpop.f32.mrb[0].mxu0
        %v2569 = vadd.f32 0.0, %v2568
        %v2570 = vpop.f32.mrb[0].mxu0
        %v2571 = vadd.f32 0.0, %v2570
        %v2572 = vpop.f32.mrb[0].mxu0
        %v2573 = vadd.f32 0.0, %v2572
        %2574 = vdwg.mxu0
        %2575 = vmatprep.subr.bf16.mxu0 %v1342
        %2576 = vmatpush1.bf16.msra.mxu0 %v1341
        %2577 = vmatprep.subr.bf16.mxu0 %v1354
        %2578 = vmatpush1.bf16.msra.mxu0 %v1353
        %2579 = vmatprep.subr.bf16.mxu0 %v1366
        %2580 = vmatpush1.bf16.msra.mxu0 %v1365
        %2581 = vmatprep.subr.bf16.mxu0 %v1378
        %2582 = vmatpush1.bf16.msra.mxu0 %v1377
        %2583 = vmatprep.subr.bf16.mxu0 %v1390
        %2584 = vmatpush1.bf16.msra.mxu0 %v1389
        %2585 = vmatprep.subr.bf16.mxu0 %v1402
        %2586 = vmatpush1.bf16.msra.mxu0 %v1401
        %2587 = vmatprep.subr.bf16.mxu0 %v1414
        %2588 = vmatpush1.bf16.msra.mxu0 %v1413
        %2589 = vmatprep.subr.bf16.mxu0 %v1426
        %2590 = vmatpush1.bf16.msra.mxu0 %v1425
        %2591 = vmatprep.subr.bf16.mxu0 %v1438
        %2592 = vmatpush1.bf16.msra.mxu0 %v1437
        %2593 = vmatprep.subr.bf16.mxu0 %v1450
        %2594 = vmatpush1.bf16.msra.mxu0 %v1449
        %2595 = vmatprep.subr.bf16.mxu0 %v1462
        %2596 = vmatpush1.bf16.msra.mxu0 %v1461
        %2597 = vmatprep.subr.bf16.mxu0 %v1474
        %2598 = vmatpush1.bf16.msra.mxu0 %v1473
        %2599 = vmatprep.subr.bf16.mxu0 %v1486
        %2600 = vmatpush1.bf16.msra.mxu0 %v1485
        %2601 = vmatprep.subr.bf16.mxu0 %v1498
        %2602 = vmatpush1.bf16.msra.mxu0 %v1497
        %2603 = vmatprep.subr.bf16.mxu0 %v1510
        %2604 = vmatpush1.bf16.msra.mxu0 %v1509
        %2605 = vmatprep.subr.bf16.mxu0 %v1522
        %2606 = vmatpush1.bf16.msra.mxu0 %v1521
        %2607 = vmatprep.mubr.bf16.mxu0 %v1718
        %2608 = vmatmul.mubr.bf16.gmra.mrb[0].mxu0 %v1717
        %v2609 = vpop.f32.mrb[0].mxu0
        %v2610 = vadd.f32 %v2557, %v2609
        %v2611 = vpop.f32.mrb[0].mxu0
        %v2612 = vadd.f32 %v2559, %v2611
        %v2613 = vpop.f32.mrb[0].mxu0
        %v2614 = vadd.f32 %v2561, %v2613
        %v2615 = vpop.f32.mrb[0].mxu0
        %v2616 = vadd.f32 %v2563, %v2615
        %2617 = vmatprep.mubr.bf16.mxu0 %v1724
        %2618 = vmatmul.mubr.bf16.gmra.mrb[0].mxu0 %v1723
        %v2619 = vpop.f32.mrb[0].mxu0
        %v2620 = vadd.f32 %v2567, %v2619
        %v2621 = vpop.f32.mrb[0].mxu0
        %v2622 = vadd.f32 %v2569, %v2621
        %v2623 = vpop.f32.mrb[0].mxu0
        %v2624 = vadd.f32 %v2571, %v2623
        %v2625 = vpop.f32.mrb[0].mxu0
        %v2626 = vadd.f32 %v2573, %v2625
        %2627 = vdwg.mxu0
        %2628 = vmatprep.subr.bf16.mxu0 %v1534
        %2629 = vmatpush1.bf16.msra.mxu0 %v1533
        %2630 = vmatprep.subr.bf16.mxu0 %v1546
        %2631 = vmatpush1.bf16.msra.mxu0 %v1545
        %2632 = vmatprep.subr.bf16.mxu0 %v1558
        %2633 = vmatpush1.bf16.msra.mxu0 %v1557
        %2634 = vmatprep.subr.bf16.mxu0 %v1570
        %2635 = vmatpush1.bf16.msra.mxu0 %v1569
        %2636 = vmatprep.subr.bf16.mxu0 %v1582
        %2637 = vmatpush1.bf16.msra.mxu0 %v1581
        %2638 = vmatprep.subr.bf16.mxu0 %v1594
        %2639 = vmatpush1.bf16.msra.mxu0 %v1593
        %2640 = vmatprep.subr.bf16.mxu0 %v1606
        %2641 = vmatpush1.bf16.msra.mxu0 %v1605
        %2642 = vmatprep.subr.bf16.mxu0 %v1618
        %2643 = vmatpush1.bf16.msra.mxu0 %v1617
        %2644 = vmatprep.subr.bf16.mxu0 %v1630
        %2645 = vmatpush1.bf16.msra.mxu0 %v1629
        %2646 = vmatprep.subr.bf16.mxu0 %v1642
        %2647 = vmatpush1.bf16.msra.mxu0 %v1641
        %2648 = vmatprep.subr.bf16.mxu0 %v1654
        %2649 = vmatpush1.bf16.msra.mxu0 %v1653
        %2650 = vmatprep.subr.bf16.mxu0 %v1666
        %2651 = vmatpush1.bf16.msra.mxu0 %v1665
        %2652 = vmatprep.subr.bf16.mxu0 %v1678
        %2653 = vmatpush1.bf16.msra.mxu0 %v1677
        %2654 = vmatprep.subr.bf16.mxu0 %v1690
        %2655 = vmatpush1.bf16.msra.mxu0 %v1689
        %2656 = vmatprep.subr.bf16.mxu0 %v1702
        %2657 = vmatpush1.bf16.msra.mxu0 %v1701
        %2658 = vmatprep.subr.bf16.mxu0 %v1714
        %2659 = vmatpush1.bf16.msra.mxu0 %v1713
        %2660 = vmatprep.mubr.bf16.mxu0 %v1720
        %2661 = vmatmul.mubr.bf16.gmra.mrb[0].mxu0 %v1719
        %v2662 = vpop.f32.mrb[0].mxu0
        %v2663 = vadd.f32 %v2610, %v2662
        %v2664 = vpop.f32.mrb[0].mxu0
        %v2665 = vadd.f32 %v2612, %v2664
        %v2666 = vpop.f32.mrb[0].mxu0
        %v2667 = vadd.f32 %v2614, %v2666
        %v2668 = vpop.f32.mrb[0].mxu0
        %v2669 = vadd.f32 %v2616, %v2668
        %2670 = vmatprep.mubr.bf16.mxu0 %v1726
        %2671 = vmatmul.mubr.bf16.gmra.mrb[0].mxu0 %v1725
        %v2672 = vpop.f32.mrb[0].mxu0
        %v2673 = vadd.f32 %v2620, %v2672
        %v2674 = vpop.f32.mrb[0].mxu0
        %v2675 = vadd.f32 %v2622, %v2674
        %v2676 = vpop.f32.mrb[0].mxu0
        %v2677 = vadd.f32 %v2624, %v2676
        %v2678 = vpop.f32.mrb[0].mxu0
        %v2679 = vadd.f32 %v2626, %v2678
        %2680 = vdwg.mxu0
        %v2681 = vld [vmem:[%s436] sm:$0xff]
        %v2682 = vld [vmem:[%s436 + $0x8] sm:$0xf]
        %v2685 = vlaneseq
        %v2686 = vshrl.u32 %v2685, 7
        %v2687 = vsub.s32 0, %v2686
        %v2688 = vrot.slane %v2681, %v2687
        %v2689 = vlaneseq
        %v2690 = vshrl.u32 %v2689, 7
        %v2691 = vsub.s32 1, %v2690
        %v2692 = vrot.slane %v2681, %v2691
        %v2693 = vlaneseq
        %v2694 = vshrl.u32 %v2693, 7
        %v2695 = vsub.s32 2, %v2694
        %v2696 = vrot.slane %v2681, %v2695
        %v2697 = vlaneseq
        %v2698 = vshrl.u32 %v2697, 7
        %v2699 = vsub.s32 3, %v2698
        %v2700 = vrot.slane %v2681, %v2699
        %v2701 = vlaneseq
        %v2702 = vshrl.u32 %v2701, 7
        %v2703 = vsub.s32 4, %v2702
        %v2704 = vrot.slane %v2681, %v2703
        %v2705 = vlaneseq
        %v2706 = vshrl.u32 %v2705, 7
        %v2707 = vsub.s32 5, %v2706
        %v2708 = vrot.slane %v2681, %v2707
        %v2709 = vlaneseq
        %v2710 = vshrl.u32 %v2709, 7
        %v2711 = vsub.s32 6, %v2710
        %v2712 = vrot.slane %v2681, %v2711
        %v2713 = vlaneseq
        %v2714 = vshrl.u32 %v2713, 7
        %v2715 = vsub.s32 7, %v2714
        %v2716 = vrot.slane %v2681, %v2715
        %v2717 = vlaneseq
        %v2718 = vshrl.u32 %v2717, 7
        %v2719 = vsub.s32 0, %v2718
        %v2720 = vrot.slane %v2682, %v2719
        %v2721 = vlaneseq
        %v2722 = vshrl.u32 %v2721, 7
        %v2723 = vsub.s32 1, %v2722
        %v2724 = vrot.slane %v2682, %v2723
        %v2725 = vlaneseq
        %v2726 = vshrl.u32 %v2725, 7
        %v2727 = vsub.s32 2, %v2726
        %v2728 = vrot.slane %v2682, %v2727
        %v2729 = vlaneseq
        %v2730 = vshrl.u32 %v2729, 7
        %v2731 = vsub.s32 3, %v2730
        %v2732 = vrot.slane %v2682, %v2731
        %v2745 = vmul.f32 %v1868, %v2688
        %v2746 = vmul.f32 %v1870, %v2692
        %v2747 = vmul.f32 %v2027, %v2696
        %v2748 = vmul.f32 %v2029, %v2700
        %v2749 = vmul.f32 %v2186, %v2704
        %v2750 = vmul.f32 %v2188, %v2708
        %v2751 = vmul.f32 %v2345, %v2712
        %v2752 = vmul.f32 %v2347, %v2716
        %v2753 = vmul.f32 %v2504, %v2720
        %v2754 = vmul.f32 %v2506, %v2724
        %v2755 = vmul.f32 %v2663, %v2728
        %v2756 = vmul.f32 %v2665, %v2732
        %v2757 = vmul.f32 %v1872, %v2688
        %v2758 = vmul.f32 %v1874, %v2692
        %v2759 = vmul.f32 %v2031, %v2696
        %v2760 = vmul.f32 %v2033, %v2700
        %v2761 = vmul.f32 %v2190, %v2704
        %v2762 = vmul.f32 %v2192, %v2708
        %v2763 = vmul.f32 %v2349, %v2712
        %v2764 = vmul.f32 %v2351, %v2716
        %v2765 = vmul.f32 %v2508, %v2720
        %v2766 = vmul.f32 %v2510, %v2724
        %v2767 = vmul.f32 %v2667, %v2728
        %v2768 = vmul.f32 %v2669, %v2732
        %v2769 = vmul.f32 %v1878, %v2688
        %v2770 = vmul.f32 %v1880, %v2692
        %v2771 = vmul.f32 %v2037, %v2696
        %v2772 = vmul.f32 %v2039, %v2700
        %v2773 = vmul.f32 %v2196, %v2704
        %v2774 = vmul.f32 %v2198, %v2708
        %v2775 = vmul.f32 %v2355, %v2712
        %v2776 = vmul.f32 %v2357, %v2716
        %v2777 = vmul.f32 %v2514, %v2720
        %v2778 = vmul.f32 %v2516, %v2724
        %v2779 = vmul.f32 %v2673, %v2728
        %v2780 = vmul.f32 %v2675, %v2732
        %v2781 = vmul.f32 %v1882, %v2688
        %v2782 = vmul.f32 %v1884, %v2692
        %v2783 = vmul.f32 %v2041, %v2696
        %v2784 = vmul.f32 %v2043, %v2700
        %v2785 = vmul.f32 %v2200, %v2704
        %v2786 = vmul.f32 %v2202, %v2708
        %v2787 = vmul.f32 %v2359, %v2712
        %v2788 = vmul.f32 %v2361, %v2716
        %v2789 = vmul.f32 %v2518, %v2720
        %v2790 = vmul.f32 %v2520, %v2724
        %v2791 = vmul.f32 %v2677, %v2728
        %v2792 = vmul.f32 %v2679, %v2732
        %v2793 = vld [vmem:[%s445] sm:$0xff]
        %v2794 = vld [vmem:[%s445 + $0x8] sm:$0xf]
        %v2797 = vlaneseq
        %v2798 = vshrl.u32 %v2797, 7
        %v2799 = vsub.s32 0, %v2798
        %v2800 = vrot.slane %v2793, %v2799
        %v2801 = vlaneseq
        %v2802 = vshrl.u32 %v2801, 7
        %v2803 = vsub.s32 1, %v2802
        %v2804 = vrot.slane %v2793, %v2803
        %v2805 = vlaneseq
        %v2806 = vshrl.u32 %v2805, 7
        %v2807 = vsub.s32 2, %v2806
        %v2808 = vrot.slane %v2793, %v2807
        %v2809 = vlaneseq
        %v2810 = vshrl.u32 %v2809, 7
        %v2811 = vsub.s32 3, %v2810
        %v2812 = vrot.slane %v2793, %v2811
        %v2813 = vlaneseq
        %v2814 = vshrl.u32 %v2813, 7
        %v2815 = vsub.s32 4, %v2814
        %v2816 = vrot.slane %v2793, %v2815
        %v2817 = vlaneseq
        %v2818 = vshrl.u32 %v2817, 7
        %v2819 = vsub.s32 5, %v2818
        %v2820 = vrot.slane %v2793, %v2819
        %v2821 = vlaneseq
        %v2822 = vshrl.u32 %v2821, 7
        %v2823 = vsub.s32 6, %v2822
        %v2824 = vrot.slane %v2793, %v2823
        %v2825 = vlaneseq
        %v2826 = vshrl.u32 %v2825, 7
        %v2827 = vsub.s32 7, %v2826
        %v2828 = vrot.slane %v2793, %v2827
        %v2829 = vlaneseq
        %v2830 = vshrl.u32 %v2829, 7
        %v2831 = vsub.s32 0, %v2830
        %v2832 = vrot.slane %v2794, %v2831
        %v2833 = vlaneseq
        %v2834 = vshrl.u32 %v2833, 7
        %v2835 = vsub.s32 1, %v2834
        %v2836 = vrot.slane %v2794, %v2835
        %v2837 = vlaneseq
        %v2838 = vshrl.u32 %v2837, 7
        %v2839 = vsub.s32 2, %v2838
        %v2840 = vrot.slane %v2794, %v2839
        %v2841 = vlaneseq
        %v2842 = vshrl.u32 %v2841, 7
        %v2843 = vsub.s32 3, %v2842
        %v2844 = vrot.slane %v2794, %v2843
        %v2857 = vadd.f32 %v2745, %v2800
        %v2858 = vadd.f32 %v2746, %v2804
        %v2859 = vadd.f32 %v2747, %v2808
        %v2860 = vadd.f32 %v2748, %v2812
        %v2861 = vadd.f32 %v2749, %v2816
        %v2862 = vadd.f32 %v2750, %v2820
        %v2863 = vadd.f32 %v2751, %v2824
        %v2864 = vadd.f32 %v2752, %v2828
        %v2865 = vadd.f32 %v2753, %v2832
        %v2866 = vadd.f32 %v2754, %v2836
        %v2867 = vadd.f32 %v2755, %v2840
        %v2868 = vadd.f32 %v2756, %v2844
        %v2869 = vadd.f32 %v2757, %v2800
        %v2870 = vadd.f32 %v2758, %v2804
        %v2871 = vadd.f32 %v2759, %v2808
        %v2872 = vadd.f32 %v2760, %v2812
        %v2873 = vadd.f32 %v2761, %v2816
        %v2874 = vadd.f32 %v2762, %v2820
        %v2875 = vadd.f32 %v2763, %v2824
        %v2876 = vadd.f32 %v2764, %v2828
        %v2877 = vadd.f32 %v2765, %v2832
        %v2878 = vadd.f32 %v2766, %v2836
        %v2879 = vadd.f32 %v2767, %v2840
        %v2880 = vadd.f32 %v2768, %v2844
        %v2881 = vadd.f32 %v2769, %v2800
        %v2882 = vadd.f32 %v2770, %v2804
        %v2883 = vadd.f32 %v2771, %v2808
        %v2884 = vadd.f32 %v2772, %v2812
        %v2885 = vadd.f32 %v2773, %v2816
        %v2886 = vadd.f32 %v2774, %v2820
        %v2887 = vadd.f32 %v2775, %v2824
        %v2888 = vadd.f32 %v2776, %v2828
        %v2889 = vadd.f32 %v2777, %v2832
        %v2890 = vadd.f32 %v2778, %v2836
        %v2891 = vadd.f32 %v2779, %v2840
        %v2892 = vadd.f32 %v2780, %v2844
        %v2893 = vadd.f32 %v2781, %v2800
        %v2894 = vadd.f32 %v2782, %v2804
        %v2895 = vadd.f32 %v2783, %v2808
        %v2896 = vadd.f32 %v2784, %v2812
        %v2897 = vadd.f32 %v2785, %v2816
        %v2898 = vadd.f32 %v2786, %v2820
        %v2899 = vadd.f32 %v2787, %v2824
        %v2900 = vadd.f32 %v2788, %v2828
        %v2901 = vadd.f32 %v2789, %v2832
        %v2902 = vadd.f32 %v2790, %v2836
        %v2903 = vadd.f32 %v2791, %v2840
        %v2904 = vadd.f32 %v2792, %v2844
        %v2905 = vmul.f32 %v2857, 1.702
        %v2906 = vmul.f32 %v2858, 1.702
        %v2907 = vmul.f32 %v2859, 1.702
        %v2908 = vmul.f32 %v2860, 1.702
        %v2909 = vmul.f32 %v2861, 1.702
        %v2910 = vmul.f32 %v2862, 1.702
        %v2911 = vmul.f32 %v2863, 1.702
        %v2912 = vmul.f32 %v2864, 1.702
        %v2913 = vmul.f32 %v2865, 1.702
        %v2914 = vmul.f32 %v2866, 1.702
        %v2915 = vmul.f32 %v2867, 1.702
        %v2916 = vmul.f32 %v2868, 1.702
        %v2917 = vmul.f32 %v2869, 1.702
        %v2918 = vmul.f32 %v2870, 1.702
        %v2919 = vmul.f32 %v2871, 1.702
        %v2920 = vmul.f32 %v2872, 1.702
        %v2921 = vmul.f32 %v2873, 1.702
        %v2922 = vmul.f32 %v2874, 1.702
        %v2923 = vmul.f32 %v2875, 1.702
        %v2924 = vmul.f32 %v2876, 1.702
        %v2925 = vmul.f32 %v2877, 1.702
        %v2926 = vmul.f32 %v2878, 1.702
        %v2927 = vmul.f32 %v2879, 1.702
        %v2928 = vmul.f32 %v2880, 1.702
        %v2929 = vmul.f32 %v2881, 1.702
        %v2930 = vmul.f32 %v2882, 1.702
        %v2931 = vmul.f32 %v2883, 1.702
        %v2932 = vmul.f32 %v2884, 1.702
        %v2933 = vmul.f32 %v2885, 1.702
        %v2934 = vmul.f32 %v2886, 1.702
        %v2935 = vmul.f32 %v2887, 1.702
        %v2936 = vmul.f32 %v2888, 1.702
        %v2937 = vmul.f32 %v2889, 1.702
        %v2938 = vmul.f32 %v2890, 1.702
        %v2939 = vmul.f32 %v2891, 1.702
        %v2940 = vmul.f32 %v2892, 1.702
        %v2941 = vmul.f32 %v2893, 1.702
        %v2942 = vmul.f32 %v2894, 1.702
        %v2943 = vmul.f32 %v2895, 1.702
        %v2944 = vmul.f32 %v2896, 1.702
        %v2945 = vmul.f32 %v2897, 1.702
        %v2946 = vmul.f32 %v2898, 1.702
        %v2947 = vmul.f32 %v2899, 1.702
        %v2948 = vmul.f32 %v2900, 1.702
        %v2949 = vmul.f32 %v2901, 1.702
        %v2950 = vmul.f32 %v2902, 1.702
        %v2951 = vmul.f32 %v2903, 1.702
        %v2952 = vmul.f32 %v2904, 1.702
        %v2953 = vxor.u32 %v2905, 2147483648
        %v2954 = vxor.u32 %v2906, 2147483648
        %v2955 = vxor.u32 %v2907, 2147483648
        %v2956 = vxor.u32 %v2908, 2147483648
        %v2957 = vxor.u32 %v2909, 2147483648
        %v2958 = vxor.u32 %v2910, 2147483648
        %v2959 = vxor.u32 %v2911, 2147483648
        %v2960 = vxor.u32 %v2912, 2147483648
        %v2961 = vxor.u32 %v2913, 2147483648
        %v2962 = vxor.u32 %v2914, 2147483648
        %v2963 = vxor.u32 %v2915, 2147483648
        %v2964 = vxor.u32 %v2916, 2147483648
        %v2965 = vxor.u32 %v2917, 2147483648
        %v2966 = vxor.u32 %v2918, 2147483648
        %v2967 = vxor.u32 %v2919, 2147483648
        %v2968 = vxor.u32 %v2920, 2147483648
        %v2969 = vxor.u32 %v2921, 2147483648
        %v2970 = vxor.u32 %v2922, 2147483648
        %v2971 = vxor.u32 %v2923, 2147483648
        %v2972 = vxor.u32 %v2924, 2147483648
        %v2973 = vxor.u32 %v2925, 2147483648
        %v2974 = vxor.u32 %v2926, 2147483648
        %v2975 = vxor.u32 %v2927, 2147483648
        %v2976 = vxor.u32 %v2928, 2147483648
        %v2977 = vxor.u32 %v2929, 2147483648
        %v2978 = vxor.u32 %v2930, 2147483648
        %v2979 = vxor.u32 %v2931, 2147483648
        %v2980 = vxor.u32 %v2932, 2147483648
        %v2981 = vxor.u32 %v2933, 2147483648
        %v2982 = vxor.u32 %v2934, 2147483648
        %v2983 = vxor.u32 %v2935, 2147483648
        %v2984 = vxor.u32 %v2936, 2147483648
        %v2985 = vxor.u32 %v2937, 2147483648
        %v2986 = vxor.u32 %v2938, 2147483648
        %v2987 = vxor.u32 %v2939, 2147483648
        %v2988 = vxor.u32 %v2940, 2147483648
        %v2989 = vxor.u32 %v2941, 2147483648
        %v2990 = vxor.u32 %v2942, 2147483648
        %v2991 = vxor.u32 %v2943, 2147483648
        %v2992 = vxor.u32 %v2944, 2147483648
        %v2993 = vxor.u32 %v2945, 2147483648
        %v2994 = vxor.u32 %v2946, 2147483648
        %v2995 = vxor.u32 %v2947, 2147483648
        %v2996 = vxor.u32 %v2948, 2147483648
        %v2997 = vxor.u32 %v2949, 2147483648
        %v2998 = vxor.u32 %v2950, 2147483648
        %v2999 = vxor.u32 %v2951, 2147483648
        %v3000 = vxor.u32 %v2952, 2147483648
        %v3001 = vmul.f32 %v2953, 1.442695
        %v3002 = vpow.pop %v3001
        %v3003 = vmul.f32 %v2954, 1.442695
        %v3004 = vpow.pop %v3003
        %v3005 = vmul.f32 %v2955, 1.442695
        %v3006 = vpow.pop %v3005
        %v3007 = vmul.f32 %v2956, 1.442695
        %v3008 = vpow.pop %v3007
        %v3009 = vmul.f32 %v2957, 1.442695
        %v3010 = vpow.pop %v3009
        %v3011 = vmul.f32 %v2958, 1.442695
        %v3012 = vpow.pop %v3011
        %v3013 = vmul.f32 %v2959, 1.442695
        %v3014 = vpow.pop %v3013
        %v3015 = vmul.f32 %v2960, 1.442695
        %v3016 = vpow.pop %v3015
        %v3017 = vmul.f32 %v2961, 1.442695
        %v3018 = vpow.pop %v3017
        %v3019 = vmul.f32 %v2962, 1.442695
        %v3020 = vpow.pop %v3019
        %v3021 = vmul.f32 %v2963, 1.442695
        %v3022 = vpow.pop %v3021
        %v3023 = vmul.f32 %v2964, 1.442695
        %v3024 = vpow.pop %v3023
        %v3025 = vmul.f32 %v2965, 1.442695
        %v3026 = vpow.pop %v3025
        %v3027 = vmul.f32 %v2966, 1.442695
        %v3028 = vpow.pop %v3027
        %v3029 = vmul.f32 %v2967, 1.442695
        %v3030 = vpow.pop %v3029
        %v3031 = vmul.f32 %v2968, 1.442695
        %v3032 = vpow.pop %v3031
        %v3033 = vmul.f32 %v2969, 1.442695
        %v3034 = vpow.pop %v3033
        %v3035 = vmul.f32 %v2970, 1.442695
        %v3036 = vpow.pop %v3035
        %v3037 = vmul.f32 %v2971, 1.442695
        %v3038 = vpow.pop %v3037
        %v3039 = vmul.f32 %v2972, 1.442695
        %v3040 = vpow.pop %v3039
        %v3041 = vmul.f32 %v2973, 1.442695
        %v3042 = vpow.pop %v3041
        %v3043 = vmul.f32 %v2974, 1.442695
        %v3044 = vpow.pop %v3043
        %v3045 = vmul.f32 %v2975, 1.442695
        %v3046 = vpow.pop %v3045
        %v3047 = vmul.f32 %v2976, 1.442695
        %v3048 = vpow.pop %v3047
        %v3049 = vmul.f32 %v2977, 1.442695
        %v3050 = vpow.pop %v3049
        %v3051 = vmul.f32 %v2978, 1.442695
        %v3052 = vpow.pop %v3051
        %v3053 = vmul.f32 %v2979, 1.442695
        %v3054 = vpow.pop %v3053
        %v3055 = vmul.f32 %v2980, 1.442695
        %v3056 = vpow.pop %v3055
        %v3057 = vmul.f32 %v2981, 1.442695
        %v3058 = vpow.pop %v3057
        %v3059 = vmul.f32 %v2982, 1.442695
        %v3060 = vpow.pop %v3059
        %v3061 = vmul.f32 %v2983, 1.442695
        %v3062 = vpow.pop %v3061
        %v3063 = vmul.f32 %v2984, 1.442695
        %v3064 = vpow.pop %v3063
        %v3065 = vmul.f32 %v2985, 1.442695
        %v3066 = vpow.pop %v3065
        %v3067 = vmul.f32 %v2986, 1.442695
        %v3068 = vpow.pop %v3067
        %v3069 = vmul.f32 %v2987, 1.442695
        %v3070 = vpow.pop %v3069
        %v3071 = vmul.f32 %v2988, 1.442695
        %v3072 = vpow.pop %v3071
        %v3073 = vmul.f32 %v2989, 1.442695
        %v3074 = vpow.pop %v3073
        %v3075 = vmul.f32 %v2990, 1.442695
        %v3076 = vpow.pop %v3075
        %v3077 = vmul.f32 %v2991, 1.442695
        %v3078 = vpow.pop %v3077
        %v3079 = vmul.f32 %v2992, 1.442695
        %v3080 = vpow.pop %v3079
        %v3081 = vmul.f32 %v2993, 1.442695
        %v3082 = vpow.pop %v3081
        %v3083 = vmul.f32 %v2994, 1.442695
        %v3084 = vpow.pop %v3083
        %v3085 = vmul.f32 %v2995, 1.442695
        %v3086 = vpow.pop %v3085
        %v3087 = vmul.f32 %v2996, 1.442695
        %v3088 = vpow.pop %v3087
        %v3089 = vmul.f32 %v2997, 1.442695
        %v3090 = vpow.pop %v3089
        %v3091 = vmul.f32 %v2998, 1.442695
        %v3092 = vpow.pop %v3091
        %v3093 = vmul.f32 %v2999, 1.442695
        %v3094 = vpow.pop %v3093
        %v3095 = vmul.f32 %v3000, 1.442695
        %v3096 = vpow.pop %v3095
        %v3097 = vadd.f32 %v3002, 1.0
        %v3098 = vadd.f32 %v3004, 1.0
        %v3099 = vadd.f32 %v3006, 1.0
        %v3100 = vadd.f32 %v3008, 1.0
        %v3101 = vadd.f32 %v3010, 1.0
        %v3102 = vadd.f32 %v3012, 1.0
        %v3103 = vadd.f32 %v3014, 1.0
        %v3104 = vadd.f32 %v3016, 1.0
        %v3105 = vadd.f32 %v3018, 1.0
        %v3106 = vadd.f32 %v3020, 1.0
        %v3107 = vadd.f32 %v3022, 1.0
        %v3108 = vadd.f32 %v3024, 1.0
        %v3109 = vadd.f32 %v3026, 1.0
        %v3110 = vadd.f32 %v3028, 1.0
        %v3111 = vadd.f32 %v3030, 1.0
        %v3112 = vadd.f32 %v3032, 1.0
        %v3113 = vadd.f32 %v3034, 1.0
        %v3114 = vadd.f32 %v3036, 1.0
        %v3115 = vadd.f32 %v3038, 1.0
        %v3116 = vadd.f32 %v3040, 1.0
        %v3117 = vadd.f32 %v3042, 1.0
        %v3118 = vadd.f32 %v3044, 1.0
        %v3119 = vadd.f32 %v3046, 1.0
        %v3120 = vadd.f32 %v3048, 1.0
        %v3121 = vadd.f32 %v3050, 1.0
        %v3122 = vadd.f32 %v3052, 1.0
        %v3123 = vadd.f32 %v3054, 1.0
        %v3124 = vadd.f32 %v3056, 1.0
        %v3125 = vadd.f32 %v3058, 1.0
        %v3126 = vadd.f32 %v3060, 1.0
        %v3127 = vadd.f32 %v3062, 1.0
        %v3128 = vadd.f32 %v3064, 1.0
        %v3129 = vadd.f32 %v3066, 1.0
        %v3130 = vadd.f32 %v3068, 1.0
        %v3131 = vadd.f32 %v3070, 1.0
        %v3132 = vadd.f32 %v3072, 1.0
        %v3133 = vadd.f32 %v3074, 1.0
        %v3134 = vadd.f32 %v3076, 1.0
        %v3135 = vadd.f32 %v3078, 1.0
        %v3136 = vadd.f32 %v3080, 1.0
        %v3137 = vadd.f32 %v3082, 1.0
        %v3138 = vadd.f32 %v3084, 1.0
        %v3139 = vadd.f32 %v3086, 1.0
        %v3140 = vadd.f32 %v3088, 1.0
        %v3141 = vadd.f32 %v3090, 1.0
        %v3142 = vadd.f32 %v3092, 1.0
        %v3143 = vadd.f32 %v3094, 1.0
        %v3144 = vadd.f32 %v3096, 1.0
        %v3145 = vrcp.pop %v3097
        %v3146 = vmul.f32 1.0, %v3145
        %v3147 = vrcp.pop %v3098
        %v3148 = vmul.f32 1.0, %v3147
        %v3149 = vrcp.pop %v3099
        %v3150 = vmul.f32 1.0, %v3149
        %v3151 = vrcp.pop %v3100
        %v3152 = vmul.f32 1.0, %v3151
        %v3153 = vrcp.pop %v3101
        %v3154 = vmul.f32 1.0, %v3153
        %v3155 = vrcp.pop %v3102
        %v3156 = vmul.f32 1.0, %v3155
        %v3157 = vrcp.pop %v3103
        %v3158 = vmul.f32 1.0, %v3157
        %v3159 = vrcp.pop %v3104
        %v3160 = vmul.f32 1.0, %v3159
        %v3161 = vrcp.pop %v3105
        %v3162 = vmul.f32 1.0, %v3161
        %v3163 = vrcp.pop %v3106
        %v3164 = vmul.f32 1.0, %v3163
        %v3165 = vrcp.pop %v3107
        %v3166 = vmul.f32 1.0, %v3165
        %v3167 = vrcp.pop %v3108
        %v3168 = vmul.f32 1.0, %v3167
        %v3169 = vrcp.pop %v3109
        %v3170 = vmul.f32 1.0, %v3169
        %v3171 = vrcp.pop %v3110
        %v3172 = vmul.f32 1.0, %v3171
        %v3173 = vrcp.pop %v3111
        %v3174 = vmul.f32 1.0, %v3173
        %v3175 = vrcp.pop %v3112
        %v3176 = vmul.f32 1.0, %v3175
        %v3177 = vrcp.pop %v3113
        %v3178 = vmul.f32 1.0, %v3177
        %v3179 = vrcp.pop %v3114
        %v3180 = vmul.f32 1.0, %v3179
        %v3181 = vrcp.pop %v3115
        %v3182 = vmul.f32 1.0, %v3181
        %v3183 = vrcp.pop %v3116
        %v3184 = vmul.f32 1.0, %v3183
        %v3185 = vrcp.pop %v3117
        %v3186 = vmul.f32 1.0, %v3185
        %v3187 = vrcp.pop %v3118
        %v3188 = vmul.f32 1.0, %v3187
        %v3189 = vrcp.pop %v3119
        %v3190 = vmul.f32 1.0, %v3189
        %v3191 = vrcp.pop %v3120
        %v3192 = vmul.f32 1.0, %v3191
        %v3193 = vrcp.pop %v3121
        %v3194 = vmul.f32 1.0, %v3193
        %v3195 = vrcp.pop %v3122
        %v3196 = vmul.f32 1.0, %v3195
        %v3197 = vrcp.pop %v3123
        %v3198 = vmul.f32 1.0, %v3197
        %v3199 = vrcp.pop %v3124
        %v3200 = vmul.f32 1.0, %v3199
        %v3201 = vrcp.pop %v3125
        %v3202 = vmul.f32 1.0, %v3201
        %v3203 = vrcp.pop %v3126
        %v3204 = vmul.f32 1.0, %v3203
        %v3205 = vrcp.pop %v3127
        %v3206 = vmul.f32 1.0, %v3205
        %v3207 = vrcp.pop %v3128
        %v3208 = vmul.f32 1.0, %v3207
        %v3209 = vrcp.pop %v3129
        %v3210 = vmul.f32 1.0, %v3209
        %v3211 = vrcp.pop %v3130
        %v3212 = vmul.f32 1.0, %v3211
        %v3213 = vrcp.pop %v3131
        %v3214 = vmul.f32 1.0, %v3213
        %v3215 = vrcp.pop %v3132
        %v3216 = vmul.f32 1.0, %v3215
        %v3217 = vrcp.pop %v3133
        %v3218 = vmul.f32 1.0, %v3217
        %v3219 = vrcp.pop %v3134
        %v3220 = vmul.f32 1.0, %v3219
        %v3221 = vrcp.pop %v3135
        %v3222 = vmul.f32 1.0, %v3221
        %v3223 = vrcp.pop %v3136
        %v3224 = vmul.f32 1.0, %v3223
        %v3225 = vrcp.pop %v3137
        %v3226 = vmul.f32 1.0, %v3225
        %v3227 = vrcp.pop %v3138
        %v3228 = vmul.f32 1.0, %v3227
        %v3229 = vrcp.pop %v3139
        %v3230 = vmul.f32 1.0, %v3229
        %v3231 = vrcp.pop %v3140
        %v3232 = vmul.f32 1.0, %v3231
        %v3233 = vrcp.pop %v3141
        %v3234 = vmul.f32 1.0, %v3233
        %v3235 = vrcp.pop %v3142
        %v3236 = vmul.f32 1.0, %v3235
        %v3237 = vrcp.pop %v3143
        %v3238 = vmul.f32 1.0, %v3237
        %v3239 = vrcp.pop %v3144
        %v3240 = vmul.f32 1.0, %v3239
        %v3241 = vmul.f32 %v2857, %v3146
        %v3242 = vmul.f32 %v2858, %v3148
        %v3243 = vmul.f32 %v2859, %v3150
        %v3244 = vmul.f32 %v2860, %v3152
        %v3245 = vmul.f32 %v2861, %v3154
        %v3246 = vmul.f32 %v2862, %v3156
        %v3247 = vmul.f32 %v2863, %v3158
        %v3248 = vmul.f32 %v2864, %v3160
        %v3249 = vmul.f32 %v2865, %v3162
        %v3250 = vmul.f32 %v2866, %v3164
        %v3251 = vmul.f32 %v2867, %v3166
        %v3252 = vmul.f32 %v2868, %v3168
        %v3253 = vmul.f32 %v2869, %v3170
        %v3254 = vmul.f32 %v2870, %v3172
        %v3255 = vmul.f32 %v2871, %v3174
        %v3256 = vmul.f32 %v2872, %v3176
        %v3257 = vmul.f32 %v2873, %v3178
        %v3258 = vmul.f32 %v2874, %v3180
        %v3259 = vmul.f32 %v2875, %v3182
        %v3260 = vmul.f32 %v2876, %v3184
        %v3261 = vmul.f32 %v2877, %v3186
        %v3262 = vmul.f32 %v2878, %v3188
        %v3263 = vmul.f32 %v2879, %v3190
        %v3264 = vmul.f32 %v2880, %v3192
        %v3265 = vmul.f32 %v2881, %v3194
        %v3266 = vmul.f32 %v2882, %v3196
        %v3267 = vmul.f32 %v2883, %v3198
        %v3268 = vmul.f32 %v2884, %v3200
        %v3269 = vmul.f32 %v2885, %v3202
        %v3270 = vmul.f32 %v2886, %v3204
        %v3271 = vmul.f32 %v2887, %v3206
        %v3272 = vmul.f32 %v2888, %v3208
        %v3273 = vmul.f32 %v2889, %v3210
        %v3274 = vmul.f32 %v2890, %v3212
        %v3275 = vmul.f32 %v2891, %v3214
        %v3276 = vmul.f32 %v2892, %v3216
        %v3277 = vmul.f32 %v2893, %v3218
        %v3278 = vmul.f32 %v2894, %v3220
        %v3279 = vmul.f32 %v2895, %v3222
        %v3280 = vmul.f32 %v2896, %v3224
        %v3281 = vmul.f32 %v2897, %v3226
        %v3282 = vmul.f32 %v2898, %v3228
        %v3283 = vmul.f32 %v2899, %v3230
        %v3284 = vmul.f32 %v2900, %v3232
        %v3285 = vmul.f32 %v2901, %v3234
        %v3286 = vmul.f32 %v2902, %v3236
        %v3287 = vmul.f32 %v2903, %v3238
        %v3288 = vmul.f32 %v2904, %v3240
        %v3289 = vld [vmem:[%s454] sm:$0xff]
        %v3290 = vld [vmem:[%s454 + $0x8] sm:$0xff]
        %v3291 = vld [vmem:[%s454 + $0x10] sm:$0xff]
        %v3292 = vld [vmem:[%s454 + $0x18] sm:$0xff]
        %v3293 = vld [vmem:[%s454 + $0x20] sm:$0xff]
        %v3294 = vld [vmem:[%s454 + $0x28] sm:$0xff]
        %v3295 = vld [vmem:[%s454 + $0x30] sm:$0xff]
        %v3296 = vld [vmem:[%s454 + $0x38] sm:$0xff]
        %v3297 = vld [vmem:[%s454 + $0x40] sm:$0xff]
        %v3298 = vld [vmem:[%s454 + $0x48] sm:$0xff]
        %v3299 = vld [vmem:[%s454 + $0x50] sm:$0xff]
        %v3300 = vld [vmem:[%s454 + $0x58] sm:$0xff]
        %v3301 = vld [vmem:[%s454 + $0x60] sm:$0xff]
        %v3302 = vld [vmem:[%s454 + $0x68] sm:$0xff]
        %v3303 = vld [vmem:[%s454 + $0x70] sm:$0xff]
        %v3304 = vld [vmem:[%s454 + $0x78] sm:$0xff]
        %v3305 = vld [vmem:[%s454 + $0x80] sm:$0xff]
        %v3306 = vld [vmem:[%s454 + $0x88] sm:$0xff]
        %v3307 = vld [vmem:[%s454 + $0x90] sm:$0xff]
        %v3308 = vld [vmem:[%s454 + $0x98] sm:$0xff]
        %v3309 = vld [vmem:[%s454 + $0xa0] sm:$0xff]
        %v3310 = vld [vmem:[%s454 + $0xa8] sm:$0xff]
        %v3311 = vld [vmem:[%s454 + $0xb0] sm:$0xff]
        %v3312 = vld [vmem:[%s454 + $0xb8] sm:$0xff]
        %v3313 = vld [vmem:[%s454 + $0xc0] sm:$0xff]
        %v3314 = vld [vmem:[%s454 + $0xc8] sm:$0xff]
        %v3315 = vld [vmem:[%s454 + $0xd0] sm:$0xff]
        %v3316 = vld [vmem:[%s454 + $0xd8] sm:$0xff]
        %v3317 = vld [vmem:[%s454 + $0xe0] sm:$0xff]
        %v3318 = vld [vmem:[%s454 + $0xe8] sm:$0xff]
        %v3319 = vld [vmem:[%s454 + $0xf0] sm:$0xff]
        %v3320 = vld [vmem:[%s454 + $0xf8] sm:$0xff]
        %v3321 = vld [vmem:[%s454 + $0x100] sm:$0xff]
        %v3322 = vld [vmem:[%s454 + $0x108] sm:$0xff]
        %v3323 = vld [vmem:[%s454 + $0x110] sm:$0xff]
        %v3324 = vld [vmem:[%s454 + $0x118] sm:$0xff]
        %v3325 = vld [vmem:[%s454 + $0x120] sm:$0xff]
        %v3326 = vld [vmem:[%s454 + $0x128] sm:$0xff]
        %v3327 = vld [vmem:[%s454 + $0x130] sm:$0xff]
        %v3328 = vld [vmem:[%s454 + $0x138] sm:$0xff]
        %v3329 = vld [vmem:[%s454 + $0x140] sm:$0xff]
        %v3330 = vld [vmem:[%s454 + $0x148] sm:$0xff]
        %v3331 = vld [vmem:[%s454 + $0x150] sm:$0xff]
        %v3332 = vld [vmem:[%s454 + $0x158] sm:$0xff]
        %v3333 = vld [vmem:[%s454 + $0x160] sm:$0xff]
        %v3334 = vld [vmem:[%s454 + $0x168] sm:$0xff]
        %v3335 = vld [vmem:[%s454 + $0x170] sm:$0xff]
        %v3336 = vld [vmem:[%s454 + $0x178] sm:$0xff]
        %v3337 = vld [vmem:[%s454 + $0x180] sm:$0xff]
        %v3338 = vld [vmem:[%s454 + $0x188] sm:$0xff]
        %v3339 = vld [vmem:[%s454 + $0x190] sm:$0xff]
        %v3340 = vld [vmem:[%s454 + $0x198] sm:$0xff]
        %v3341 = vld [vmem:[%s454 + $0x1a0] sm:$0xff]
        %v3342 = vld [vmem:[%s454 + $0x1a8] sm:$0xff]
        %v3343 = vld [vmem:[%s454 + $0x1b0] sm:$0xff]
        %v3344 = vld [vmem:[%s454 + $0x1b8] sm:$0xff]
        %v3345 = vld [vmem:[%s454 + $0x1c0] sm:$0xff]
        %v3346 = vld [vmem:[%s454 + $0x1c8] sm:$0xff]
        %v3347 = vld [vmem:[%s454 + $0x1d0] sm:$0xff]
        %v3348 = vld [vmem:[%s454 + $0x1d8] sm:$0xff]
        %v3349 = vld [vmem:[%s454 + $0x1e0] sm:$0xff]
        %v3350 = vld [vmem:[%s454 + $0x1e8] sm:$0xff]
        %v3351 = vld [vmem:[%s454 + $0x1f0] sm:$0xff]
        %v3352 = vld [vmem:[%s454 + $0x1f8] sm:$0xff]
        %v3353 = vld [vmem:[%s454 + $0x200] sm:$0xff]
        %v3354 = vld [vmem:[%s454 + $0x208] sm:$0xff]
        %v3355 = vld [vmem:[%s454 + $0x210] sm:$0xff]
        %v3356 = vld [vmem:[%s454 + $0x218] sm:$0xff]
        %v3357 = vld [vmem:[%s454 + $0x220] sm:$0xff]
        %v3358 = vld [vmem:[%s454 + $0x228] sm:$0xff]
        %v3359 = vld [vmem:[%s454 + $0x230] sm:$0xff]
        %v3360 = vld [vmem:[%s454 + $0x238] sm:$0xff]
        %v3361 = vld [vmem:[%s454 + $0x240] sm:$0xff]
        %v3362 = vld [vmem:[%s454 + $0x248] sm:$0xff]
        %v3363 = vld [vmem:[%s454 + $0x250] sm:$0xff]
        %v3364 = vld [vmem:[%s454 + $0x258] sm:$0xff]
        %v3365 = vld [vmem:[%s454 + $0x260] sm:$0xff]
        %v3366 = vld [vmem:[%s454 + $0x268] sm:$0xff]
        %v3367 = vld [vmem:[%s454 + $0x270] sm:$0xff]
        %v3368 = vld [vmem:[%s454 + $0x278] sm:$0xff]
        %v3369 = vld [vmem:[%s454 + $0x280] sm:$0xff]
        %v3370 = vld [vmem:[%s454 + $0x288] sm:$0xff]
        %v3371 = vld [vmem:[%s454 + $0x290] sm:$0xff]
        %v3372 = vld [vmem:[%s454 + $0x298] sm:$0xff]
        %v3373 = vld [vmem:[%s454 + $0x2a0] sm:$0xff]
        %v3374 = vld [vmem:[%s454 + $0x2a8] sm:$0xff]
        %v3375 = vld [vmem:[%s454 + $0x2b0] sm:$0xff]
        %v3376 = vld [vmem:[%s454 + $0x2b8] sm:$0xff]
        %v3377 = vld [vmem:[%s454 + $0x2c0] sm:$0xff]
        %v3378 = vld [vmem:[%s454 + $0x2c8] sm:$0xff]
        %v3379 = vld [vmem:[%s454 + $0x2d0] sm:$0xff]
        %v3380 = vld [vmem:[%s454 + $0x2d8] sm:$0xff]
        %v3381 = vld [vmem:[%s454 + $0x2e0] sm:$0xff]
        %v3382 = vld [vmem:[%s454 + $0x2e8] sm:$0xff]
        %v3383 = vld [vmem:[%s454 + $0x2f0] sm:$0xff]
        %v3384 = vld [vmem:[%s454 + $0x2f8] sm:$0xff]
        %v3385 = vld [vmem:[%s454 + $0x300] sm:$0xff]
        %v3386 = vld [vmem:[%s454 + $0x308] sm:$0xff]
        %v3387 = vld [vmem:[%s454 + $0x310] sm:$0xff]
        %v3388 = vld [vmem:[%s454 + $0x318] sm:$0xff]
        %v3389 = vld [vmem:[%s454 + $0x320] sm:$0xff]
        %v3390 = vld [vmem:[%s454 + $0x328] sm:$0xff]
        %v3391 = vld [vmem:[%s454 + $0x330] sm:$0xff]
        %v3392 = vld [vmem:[%s454 + $0x338] sm:$0xff]
        %v3393 = vld [vmem:[%s454 + $0x340] sm:$0xff]
        %v3394 = vld [vmem:[%s454 + $0x348] sm:$0xff]
        %v3395 = vld [vmem:[%s454 + $0x350] sm:$0xff]
        %v3396 = vld [vmem:[%s454 + $0x358] sm:$0xff]
        %v3397 = vld [vmem:[%s454 + $0x360] sm:$0xff]
        %v3398 = vld [vmem:[%s454 + $0x368] sm:$0xff]
        %v3399 = vld [vmem:[%s454 + $0x370] sm:$0xff]
        %v3400 = vld [vmem:[%s454 + $0x378] sm:$0xff]
        %v3401 = vld [vmem:[%s454 + $0x380] sm:$0xff]
        %v3402 = vld [vmem:[%s454 + $0x388] sm:$0xff]
        %v3403 = vld [vmem:[%s454 + $0x390] sm:$0xff]
        %v3404 = vld [vmem:[%s454 + $0x398] sm:$0xff]
        %v3405 = vld [vmem:[%s454 + $0x3a0] sm:$0xff]
        %v3406 = vld [vmem:[%s454 + $0x3a8] sm:$0xff]
        %v3407 = vld [vmem:[%s454 + $0x3b0] sm:$0xff]
        %v3408 = vld [vmem:[%s454 + $0x3b8] sm:$0xff]
        %v3409 = vld [vmem:[%s454 + $0x3c0] sm:$0xff]
        %v3410 = vld [vmem:[%s454 + $0x3c8] sm:$0xff]
        %v3411 = vld [vmem:[%s454 + $0x3d0] sm:$0xff]
        %v3412 = vld [vmem:[%s454 + $0x3d8] sm:$0xff]
        %v3413 = vld [vmem:[%s454 + $0x3e0] sm:$0xff]
        %v3414 = vld [vmem:[%s454 + $0x3e8] sm:$0xff]
        %v3415 = vld [vmem:[%s454 + $0x3f0] sm:$0xff]
        %v3416 = vld [vmem:[%s454 + $0x3f8] sm:$0xff]
        %v3417 = vld [vmem:[%s454 + $0x400] sm:$0xff]
        %v3418 = vld [vmem:[%s454 + $0x408] sm:$0xff]
        %v3419 = vld [vmem:[%s454 + $0x410] sm:$0xff]
        %v3420 = vld [vmem:[%s454 + $0x418] sm:$0xff]
        %v3421 = vld [vmem:[%s454 + $0x420] sm:$0xff]
        %v3422 = vld [vmem:[%s454 + $0x428] sm:$0xff]
        %v3423 = vld [vmem:[%s454 + $0x430] sm:$0xff]
        %v3424 = vld [vmem:[%s454 + $0x438] sm:$0xff]
        %v3425 = vld [vmem:[%s454 + $0x440] sm:$0xff]
        %v3426 = vld [vmem:[%s454 + $0x448] sm:$0xff]
        %v3427 = vld [vmem:[%s454 + $0x450] sm:$0xff]
        %v3428 = vld [vmem:[%s454 + $0x458] sm:$0xff]
        %v3429 = vld [vmem:[%s454 + $0x460] sm:$0xff]
        %v3430 = vld [vmem:[%s454 + $0x468] sm:$0xff]
        %v3431 = vld [vmem:[%s454 + $0x470] sm:$0xff]
        %v3432 = vld [vmem:[%s454 + $0x478] sm:$0xff]
        %v3433 = vld [vmem:[%s454 + $0x480] sm:$0xff]
        %v3434 = vld [vmem:[%s454 + $0x488] sm:$0xff]
        %v3435 = vld [vmem:[%s454 + $0x490] sm:$0xff]
        %v3436 = vld [vmem:[%s454 + $0x498] sm:$0xff]
        %v3437 = vld [vmem:[%s454 + $0x4a0] sm:$0xff]
        %v3438 = vld [vmem:[%s454 + $0x4a8] sm:$0xff]
        %v3439 = vld [vmem:[%s454 + $0x4b0] sm:$0xff]
        %v3440 = vld [vmem:[%s454 + $0x4b8] sm:$0xff]
        %v3441 = vld [vmem:[%s454 + $0x4c0] sm:$0xff]
        %v3442 = vld [vmem:[%s454 + $0x4c8] sm:$0xff]
        %v3443 = vld [vmem:[%s454 + $0x4d0] sm:$0xff]
        %v3444 = vld [vmem:[%s454 + $0x4d8] sm:$0xff]
        %v3445 = vld [vmem:[%s454 + $0x4e0] sm:$0xff]
        %v3446 = vld [vmem:[%s454 + $0x4e8] sm:$0xff]
        %v3447 = vld [vmem:[%s454 + $0x4f0] sm:$0xff]
        %v3448 = vld [vmem:[%s454 + $0x4f8] sm:$0xff]
        %v3449 = vld [vmem:[%s454 + $0x500] sm:$0xff]
        %v3450 = vld [vmem:[%s454 + $0x508] sm:$0xff]
        %v3451 = vld [vmem:[%s454 + $0x510] sm:$0xff]
        %v3452 = vld [vmem:[%s454 + $0x518] sm:$0xff]
        %v3453 = vld [vmem:[%s454 + $0x520] sm:$0xff]
        %v3454 = vld [vmem:[%s454 + $0x528] sm:$0xff]
        %v3455 = vld [vmem:[%s454 + $0x530] sm:$0xff]
        %v3456 = vld [vmem:[%s454 + $0x538] sm:$0xff]
        %v3457 = vld [vmem:[%s454 + $0x540] sm:$0xff]
        %v3458 = vld [vmem:[%s454 + $0x548] sm:$0xff]
        %v3459 = vld [vmem:[%s454 + $0x550] sm:$0xff]
        %v3460 = vld [vmem:[%s454 + $0x558] sm:$0xff]
        %v3461 = vld [vmem:[%s454 + $0x560] sm:$0xff]
        %v3462 = vld [vmem:[%s454 + $0x568] sm:$0xff]
        %v3463 = vld [vmem:[%s454 + $0x570] sm:$0xff]
        %v3464 = vld [vmem:[%s454 + $0x578] sm:$0xff]
        %v3465 = vld [vmem:[%s454 + $0x580] sm:$0xff]
        %v3466 = vld [vmem:[%s454 + $0x588] sm:$0xff]
        %v3467 = vld [vmem:[%s454 + $0x590] sm:$0xff]
        %v3468 = vld [vmem:[%s454 + $0x598] sm:$0xff]
        %v3469 = vld [vmem:[%s454 + $0x5a0] sm:$0xff]
        %v3470 = vld [vmem:[%s454 + $0x5a8] sm:$0xff]
        %v3471 = vld [vmem:[%s454 + $0x5b0] sm:$0xff]
        %v3472 = vld [vmem:[%s454 + $0x5b8] sm:$0xff]
        %v3473 = vld [vmem:[%s454 + $0x5c0] sm:$0xff]
        %v3474 = vld [vmem:[%s454 + $0x5c8] sm:$0xff]
        %v3475 = vld [vmem:[%s454 + $0x5d0] sm:$0xff]
        %v3476 = vld [vmem:[%s454 + $0x5d8] sm:$0xff]
        %v3477 = vld [vmem:[%s454 + $0x5e0] sm:$0xff]
        %v3478 = vld [vmem:[%s454 + $0x5e8] sm:$0xff]
        %v3479 = vld [vmem:[%s454 + $0x5f0] sm:$0xff]
        %v3480 = vld [vmem:[%s454 + $0x5f8] sm:$0xff]
        %v3481 = vld [vmem:[%s454 + $0x600] sm:$0xff]
        %v3482 = vld [vmem:[%s454 + $0x608] sm:$0xff]
        %v3483 = vld [vmem:[%s454 + $0x610] sm:$0xff]
        %v3484 = vld [vmem:[%s454 + $0x618] sm:$0xff]
        %v3485 = vld [vmem:[%s454 + $0x620] sm:$0xff]
        %v3486 = vld [vmem:[%s454 + $0x628] sm:$0xff]
        %v3487 = vld [vmem:[%s454 + $0x630] sm:$0xff]
        %v3488 = vld [vmem:[%s454 + $0x638] sm:$0xff]
        %v3489 = vld [vmem:[%s454 + $0x640] sm:$0xff]
        %v3490 = vld [vmem:[%s454 + $0x648] sm:$0xff]
        %v3491 = vld [vmem:[%s454 + $0x650] sm:$0xff]
        %v3492 = vld [vmem:[%s454 + $0x658] sm:$0xff]
        %v3493 = vld [vmem:[%s454 + $0x660] sm:$0xff]
        %v3494 = vld [vmem:[%s454 + $0x668] sm:$0xff]
        %v3495 = vld [vmem:[%s454 + $0x670] sm:$0xff]
        %v3496 = vld [vmem:[%s454 + $0x678] sm:$0xff]
        %v3497 = vld [vmem:[%s454 + $0x680] sm:$0xff]
        %v3498 = vld [vmem:[%s454 + $0x688] sm:$0xff]
        %v3499 = vld [vmem:[%s454 + $0x690] sm:$0xff]
        %v3500 = vld [vmem:[%s454 + $0x698] sm:$0xff]
        %v3501 = vld [vmem:[%s454 + $0x6a0] sm:$0xff]
        %v3502 = vld [vmem:[%s454 + $0x6a8] sm:$0xff]
        %v3503 = vld [vmem:[%s454 + $0x6b0] sm:$0xff]
        %v3504 = vld [vmem:[%s454 + $0x6b8] sm:$0xff]
        %v3505 = vld [vmem:[%s454 + $0x6c0] sm:$0xff]
        %v3506 = vld [vmem:[%s454 + $0x6c8] sm:$0xff]
        %v3507 = vld [vmem:[%s454 + $0x6d0] sm:$0xff]
        %v3508 = vld [vmem:[%s454 + $0x6d8] sm:$0xff]
        %v3509 = vld [vmem:[%s454 + $0x6e0] sm:$0xff]
        %v3510 = vld [vmem:[%s454 + $0x6e8] sm:$0xff]
        %v3511 = vld [vmem:[%s454 + $0x6f0] sm:$0xff]
        %v3512 = vld [vmem:[%s454 + $0x6f8] sm:$0xff]
        %v3513 = vld [vmem:[%s454 + $0x700] sm:$0xff]
        %v3514 = vld [vmem:[%s454 + $0x708] sm:$0xff]
        %v3515 = vld [vmem:[%s454 + $0x710] sm:$0xff]
        %v3516 = vld [vmem:[%s454 + $0x718] sm:$0xff]
        %v3517 = vld [vmem:[%s454 + $0x720] sm:$0xff]
        %v3518 = vld [vmem:[%s454 + $0x728] sm:$0xff]
        %v3519 = vld [vmem:[%s454 + $0x730] sm:$0xff]
        %v3520 = vld [vmem:[%s454 + $0x738] sm:$0xff]
        %v3521 = vld [vmem:[%s454 + $0x740] sm:$0xff]
        %v3522 = vld [vmem:[%s454 + $0x748] sm:$0xff]
        %v3523 = vld [vmem:[%s454 + $0x750] sm:$0xff]
        %v3524 = vld [vmem:[%s454 + $0x758] sm:$0xff]
        %v3525 = vld [vmem:[%s454 + $0x760] sm:$0xff]
        %v3526 = vld [vmem:[%s454 + $0x768] sm:$0xff]
        %v3527 = vld [vmem:[%s454 + $0x770] sm:$0xff]
        %v3528 = vld [vmem:[%s454 + $0x778] sm:$0xff]
        %v3529 = vld [vmem:[%s454 + $0x780] sm:$0xff]
        %v3530 = vld [vmem:[%s454 + $0x788] sm:$0xff]
        %v3531 = vld [vmem:[%s454 + $0x790] sm:$0xff]
        %v3532 = vld [vmem:[%s454 + $0x798] sm:$0xff]
        %v3533 = vld [vmem:[%s454 + $0x7a0] sm:$0xff]
        %v3534 = vld [vmem:[%s454 + $0x7a8] sm:$0xff]
        %v3535 = vld [vmem:[%s454 + $0x7b0] sm:$0xff]
        %v3536 = vld [vmem:[%s454 + $0x7b8] sm:$0xff]
        %v3537 = vld [vmem:[%s454 + $0x7c0] sm:$0xff]
        %v3538 = vld [vmem:[%s454 + $0x7c8] sm:$0xff]
        %v3539 = vld [vmem:[%s454 + $0x7d0] sm:$0xff]
        %v3540 = vld [vmem:[%s454 + $0x7d8] sm:$0xff]
        %v3541 = vld [vmem:[%s454 + $0x7e0] sm:$0xff]
        %v3542 = vld [vmem:[%s454 + $0x7e8] sm:$0xff]
        %v3543 = vld [vmem:[%s454 + $0x7f0] sm:$0xff]
        %v3544 = vld [vmem:[%s454 + $0x7f8] sm:$0xff]
        %v3545 = vld [vmem:[%s454 + $0x800] sm:$0xff]
        %v3546 = vld [vmem:[%s454 + $0x808] sm:$0xff]
        %v3547 = vld [vmem:[%s454 + $0x810] sm:$0xff]
        %v3548 = vld [vmem:[%s454 + $0x818] sm:$0xff]
        %v3549 = vld [vmem:[%s454 + $0x820] sm:$0xff]
        %v3550 = vld [vmem:[%s454 + $0x828] sm:$0xff]
        %v3551 = vld [vmem:[%s454 + $0x830] sm:$0xff]
        %v3552 = vld [vmem:[%s454 + $0x838] sm:$0xff]
        %v3553 = vld [vmem:[%s454 + $0x840] sm:$0xff]
        %v3554 = vld [vmem:[%s454 + $0x848] sm:$0xff]
        %v3555 = vld [vmem:[%s454 + $0x850] sm:$0xff]
        %v3556 = vld [vmem:[%s454 + $0x858] sm:$0xff]
        %v3557 = vld [vmem:[%s454 + $0x860] sm:$0xff]
        %v3558 = vld [vmem:[%s454 + $0x868] sm:$0xff]
        %v3559 = vld [vmem:[%s454 + $0x870] sm:$0xff]
        %v3560 = vld [vmem:[%s454 + $0x878] sm:$0xff]
        %v3561 = vld [vmem:[%s454 + $0x880] sm:$0xff]
        %v3562 = vld [vmem:[%s454 + $0x888] sm:$0xff]
        %v3563 = vld [vmem:[%s454 + $0x890] sm:$0xff]
        %v3564 = vld [vmem:[%s454 + $0x898] sm:$0xff]
        %v3565 = vld [vmem:[%s454 + $0x8a0] sm:$0xff]
        %v3566 = vld [vmem:[%s454 + $0x8a8] sm:$0xff]
        %v3567 = vld [vmem:[%s454 + $0x8b0] sm:$0xff]
        %v3568 = vld [vmem:[%s454 + $0x8b8] sm:$0xff]
        %v3569 = vld [vmem:[%s454 + $0x8c0] sm:$0xff]
        %v3570 = vld [vmem:[%s454 + $0x8c8] sm:$0xff]
        %v3571 = vld [vmem:[%s454 + $0x8d0] sm:$0xff]
        %v3572 = vld [vmem:[%s454 + $0x8d8] sm:$0xff]
        %v3573 = vld [vmem:[%s454 + $0x8e0] sm:$0xff]
        %v3574 = vld [vmem:[%s454 + $0x8e8] sm:$0xff]
        %v3575 = vld [vmem:[%s454 + $0x8f0] sm:$0xff]
        %v3576 = vld [vmem:[%s454 + $0x8f8] sm:$0xff]
        %v3577 = vunpack.c.l.s8.bf16 %v3289
        %v3578 = vunpack.c.l.s8.bf16 %v3290
        %v3579 = vunpack.c.l.s8.bf16 %v3291
        %v3580 = vunpack.c.l.s8.bf16 %v3292
        %v3581 = vunpack.c.l.s8.bf16 %v3293
        %v3582 = vunpack.c.l.s8.bf16 %v3294
        %v3583 = vunpack.c.h.s8.bf16 %v3289
        %v3584 = vunpack.c.h.s8.bf16 %v3290
        %v3585 = vunpack.c.h.s8.bf16 %v3291
        %v3586 = vunpack.c.h.s8.bf16 %v3292
        %v3587 = vunpack.c.h.s8.bf16 %v3293
        %v3588 = vunpack.c.h.s8.bf16 %v3294
        %v3589 = vunpack.c.l.s8.bf16 %v3295
        %v3590 = vunpack.c.l.s8.bf16 %v3296
        %v3591 = vunpack.c.l.s8.bf16 %v3297
        %v3592 = vunpack.c.l.s8.bf16 %v3298
        %v3593 = vunpack.c.l.s8.bf16 %v3299
        %v3594 = vunpack.c.l.s8.bf16 %v3300
        %v3595 = vunpack.c.h.s8.bf16 %v3295
        %v3596 = vunpack.c.h.s8.bf16 %v3296
        %v3597 = vunpack.c.h.s8.bf16 %v3297
        %v3598 = vunpack.c.h.s8.bf16 %v3298
        %v3599 = vunpack.c.h.s8.bf16 %v3299
        %v3600 = vunpack.c.h.s8.bf16 %v3300
        %v3601 = vunpack.c.l.s8.bf16 %v3301
        %v3602 = vunpack.c.l.s8.bf16 %v3302
        %v3603 = vunpack.c.l.s8.bf16 %v3303
        %v3604 = vunpack.c.l.s8.bf16 %v3304
        %v3605 = vunpack.c.l.s8.bf16 %v3305
        %v3606 = vunpack.c.l.s8.bf16 %v3306
        %v3607 = vunpack.c.h.s8.bf16 %v3301
        %v3608 = vunpack.c.h.s8.bf16 %v3302
        %v3609 = vunpack.c.h.s8.bf16 %v3303
        %v3610 = vunpack.c.h.s8.bf16 %v3304
        %v3611 = vunpack.c.h.s8.bf16 %v3305
        %v3612 = vunpack.c.h.s8.bf16 %v3306
        %v3613 = vunpack.c.l.s8.bf16 %v3307
        %v3614 = vunpack.c.l.s8.bf16 %v3308
        %v3615 = vunpack.c.l.s8.bf16 %v3309
        %v3616 = vunpack.c.l.s8.bf16 %v3310
        %v3617 = vunpack.c.l.s8.bf16 %v3311
        %v3618 = vunpack.c.l.s8.bf16 %v3312
        %v3619 = vunpack.c.h.s8.bf16 %v3307
        %v3620 = vunpack.c.h.s8.bf16 %v3308
        %v3621 = vunpack.c.h.s8.bf16 %v3309
        %v3622 = vunpack.c.h.s8.bf16 %v3310
        %v3623 = vunpack.c.h.s8.bf16 %v3311
        %v3624 = vunpack.c.h.s8.bf16 %v3312
        %v3625 = vunpack.c.l.s8.bf16 %v3313
        %v3626 = vunpack.c.l.s8.bf16 %v3314
        %v3627 = vunpack.c.l.s8.bf16 %v3315
        %v3628 = vunpack.c.l.s8.bf16 %v3316
        %v3629 = vunpack.c.l.s8.bf16 %v3317
        %v3630 = vunpack.c.l.s8.bf16 %v3318
        %v3631 = vunpack.c.h.s8.bf16 %v3313
        %v3632 = vunpack.c.h.s8.bf16 %v3314
        %v3633 = vunpack.c.h.s8.bf16 %v3315
        %v3634 = vunpack.c.h.s8.bf16 %v3316
        %v3635 = vunpack.c.h.s8.bf16 %v3317
        %v3636 = vunpack.c.h.s8.bf16 %v3318
        %v3637 = vunpack.c.l.s8.bf16 %v3319
        %v3638 = vunpack.c.l.s8.bf16 %v3320
        %v3639 = vunpack.c.l.s8.bf16 %v3321
        %v3640 = vunpack.c.l.s8.bf16 %v3322
        %v3641 = vunpack.c.l.s8.bf16 %v3323
        %v3642 = vunpack.c.l.s8.bf16 %v3324
        %v3643 = vunpack.c.h.s8.bf16 %v3319
        %v3644 = vunpack.c.h.s8.bf16 %v3320
        %v3645 = vunpack.c.h.s8.bf16 %v3321
        %v3646 = vunpack.c.h.s8.bf16 %v3322
        %v3647 = vunpack.c.h.s8.bf16 %v3323
        %v3648 = vunpack.c.h.s8.bf16 %v3324
        %v3649 = vunpack.c.l.s8.bf16 %v3325
        %v3650 = vunpack.c.l.s8.bf16 %v3326
        %v3651 = vunpack.c.l.s8.bf16 %v3327
        %v3652 = vunpack.c.l.s8.bf16 %v3328
        %v3653 = vunpack.c.l.s8.bf16 %v3329
        %v3654 = vunpack.c.l.s8.bf16 %v3330
        %v3655 = vunpack.c.h.s8.bf16 %v3325
        %v3656 = vunpack.c.h.s8.bf16 %v3326
        %v3657 = vunpack.c.h.s8.bf16 %v3327
        %v3658 = vunpack.c.h.s8.bf16 %v3328
        %v3659 = vunpack.c.h.s8.bf16 %v3329
        %v3660 = vunpack.c.h.s8.bf16 %v3330
        %v3661 = vunpack.c.l.s8.bf16 %v3331
        %v3662 = vunpack.c.l.s8.bf16 %v3332
        %v3663 = vunpack.c.l.s8.bf16 %v3333
        %v3664 = vunpack.c.l.s8.bf16 %v3334
        %v3665 = vunpack.c.l.s8.bf16 %v3335
        %v3666 = vunpack.c.l.s8.bf16 %v3336
        %v3667 = vunpack.c.h.s8.bf16 %v3331
        %v3668 = vunpack.c.h.s8.bf16 %v3332
        %v3669 = vunpack.c.h.s8.bf16 %v3333
        %v3670 = vunpack.c.h.s8.bf16 %v3334
        %v3671 = vunpack.c.h.s8.bf16 %v3335
        %v3672 = vunpack.c.h.s8.bf16 %v3336
        %v3673 = vunpack.c.l.s8.bf16 %v3337
        %v3674 = vunpack.c.l.s8.bf16 %v3338
        %v3675 = vunpack.c.l.s8.bf16 %v3339
        %v3676 = vunpack.c.l.s8.bf16 %v3340
        %v3677 = vunpack.c.l.s8.bf16 %v3341
        %v3678 = vunpack.c.l.s8.bf16 %v3342
        %v3679 = vunpack.c.h.s8.bf16 %v3337
        %v3680 = vunpack.c.h.s8.bf16 %v3338
        %v3681 = vunpack.c.h.s8.bf16 %v3339
        %v3682 = vunpack.c.h.s8.bf16 %v3340
        %v3683 = vunpack.c.h.s8.bf16 %v3341
        %v3684 = vunpack.c.h.s8.bf16 %v3342
        %v3685 = vunpack.c.l.s8.bf16 %v3343
        %v3686 = vunpack.c.l.s8.bf16 %v3344
        %v3687 = vunpack.c.l.s8.bf16 %v3345
        %v3688 = vunpack.c.l.s8.bf16 %v3346
        %v3689 = vunpack.c.l.s8.bf16 %v3347
        %v3690 = vunpack.c.l.s8.bf16 %v3348
        %v3691 = vunpack.c.h.s8.bf16 %v3343
        %v3692 = vunpack.c.h.s8.bf16 %v3344
        %v3693 = vunpack.c.h.s8.bf16 %v3345
        %v3694 = vunpack.c.h.s8.bf16 %v3346
        %v3695 = vunpack.c.h.s8.bf16 %v3347
        %v3696 = vunpack.c.h.s8.bf16 %v3348
        %v3697 = vunpack.c.l.s8.bf16 %v3349
        %v3698 = vunpack.c.l.s8.bf16 %v3350
        %v3699 = vunpack.c.l.s8.bf16 %v3351
        %v3700 = vunpack.c.l.s8.bf16 %v3352
        %v3701 = vunpack.c.l.s8.bf16 %v3353
        %v3702 = vunpack.c.l.s8.bf16 %v3354
        %v3703 = vunpack.c.h.s8.bf16 %v3349
        %v3704 = vunpack.c.h.s8.bf16 %v3350
        %v3705 = vunpack.c.h.s8.bf16 %v3351
        %v3706 = vunpack.c.h.s8.bf16 %v3352
        %v3707 = vunpack.c.h.s8.bf16 %v3353
        %v3708 = vunpack.c.h.s8.bf16 %v3354
        %v3709 = vunpack.c.l.s8.bf16 %v3355
        %v3710 = vunpack.c.l.s8.bf16 %v3356
        %v3711 = vunpack.c.l.s8.bf16 %v3357
        %v3712 = vunpack.c.l.s8.bf16 %v3358
        %v3713 = vunpack.c.l.s8.bf16 %v3359
        %v3714 = vunpack.c.l.s8.bf16 %v3360
        %v3715 = vunpack.c.h.s8.bf16 %v3355
        %v3716 = vunpack.c.h.s8.bf16 %v3356
        %v3717 = vunpack.c.h.s8.bf16 %v3357
        %v3718 = vunpack.c.h.s8.bf16 %v3358
        %v3719 = vunpack.c.h.s8.bf16 %v3359
        %v3720 = vunpack.c.h.s8.bf16 %v3360
        %v3721 = vunpack.c.l.s8.bf16 %v3361
        %v3722 = vunpack.c.l.s8.bf16 %v3362
        %v3723 = vunpack.c.l.s8.bf16 %v3363
        %v3724 = vunpack.c.l.s8.bf16 %v3364
        %v3725 = vunpack.c.l.s8.bf16 %v3365
        %v3726 = vunpack.c.l.s8.bf16 %v3366
        %v3727 = vunpack.c.h.s8.bf16 %v3361
        %v3728 = vunpack.c.h.s8.bf16 %v3362
        %v3729 = vunpack.c.h.s8.bf16 %v3363
        %v3730 = vunpack.c.h.s8.bf16 %v3364
        %v3731 = vunpack.c.h.s8.bf16 %v3365
        %v3732 = vunpack.c.h.s8.bf16 %v3366
        %v3733 = vunpack.c.l.s8.bf16 %v3367
        %v3734 = vunpack.c.l.s8.bf16 %v3368
        %v3735 = vunpack.c.l.s8.bf16 %v3369
        %v3736 = vunpack.c.l.s8.bf16 %v3370
        %v3737 = vunpack.c.l.s8.bf16 %v3371
        %v3738 = vunpack.c.l.s8.bf16 %v3372
        %v3739 = vunpack.c.h.s8.bf16 %v3367
        %v3740 = vunpack.c.h.s8.bf16 %v3368
        %v3741 = vunpack.c.h.s8.bf16 %v3369
        %v3742 = vunpack.c.h.s8.bf16 %v3370
        %v3743 = vunpack.c.h.s8.bf16 %v3371
        %v3744 = vunpack.c.h.s8.bf16 %v3372
        %v3745 = vunpack.c.l.s8.bf16 %v3373
        %v3746 = vunpack.c.l.s8.bf16 %v3374
        %v3747 = vunpack.c.l.s8.bf16 %v3375
        %v3748 = vunpack.c.l.s8.bf16 %v3376
        %v3749 = vunpack.c.l.s8.bf16 %v3377
        %v3750 = vunpack.c.l.s8.bf16 %v3378
        %v3751 = vunpack.c.h.s8.bf16 %v3373
        %v3752 = vunpack.c.h.s8.bf16 %v3374
        %v3753 = vunpack.c.h.s8.bf16 %v3375
        %v3754 = vunpack.c.h.s8.bf16 %v3376
        %v3755 = vunpack.c.h.s8.bf16 %v3377
        %v3756 = vunpack.c.h.s8.bf16 %v3378
        %v3757 = vunpack.c.l.s8.bf16 %v3379
        %v3758 = vunpack.c.l.s8.bf16 %v3380
        %v3759 = vunpack.c.l.s8.bf16 %v3381
        %v3760 = vunpack.c.l.s8.bf16 %v3382
        %v3761 = vunpack.c.l.s8.bf16 %v3383
        %v3762 = vunpack.c.l.s8.bf16 %v3384
        %v3763 = vunpack.c.h.s8.bf16 %v3379
        %v3764 = vunpack.c.h.s8.bf16 %v3380
        %v3765 = vunpack.c.h.s8.bf16 %v3381
        %v3766 = vunpack.c.h.s8.bf16 %v3382
        %v3767 = vunpack.c.h.s8.bf16 %v3383
        %v3768 = vunpack.c.h.s8.bf16 %v3384
        %v3769 = vunpack.c.l.s8.bf16 %v3385
        %v3770 = vunpack.c.l.s8.bf16 %v3386
        %v3771 = vunpack.c.l.s8.bf16 %v3387
        %v3772 = vunpack.c.l.s8.bf16 %v3388
        %v3773 = vunpack.c.l.s8.bf16 %v3389
        %v3774 = vunpack.c.l.s8.bf16 %v3390
        %v3775 = vunpack.c.h.s8.bf16 %v3385
        %v3776 = vunpack.c.h.s8.bf16 %v3386
        %v3777 = vunpack.c.h.s8.bf16 %v3387
        %v3778 = vunpack.c.h.s8.bf16 %v3388
        %v3779 = vunpack.c.h.s8.bf16 %v3389
        %v3780 = vunpack.c.h.s8.bf16 %v3390
        %v3781 = vunpack.c.l.s8.bf16 %v3391
        %v3782 = vunpack.c.l.s8.bf16 %v3392
        %v3783 = vunpack.c.l.s8.bf16 %v3393
        %v3784 = vunpack.c.l.s8.bf16 %v3394
        %v3785 = vunpack.c.l.s8.bf16 %v3395
        %v3786 = vunpack.c.l.s8.bf16 %v3396
        %v3787 = vunpack.c.h.s8.bf16 %v3391
        %v3788 = vunpack.c.h.s8.bf16 %v3392
        %v3789 = vunpack.c.h.s8.bf16 %v3393
        %v3790 = vunpack.c.h.s8.bf16 %v3394
        %v3791 = vunpack.c.h.s8.bf16 %v3395
        %v3792 = vunpack.c.h.s8.bf16 %v3396
        %v3793 = vunpack.c.l.s8.bf16 %v3397
        %v3794 = vunpack.c.l.s8.bf16 %v3398
        %v3795 = vunpack.c.l.s8.bf16 %v3399
        %v3796 = vunpack.c.l.s8.bf16 %v3400
        %v3797 = vunpack.c.l.s8.bf16 %v3401
        %v3798 = vunpack.c.l.s8.bf16 %v3402
        %v3799 = vunpack.c.h.s8.bf16 %v3397
        %v3800 = vunpack.c.h.s8.bf16 %v3398
        %v3801 = vunpack.c.h.s8.bf16 %v3399
        %v3802 = vunpack.c.h.s8.bf16 %v3400
        %v3803 = vunpack.c.h.s8.bf16 %v3401
        %v3804 = vunpack.c.h.s8.bf16 %v3402
        %v3805 = vunpack.c.l.s8.bf16 %v3403
        %v3806 = vunpack.c.l.s8.bf16 %v3404
        %v3807 = vunpack.c.l.s8.bf16 %v3405
        %v3808 = vunpack.c.l.s8.bf16 %v3406
        %v3809 = vunpack.c.l.s8.bf16 %v3407
        %v3810 = vunpack.c.l.s8.bf16 %v3408
        %v3811 = vunpack.c.h.s8.bf16 %v3403
        %v3812 = vunpack.c.h.s8.bf16 %v3404
        %v3813 = vunpack.c.h.s8.bf16 %v3405
        %v3814 = vunpack.c.h.s8.bf16 %v3406
        %v3815 = vunpack.c.h.s8.bf16 %v3407
        %v3816 = vunpack.c.h.s8.bf16 %v3408
        %v3817 = vunpack.c.l.s8.bf16 %v3409
        %v3818 = vunpack.c.l.s8.bf16 %v3410
        %v3819 = vunpack.c.l.s8.bf16 %v3411
        %v3820 = vunpack.c.l.s8.bf16 %v3412
        %v3821 = vunpack.c.l.s8.bf16 %v3413
        %v3822 = vunpack.c.l.s8.bf16 %v3414
        %v3823 = vunpack.c.h.s8.bf16 %v3409
        %v3824 = vunpack.c.h.s8.bf16 %v3410
        %v3825 = vunpack.c.h.s8.bf16 %v3411
        %v3826 = vunpack.c.h.s8.bf16 %v3412
        %v3827 = vunpack.c.h.s8.bf16 %v3413
        %v3828 = vunpack.c.h.s8.bf16 %v3414
        %v3829 = vunpack.c.l.s8.bf16 %v3415
        %v3830 = vunpack.c.l.s8.bf16 %v3416
        %v3831 = vunpack.c.l.s8.bf16 %v3417
        %v3832 = vunpack.c.l.s8.bf16 %v3418
        %v3833 = vunpack.c.l.s8.bf16 %v3419
        %v3834 = vunpack.c.l.s8.bf16 %v3420
        %v3835 = vunpack.c.h.s8.bf16 %v3415
        %v3836 = vunpack.c.h.s8.bf16 %v3416
        %v3837 = vunpack.c.h.s8.bf16 %v3417
        %v3838 = vunpack.c.h.s8.bf16 %v3418
        %v3839 = vunpack.c.h.s8.bf16 %v3419
        %v3840 = vunpack.c.h.s8.bf16 %v3420
        %v3841 = vunpack.c.l.s8.bf16 %v3421
        %v3842 = vunpack.c.l.s8.bf16 %v3422
        %v3843 = vunpack.c.l.s8.bf16 %v3423
        %v3844 = vunpack.c.l.s8.bf16 %v3424
        %v3845 = vunpack.c.l.s8.bf16 %v3425
        %v3846 = vunpack.c.l.s8.bf16 %v3426
        %v3847 = vunpack.c.h.s8.bf16 %v3421
        %v3848 = vunpack.c.h.s8.bf16 %v3422
        %v3849 = vunpack.c.h.s8.bf16 %v3423
        %v3850 = vunpack.c.h.s8.bf16 %v3424
        %v3851 = vunpack.c.h.s8.bf16 %v3425
        %v3852 = vunpack.c.h.s8.bf16 %v3426
        %v3853 = vunpack.c.l.s8.bf16 %v3427
        %v3854 = vunpack.c.l.s8.bf16 %v3428
        %v3855 = vunpack.c.l.s8.bf16 %v3429
        %v3856 = vunpack.c.l.s8.bf16 %v3430
        %v3857 = vunpack.c.l.s8.bf16 %v3431
        %v3858 = vunpack.c.l.s8.bf16 %v3432
        %v3859 = vunpack.c.h.s8.bf16 %v3427
        %v3860 = vunpack.c.h.s8.bf16 %v3428
        %v3861 = vunpack.c.h.s8.bf16 %v3429
        %v3862 = vunpack.c.h.s8.bf16 %v3430
        %v3863 = vunpack.c.h.s8.bf16 %v3431
        %v3864 = vunpack.c.h.s8.bf16 %v3432
        %v3865 = vunpack.c.l.s8.bf16 %v3433
        %v3866 = vunpack.c.l.s8.bf16 %v3434
        %v3867 = vunpack.c.l.s8.bf16 %v3435
        %v3868 = vunpack.c.l.s8.bf16 %v3436
        %v3869 = vunpack.c.l.s8.bf16 %v3437
        %v3870 = vunpack.c.l.s8.bf16 %v3438
        %v3871 = vunpack.c.h.s8.bf16 %v3433
        %v3872 = vunpack.c.h.s8.bf16 %v3434
        %v3873 = vunpack.c.h.s8.bf16 %v3435
        %v3874 = vunpack.c.h.s8.bf16 %v3436
        %v3875 = vunpack.c.h.s8.bf16 %v3437
        %v3876 = vunpack.c.h.s8.bf16 %v3438
        %v3877 = vunpack.c.l.s8.bf16 %v3439
        %v3878 = vunpack.c.l.s8.bf16 %v3440
        %v3879 = vunpack.c.l.s8.bf16 %v3441
        %v3880 = vunpack.c.l.s8.bf16 %v3442
        %v3881 = vunpack.c.l.s8.bf16 %v3443
        %v3882 = vunpack.c.l.s8.bf16 %v3444
        %v3883 = vunpack.c.h.s8.bf16 %v3439
        %v3884 = vunpack.c.h.s8.bf16 %v3440
        %v3885 = vunpack.c.h.s8.bf16 %v3441
        %v3886 = vunpack.c.h.s8.bf16 %v3442
        %v3887 = vunpack.c.h.s8.bf16 %v3443
        %v3888 = vunpack.c.h.s8.bf16 %v3444
        %v3889 = vunpack.c.l.s8.bf16 %v3445
        %v3890 = vunpack.c.l.s8.bf16 %v3446
        %v3891 = vunpack.c.l.s8.bf16 %v3447
        %v3892 = vunpack.c.l.s8.bf16 %v3448
        %v3893 = vunpack.c.l.s8.bf16 %v3449
        %v3894 = vunpack.c.l.s8.bf16 %v3450
        %v3895 = vunpack.c.h.s8.bf16 %v3445
        %v3896 = vunpack.c.h.s8.bf16 %v3446
        %v3897 = vunpack.c.h.s8.bf16 %v3447
        %v3898 = vunpack.c.h.s8.bf16 %v3448
        %v3899 = vunpack.c.h.s8.bf16 %v3449
        %v3900 = vunpack.c.h.s8.bf16 %v3450
        %v3901 = vunpack.c.l.s8.bf16 %v3451
        %v3902 = vunpack.c.l.s8.bf16 %v3452
        %v3903 = vunpack.c.l.s8.bf16 %v3453
        %v3904 = vunpack.c.l.s8.bf16 %v3454
        %v3905 = vunpack.c.l.s8.bf16 %v3455
        %v3906 = vunpack.c.l.s8.bf16 %v3456
        %v3907 = vunpack.c.h.s8.bf16 %v3451
        %v3908 = vunpack.c.h.s8.bf16 %v3452
        %v3909 = vunpack.c.h.s8.bf16 %v3453
        %v3910 = vunpack.c.h.s8.bf16 %v3454
        %v3911 = vunpack.c.h.s8.bf16 %v3455
        %v3912 = vunpack.c.h.s8.bf16 %v3456
        %v3913 = vunpack.c.l.s8.bf16 %v3457
        %v3914 = vunpack.c.l.s8.bf16 %v3458
        %v3915 = vunpack.c.l.s8.bf16 %v3459
        %v3916 = vunpack.c.l.s8.bf16 %v3460
        %v3917 = vunpack.c.l.s8.bf16 %v3461
        %v3918 = vunpack.c.l.s8.bf16 %v3462
        %v3919 = vunpack.c.h.s8.bf16 %v3457
        %v3920 = vunpack.c.h.s8.bf16 %v3458
        %v3921 = vunpack.c.h.s8.bf16 %v3459
        %v3922 = vunpack.c.h.s8.bf16 %v3460
        %v3923 = vunpack.c.h.s8.bf16 %v3461
        %v3924 = vunpack.c.h.s8.bf16 %v3462
        %v3925 = vunpack.c.l.s8.bf16 %v3463
        %v3926 = vunpack.c.l.s8.bf16 %v3464
        %v3927 = vunpack.c.l.s8.bf16 %v3465
        %v3928 = vunpack.c.l.s8.bf16 %v3466
        %v3929 = vunpack.c.l.s8.bf16 %v3467
        %v3930 = vunpack.c.l.s8.bf16 %v3468
        %v3931 = vunpack.c.h.s8.bf16 %v3463
        %v3932 = vunpack.c.h.s8.bf16 %v3464
        %v3933 = vunpack.c.h.s8.bf16 %v3465
        %v3934 = vunpack.c.h.s8.bf16 %v3466
        %v3935 = vunpack.c.h.s8.bf16 %v3467
        %v3936 = vunpack.c.h.s8.bf16 %v3468
        %v3937 = vunpack.c.l.s8.bf16 %v3469
        %v3938 = vunpack.c.l.s8.bf16 %v3470
        %v3939 = vunpack.c.l.s8.bf16 %v3471
        %v3940 = vunpack.c.l.s8.bf16 %v3472
        %v3941 = vunpack.c.l.s8.bf16 %v3473
        %v3942 = vunpack.c.l.s8.bf16 %v3474
        %v3943 = vunpack.c.h.s8.bf16 %v3469
        %v3944 = vunpack.c.h.s8.bf16 %v3470
        %v3945 = vunpack.c.h.s8.bf16 %v3471
        %v3946 = vunpack.c.h.s8.bf16 %v3472
        %v3947 = vunpack.c.h.s8.bf16 %v3473
        %v3948 = vunpack.c.h.s8.bf16 %v3474
        %v3949 = vunpack.c.l.s8.bf16 %v3475
        %v3950 = vunpack.c.l.s8.bf16 %v3476
        %v3951 = vunpack.c.l.s8.bf16 %v3477
        %v3952 = vunpack.c.l.s8.bf16 %v3478
        %v3953 = vunpack.c.l.s8.bf16 %v3479
        %v3954 = vunpack.c.l.s8.bf16 %v3480
        %v3955 = vunpack.c.h.s8.bf16 %v3475
        %v3956 = vunpack.c.h.s8.bf16 %v3476
        %v3957 = vunpack.c.h.s8.bf16 %v3477
        %v3958 = vunpack.c.h.s8.bf16 %v3478
        %v3959 = vunpack.c.h.s8.bf16 %v3479
        %v3960 = vunpack.c.h.s8.bf16 %v3480
        %v3961 = vunpack.c.l.s8.bf16 %v3481
        %v3962 = vunpack.c.l.s8.bf16 %v3482
        %v3963 = vunpack.c.l.s8.bf16 %v3483
        %v3964 = vunpack.c.l.s8.bf16 %v3484
        %v3965 = vunpack.c.l.s8.bf16 %v3485
        %v3966 = vunpack.c.l.s8.bf16 %v3486
        %v3967 = vunpack.c.h.s8.bf16 %v3481
        %v3968 = vunpack.c.h.s8.bf16 %v3482
        %v3969 = vunpack.c.h.s8.bf16 %v3483
        %v3970 = vunpack.c.h.s8.bf16 %v3484
        %v3971 = vunpack.c.h.s8.bf16 %v3485
        %v3972 = vunpack.c.h.s8.bf16 %v3486
        %v3973 = vunpack.c.l.s8.bf16 %v3487
        %v3974 = vunpack.c.l.s8.bf16 %v3488
        %v3975 = vunpack.c.l.s8.bf16 %v3489
        %v3976 = vunpack.c.l.s8.bf16 %v3490
        %v3977 = vunpack.c.l.s8.bf16 %v3491
        %v3978 = vunpack.c.l.s8.bf16 %v3492
        %v3979 = vunpack.c.h.s8.bf16 %v3487
        %v3980 = vunpack.c.h.s8.bf16 %v3488
        %v3981 = vunpack.c.h.s8.bf16 %v3489
        %v3982 = vunpack.c.h.s8.bf16 %v3490
        %v3983 = vunpack.c.h.s8.bf16 %v3491
        %v3984 = vunpack.c.h.s8.bf16 %v3492
        %v3985 = vunpack.c.l.s8.bf16 %v3493
        %v3986 = vunpack.c.l.s8.bf16 %v3494
        %v3987 = vunpack.c.l.s8.bf16 %v3495
        %v3988 = vunpack.c.l.s8.bf16 %v3496
        %v3989 = vunpack.c.l.s8.bf16 %v3497
        %v3990 = vunpack.c.l.s8.bf16 %v3498
        %v3991 = vunpack.c.h.s8.bf16 %v3493
        %v3992 = vunpack.c.h.s8.bf16 %v3494
        %v3993 = vunpack.c.h.s8.bf16 %v3495
        %v3994 = vunpack.c.h.s8.bf16 %v3496
        %v3995 = vunpack.c.h.s8.bf16 %v3497
        %v3996 = vunpack.c.h.s8.bf16 %v3498
        %v3997 = vunpack.c.l.s8.bf16 %v3499
        %v3998 = vunpack.c.l.s8.bf16 %v3500
        %v3999 = vunpack.c.l.s8.bf16 %v3501
        %v4000 = vunpack.c.l.s8.bf16 %v3502
        %v4001 = vunpack.c.l.s8.bf16 %v3503
        %v4002 = vunpack.c.l.s8.bf16 %v3504
        %v4003 = vunpack.c.h.s8.bf16 %v3499
        %v4004 = vunpack.c.h.s8.bf16 %v3500
        %v4005 = vunpack.c.h.s8.bf16 %v3501
        %v4006 = vunpack.c.h.s8.bf16 %v3502
        %v4007 = vunpack.c.h.s8.bf16 %v3503
        %v4008 = vunpack.c.h.s8.bf16 %v3504
        %v4009 = vunpack.c.l.s8.bf16 %v3505
        %v4010 = vunpack.c.l.s8.bf16 %v3506
        %v4011 = vunpack.c.l.s8.bf16 %v3507
        %v4012 = vunpack.c.l.s8.bf16 %v3508
        %v4013 = vunpack.c.l.s8.bf16 %v3509
        %v4014 = vunpack.c.l.s8.bf16 %v3510
        %v4015 = vunpack.c.h.s8.bf16 %v3505
        %v4016 = vunpack.c.h.s8.bf16 %v3506
        %v4017 = vunpack.c.h.s8.bf16 %v3507
        %v4018 = vunpack.c.h.s8.bf16 %v3508
        %v4019 = vunpack.c.h.s8.bf16 %v3509
        %v4020 = vunpack.c.h.s8.bf16 %v3510
        %v4021 = vunpack.c.l.s8.bf16 %v3511
        %v4022 = vunpack.c.l.s8.bf16 %v3512
        %v4023 = vunpack.c.l.s8.bf16 %v3513
        %v4024 = vunpack.c.l.s8.bf16 %v3514
        %v4025 = vunpack.c.l.s8.bf16 %v3515
        %v4026 = vunpack.c.l.s8.bf16 %v3516
        %v4027 = vunpack.c.h.s8.bf16 %v3511
        %v4028 = vunpack.c.h.s8.bf16 %v3512
        %v4029 = vunpack.c.h.s8.bf16 %v3513
        %v4030 = vunpack.c.h.s8.bf16 %v3514
        %v4031 = vunpack.c.h.s8.bf16 %v3515
        %v4032 = vunpack.c.h.s8.bf16 %v3516
        %v4033 = vunpack.c.l.s8.bf16 %v3517
        %v4034 = vunpack.c.l.s8.bf16 %v3518
        %v4035 = vunpack.c.l.s8.bf16 %v3519
        %v4036 = vunpack.c.l.s8.bf16 %v3520
        %v4037 = vunpack.c.l.s8.bf16 %v3521
        %v4038 = vunpack.c.l.s8.bf16 %v3522
        %v4039 = vunpack.c.h.s8.bf16 %v3517
        %v4040 = vunpack.c.h.s8.bf16 %v3518
        %v4041 = vunpack.c.h.s8.bf16 %v3519
        %v4042 = vunpack.c.h.s8.bf16 %v3520
        %v4043 = vunpack.c.h.s8.bf16 %v3521
        %v4044 = vunpack.c.h.s8.bf16 %v3522
        %v4045 = vunpack.c.l.s8.bf16 %v3523
        %v4046 = vunpack.c.l.s8.bf16 %v3524
        %v4047 = vunpack.c.l.s8.bf16 %v3525
        %v4048 = vunpack.c.l.s8.bf16 %v3526
        %v4049 = vunpack.c.l.s8.bf16 %v3527
        %v4050 = vunpack.c.l.s8.bf16 %v3528
        %v4051 = vunpack.c.h.s8.bf16 %v3523
        %v4052 = vunpack.c.h.s8.bf16 %v3524
        %v4053 = vunpack.c.h.s8.bf16 %v3525
        %v4054 = vunpack.c.h.s8.bf16 %v3526
        %v4055 = vunpack.c.h.s8.bf16 %v3527
        %v4056 = vunpack.c.h.s8.bf16 %v3528
        %v4057 = vunpack.c.l.s8.bf16 %v3529
        %v4058 = vunpack.c.l.s8.bf16 %v3530
        %v4059 = vunpack.c.l.s8.bf16 %v3531
        %v4060 = vunpack.c.l.s8.bf16 %v3532
        %v4061 = vunpack.c.l.s8.bf16 %v3533
        %v4062 = vunpack.c.l.s8.bf16 %v3534
        %v4063 = vunpack.c.h.s8.bf16 %v3529
        %v4064 = vunpack.c.h.s8.bf16 %v3530
        %v4065 = vunpack.c.h.s8.bf16 %v3531
        %v4066 = vunpack.c.h.s8.bf16 %v3532
        %v4067 = vunpack.c.h.s8.bf16 %v3533
        %v4068 = vunpack.c.h.s8.bf16 %v3534
        %v4069 = vunpack.c.l.s8.bf16 %v3535
        %v4070 = vunpack.c.l.s8.bf16 %v3536
        %v4071 = vunpack.c.l.s8.bf16 %v3537
        %v4072 = vunpack.c.l.s8.bf16 %v3538
        %v4073 = vunpack.c.l.s8.bf16 %v3539
        %v4074 = vunpack.c.l.s8.bf16 %v3540
        %v4075 = vunpack.c.h.s8.bf16 %v3535
        %v4076 = vunpack.c.h.s8.bf16 %v3536
        %v4077 = vunpack.c.h.s8.bf16 %v3537
        %v4078 = vunpack.c.h.s8.bf16 %v3538
        %v4079 = vunpack.c.h.s8.bf16 %v3539
        %v4080 = vunpack.c.h.s8.bf16 %v3540
        %v4081 = vunpack.c.l.s8.bf16 %v3541
        %v4082 = vunpack.c.l.s8.bf16 %v3542
        %v4083 = vunpack.c.l.s8.bf16 %v3543
        %v4084 = vunpack.c.l.s8.bf16 %v3544
        %v4085 = vunpack.c.l.s8.bf16 %v3545
        %v4086 = vunpack.c.l.s8.bf16 %v3546
        %v4087 = vunpack.c.h.s8.bf16 %v3541
        %v4088 = vunpack.c.h.s8.bf16 %v3542
        %v4089 = vunpack.c.h.s8.bf16 %v3543
        %v4090 = vunpack.c.h.s8.bf16 %v3544
        %v4091 = vunpack.c.h.s8.bf16 %v3545
        %v4092 = vunpack.c.h.s8.bf16 %v3546
        %v4093 = vunpack.c.l.s8.bf16 %v3547
        %v4094 = vunpack.c.l.s8.bf16 %v3548
        %v4095 = vunpack.c.l.s8.bf16 %v3549
        %v4096 = vunpack.c.l.s8.bf16 %v3550
        %v4097 = vunpack.c.l.s8.bf16 %v3551
        %v4098 = vunpack.c.l.s8.bf16 %v3552
        %v4099 = vunpack.c.h.s8.bf16 %v3547
        %v4100 = vunpack.c.h.s8.bf16 %v3548
        %v4101 = vunpack.c.h.s8.bf16 %v3549
        %v4102 = vunpack.c.h.s8.bf16 %v3550
        %v4103 = vunpack.c.h.s8.bf16 %v3551
        %v4104 = vunpack.c.h.s8.bf16 %v3552
        %v4105 = vunpack.c.l.s8.bf16 %v3553
        %v4106 = vunpack.c.l.s8.bf16 %v3554
        %v4107 = vunpack.c.l.s8.bf16 %v3555
        %v4108 = vunpack.c.l.s8.bf16 %v3556
        %v4109 = vunpack.c.l.s8.bf16 %v3557
        %v4110 = vunpack.c.l.s8.bf16 %v3558
        %v4111 = vunpack.c.h.s8.bf16 %v3553
        %v4112 = vunpack.c.h.s8.bf16 %v3554
        %v4113 = vunpack.c.h.s8.bf16 %v3555
        %v4114 = vunpack.c.h.s8.bf16 %v3556
        %v4115 = vunpack.c.h.s8.bf16 %v3557
        %v4116 = vunpack.c.h.s8.bf16 %v3558
        %v4117 = vunpack.c.l.s8.bf16 %v3559
        %v4118 = vunpack.c.l.s8.bf16 %v3560
        %v4119 = vunpack.c.l.s8.bf16 %v3561
        %v4120 = vunpack.c.l.s8.bf16 %v3562
        %v4121 = vunpack.c.l.s8.bf16 %v3563
        %v4122 = vunpack.c.l.s8.bf16 %v3564
        %v4123 = vunpack.c.h.s8.bf16 %v3559
        %v4124 = vunpack.c.h.s8.bf16 %v3560
        %v4125 = vunpack.c.h.s8.bf16 %v3561
        %v4126 = vunpack.c.h.s8.bf16 %v3562
        %v4127 = vunpack.c.h.s8.bf16 %v3563
        %v4128 = vunpack.c.h.s8.bf16 %v3564
        %v4129 = vunpack.c.l.s8.bf16 %v3565
        %v4130 = vunpack.c.l.s8.bf16 %v3566
        %v4131 = vunpack.c.l.s8.bf16 %v3567
        %v4132 = vunpack.c.l.s8.bf16 %v3568
        %v4133 = vunpack.c.l.s8.bf16 %v3569
        %v4134 = vunpack.c.l.s8.bf16 %v3570
        %v4135 = vunpack.c.h.s8.bf16 %v3565
        %v4136 = vunpack.c.h.s8.bf16 %v3566
        %v4137 = vunpack.c.h.s8.bf16 %v3567
        %v4138 = vunpack.c.h.s8.bf16 %v3568
        %v4139 = vunpack.c.h.s8.bf16 %v3569
        %v4140 = vunpack.c.h.s8.bf16 %v3570
        %v4141 = vunpack.c.l.s8.bf16 %v3571
        %v4142 = vunpack.c.l.s8.bf16 %v3572
        %v4143 = vunpack.c.l.s8.bf16 %v3573
        %v4144 = vunpack.c.l.s8.bf16 %v3574
        %v4145 = vunpack.c.l.s8.bf16 %v3575
        %v4146 = vunpack.c.l.s8.bf16 %v3576
        %v4147 = vunpack.c.h.s8.bf16 %v3571
        %v4148 = vunpack.c.h.s8.bf16 %v3572
        %v4149 = vunpack.c.h.s8.bf16 %v3573
        %v4150 = vunpack.c.h.s8.bf16 %v3574
        %v4151 = vunpack.c.h.s8.bf16 %v3575
        %v4152 = vunpack.c.h.s8.bf16 %v3576
        %v4153 = vld [vmem:[#allocation18] sm:$0xff]
        %v4154 = vld [vmem:[#allocation18 + $0x8] sm:$0xff]
        %v4155 = vld [vmem:[#allocation18 + $0x10] sm:$0xff]
        %v4156 = vld [vmem:[#allocation18 + $0x18] sm:$0xff]
        %v4157 = vld [vmem:[#allocation18 + $0x20] sm:$0xff]
        %v4158 = vld [vmem:[#allocation18 + $0x28] sm:$0xff]
        %v4159 = vld [vmem:[#allocation18 + $0x30] sm:$0xff]
        %v4160 = vld [vmem:[#allocation18 + $0x38] sm:$0xff]
        %v4161 = vld [vmem:[#allocation18 + $0x40] sm:$0xff]
        %v4162 = vld [vmem:[#allocation18 + $0x48] sm:$0xff]
        %v4163 = vld [vmem:[#allocation18 + $0x50] sm:$0xff]
        %v4164 = vld [vmem:[#allocation18 + $0x58] sm:$0xff]
        %v4165 = vld [vmem:[#allocation18 + $0x60] sm:$0xff]
        %v4166 = vld [vmem:[#allocation18 + $0x68] sm:$0xff]
        %v4167 = vld [vmem:[#allocation18 + $0x70] sm:$0xff]
        %v4168 = vld [vmem:[#allocation18 + $0x78] sm:$0xff]
        %v4169 = vld [vmem:[#allocation18 + $0x80] sm:$0xff]
        %v4170 = vld [vmem:[#allocation18 + $0x88] sm:$0xff]
        %v4171 = vld [vmem:[#allocation18 + $0x90] sm:$0xff]
        %v4172 = vld [vmem:[#allocation18 + $0x98] sm:$0xff]
        %v4173 = vld [vmem:[#allocation18 + $0xa0] sm:$0xff]
        %v4174 = vld [vmem:[#allocation18 + $0xa8] sm:$0xff]
        %v4175 = vld [vmem:[#allocation18 + $0xb0] sm:$0xff]
        %v4176 = vld [vmem:[#allocation18 + $0xb8] sm:$0xff]
        %v4177 = vpack.c.bf16 %v3253, %v3241
        %v4178 = vpack.c.bf16 %v3254, %v3242
        %v4179 = vpack.c.bf16 %v3255, %v3243
        %v4180 = vpack.c.bf16 %v3256, %v3244
        %v4181 = vpack.c.bf16 %v3257, %v3245
        %v4182 = vpack.c.bf16 %v3258, %v3246
        %v4183 = vpack.c.bf16 %v3259, %v3247
        %v4184 = vpack.c.bf16 %v3260, %v3248
        %v4185 = vpack.c.bf16 %v3261, %v3249
        %v4186 = vpack.c.bf16 %v3262, %v3250
        %v4187 = vpack.c.bf16 %v3263, %v3251
        %v4188 = vpack.c.bf16 %v3264, %v3252
        %v4189 = vpack.c.bf16 %v3277, %v3265
        %v4190 = vpack.c.bf16 %v3278, %v3266
        %v4191 = vpack.c.bf16 %v3279, %v3267
        %v4192 = vpack.c.bf16 %v3280, %v3268
        %v4193 = vpack.c.bf16 %v3281, %v3269
        %v4194 = vpack.c.bf16 %v3282, %v3270
        %v4195 = vpack.c.bf16 %v3283, %v3271
        %v4196 = vpack.c.bf16 %v3284, %v3272
        %v4197 = vpack.c.bf16 %v3285, %v3273
        %v4198 = vpack.c.bf16 %v3286, %v3274
        %v4199 = vpack.c.bf16 %v3287, %v3275
        %v4200 = vpack.c.bf16 %v3288, %v3276
        %4201 = vmatprep.subr.bf16.mxu0 %v3578
        %4202 = vmatpush1.bf16.msra.mxu0 %v3577
        %4203 = vmatprep.subr.bf16.mxu0 %v3584
        %4204 = vmatpush1.bf16.msra.mxu0 %v3583
        %4205 = vmatprep.subr.bf16.mxu0 %v3590
        %4206 = vmatpush1.bf16.msra.mxu0 %v3589
        %4207 = vmatprep.subr.bf16.mxu0 %v3596
        %4208 = vmatpush1.bf16.msra.mxu0 %v3595
        %4209 = vmatprep.subr.bf16.mxu0 %v3602
        %4210 = vmatpush1.bf16.msra.mxu0 %v3601
        %4211 = vmatprep.subr.bf16.mxu0 %v3608
        %4212 = vmatpush1.bf16.msra.mxu0 %v3607
        %4213 = vmatprep.subr.bf16.mxu0 %v3614
        %4214 = vmatpush1.bf16.msra.mxu0 %v3613
        %4215 = vmatprep.subr.bf16.mxu0 %v3620
        %4216 = vmatpush1.bf16.msra.mxu0 %v3619
        %4217 = vmatprep.subr.bf16.mxu0 %v3626
        %4218 = vmatpush1.bf16.msra.mxu0 %v3625
        %4219 = vmatprep.subr.bf16.mxu0 %v3632
        %4220 = vmatpush1.bf16.msra.mxu0 %v3631
        %4221 = vmatprep.subr.bf16.mxu0 %v3638
        %4222 = vmatpush1.bf16.msra.mxu0 %v3637
        %4223 = vmatprep.subr.bf16.mxu0 %v3644
        %4224 = vmatpush1.bf16.msra.mxu0 %v3643
        %4225 = vmatprep.subr.bf16.mxu0 %v3650
        %4226 = vmatpush1.bf16.msra.mxu0 %v3649
        %4227 = vmatprep.subr.bf16.mxu0 %v3656
        %4228 = vmatpush1.bf16.msra.mxu0 %v3655
        %4229 = vmatprep.subr.bf16.mxu0 %v3662
        %4230 = vmatpush1.bf16.msra.mxu0 %v3661
        %4231 = vmatprep.subr.bf16.mxu0 %v3668
        %4232 = vmatpush1.bf16.msra.mxu0 %v3667
        %4233 = vmatprep.mubr.bf16.mxu0 %v4178
        %4234 = vmatmul.mubr.bf16.gmra.mrb[0].mxu0 %v4177
        %v4235 = vpop.f32.mrb[0].mxu0
        %v4236 = vadd.f32 0.0, %v4235
        %v4237 = vpop.f32.mrb[0].mxu0
        %v4238 = vadd.f32 0.0, %v4237
        %v4239 = vpop.f32.mrb[0].mxu0
        %v4240 = vadd.f32 0.0, %v4239
        %v4241 = vpop.f32.mrb[0].mxu0
        %v4242 = vadd.f32 0.0, %v4241
        %4243 = vmatprep.mubr.bf16.mxu0 %v4190
        %4244 = vmatmul.mubr.bf16.gmra.mrb[0].mxu0 %v4189
        %v4245 = vpop.f32.mrb[0].mxu0
        %v4246 = vadd.f32 0.0, %v4245
        %v4247 = vpop.f32.mrb[0].mxu0
        %v4248 = vadd.f32 0.0, %v4247
        %v4249 = vpop.f32.mrb[0].mxu0
        %v4250 = vadd.f32 0.0, %v4249
        %v4251 = vpop.f32.mrb[0].mxu0
        %v4252 = vadd.f32 0.0, %v4251
        %4253 = vdwg.mxu0
        %4254 = vmatprep.subr.bf16.mxu0 %v3674
        %4255 = vmatpush1.bf16.msra.mxu0 %v3673
        %4256 = vmatprep.subr.bf16.mxu0 %v3680
        %4257 = vmatpush1.bf16.msra.mxu0 %v3679
        %4258 = vmatprep.subr.bf16.mxu0 %v3686
        %4259 = vmatpush1.bf16.msra.mxu0 %v3685
        %4260 = vmatprep.subr.bf16.mxu0 %v3692
        %4261 = vmatpush1.bf16.msra.mxu0 %v3691
        %4262 = vmatprep.subr.bf16.mxu0 %v3698
        %4263 = vmatpush1.bf16.msra.mxu0 %v3697
        %4264 = vmatprep.subr.bf16.mxu0 %v3704
        %4265 = vmatpush1.bf16.msra.mxu0 %v3703
        %4266 = vmatprep.subr.bf16.mxu0 %v3710
        %4267 = vmatpush1.bf16.msra.mxu0 %v3709
        %4268 = vmatprep.subr.bf16.mxu0 %v3716
        %4269 = vmatpush1.bf16.msra.mxu0 %v3715
        %4270 = vmatprep.subr.bf16.mxu0 %v3722
        %4271 = vmatpush1.bf16.msra.mxu0 %v3721
        %4272 = vmatprep.subr.bf16.mxu0 %v3728
        %4273 = vmatpush1.bf16.msra.mxu0 %v3727
        %4274 = vmatprep.subr.bf16.mxu0 %v3734
        %4275 = vmatpush1.bf16.msra.mxu0 %v3733
        %4276 = vmatprep.subr.bf16.mxu0 %v3740
        %4277 = vmatpush1.bf16.msra.mxu0 %v3739
        %4278 = vmatprep.subr.bf16.mxu0 %v3746
        %4279 = vmatpush1.bf16.msra.mxu0 %v3745
        %4280 = vmatprep.subr.bf16.mxu0 %v3752
        %4281 = vmatpush1.bf16.msra.mxu0 %v3751
        %4282 = vmatprep.subr.bf16.mxu0 %v3758
        %4283 = vmatpush1.bf16.msra.mxu0 %v3757
        %4284 = vmatprep.subr.bf16.mxu0 %v3764
        %4285 = vmatpush1.bf16.msra.mxu0 %v3763
        %4286 = vmatprep.mubr.bf16.mxu0 %v4180
        %4287 = vmatmul.mubr.bf16.gmra.mrb[0].mxu0 %v4179
        %v4288 = vpop.f32.mrb[0].mxu0
        %v4289 = vadd.f32 %v4236, %v4288
        %v4290 = vpop.f32.mrb[0].mxu0
        %v4291 = vadd.f32 %v4238, %v4290
        %v4292 = vpop.f32.mrb[0].mxu0
        %v4293 = vadd.f32 %v4240, %v4292
        %v4294 = vpop.f32.mrb[0].mxu0
        %v4295 = vadd.f32 %v4242, %v4294
        %4296 = vmatprep.mubr.bf16.mxu0 %v4192
        %4297 = vmatmul.mubr.bf16.gmra.mrb[0].mxu0 %v4191
        %v4298 = vpop.f32.mrb[0].mxu0
        %v4299 = vadd.f32 %v4246, %v4298
        %v4300 = vpop.f32.mrb[0].mxu0
        %v4301 = vadd.f32 %v4248, %v4300
        %v4302 = vpop.f32.mrb[0].mxu0
        %v4303 = vadd.f32 %v4250, %v4302
        %v4304 = vpop.f32.mrb[0].mxu0
        %v4305 = vadd.f32 %v4252, %v4304
        %4306 = vdwg.mxu0
        %4307 = vmatprep.subr.bf16.mxu0 %v3770
        %4308 = vmatpush1.bf16.msra.mxu0 %v3769
        %4309 = vmatprep.subr.bf16.mxu0 %v3776
        %4310 = vmatpush1.bf16.msra.mxu0 %v3775
        %4311 = vmatprep.subr.bf16.mxu0 %v3782
        %4312 = vmatpush1.bf16.msra.mxu0 %v3781
        %4313 = vmatprep.subr.bf16.mxu0 %v3788
        %4314 = vmatpush1.bf16.msra.mxu0 %v3787
        %4315 = vmatprep.subr.bf16.mxu0 %v3794
        %4316 = vmatpush1.bf16.msra.mxu0 %v3793
        %4317 = vmatprep.subr.bf16.mxu0 %v3800
        %4318 = vmatpush1.bf16.msra.mxu0 %v3799
        %4319 = vmatprep.subr.bf16.mxu0 %v3806
        %4320 = vmatpush1.bf16.msra.mxu0 %v3805
        %4321 = vmatprep.subr.bf16.mxu0 %v3812
        %4322 = vmatpush1.bf16.msra.mxu0 %v3811
        %4323 = vmatprep.subr.bf16.mxu0 %v3818
        %4324 = vmatpush1.bf16.msra.mxu0 %v3817
        %4325 = vmatprep.subr.bf16.mxu0 %v3824
        %4326 = vmatpush1.bf16.msra.mxu0 %v3823
        %4327 = vmatprep.subr.bf16.mxu0 %v3830
        %4328 = vmatpush1.bf16.msra.mxu0 %v3829
        %4329 = vmatprep.subr.bf16.mxu0 %v3836
        %4330 = vmatpush1.bf16.msra.mxu0 %v3835
        %4331 = vmatprep.subr.bf16.mxu0 %v3842
        %4332 = vmatpush1.bf16.msra.mxu0 %v3841
        %4333 = vmatprep.subr.bf16.mxu0 %v3848
        %4334 = vmatpush1.bf16.msra.mxu0 %v3847
        %4335 = vmatprep.subr.bf16.mxu0 %v3854
        %4336 = vmatpush1.bf16.msra.mxu0 %v3853
        %4337 = vmatprep.subr.bf16.mxu0 %v3860
        %4338 = vmatpush1.bf16.msra.mxu0 %v3859
        %4339 = vmatprep.mubr.bf16.mxu0 %v4182
        %4340 = vmatmul.mubr.bf16.gmra.mrb[0].mxu0 %v4181
        %v4341 = vpop.f32.mrb[0].mxu0
        %v4342 = vadd.f32 %v4289, %v4341
        %v4343 = vpop.f32.mrb[0].mxu0
        %v4344 = vadd.f32 %v4291, %v4343
        %v4345 = vpop.f32.mrb[0].mxu0
        %v4346 = vadd.f32 %v4293, %v4345
        %v4347 = vpop.f32.mrb[0].mxu0
        %v4348 = vadd.f32 %v4295, %v4347
        %4349 = vmatprep.mubr.bf16.mxu0 %v4194
        %4350 = vmatmul.mubr.bf16.gmra.mrb[0].mxu0 %v4193
        %v4351 = vpop.f32.mrb[0].mxu0
        %v4352 = vadd.f32 %v4299, %v4351
        %v4353 = vpop.f32.mrb[0].mxu0
        %v4354 = vadd.f32 %v4301, %v4353
        %v4355 = vpop.f32.mrb[0].mxu0
        %v4356 = vadd.f32 %v4303, %v4355
        %v4357 = vpop.f32.mrb[0].mxu0
        %v4358 = vadd.f32 %v4305, %v4357
        %4359 = vdwg.mxu0
        %4360 = vmatprep.subr.bf16.mxu0 %v3866
        %4361 = vmatpush1.bf16.msra.mxu0 %v3865
        %4362 = vmatprep.subr.bf16.mxu0 %v3872
        %4363 = vmatpush1.bf16.msra.mxu0 %v3871
        %4364 = vmatprep.subr.bf16.mxu0 %v3878
        %4365 = vmatpush1.bf16.msra.mxu0 %v3877
        %4366 = vmatprep.subr.bf16.mxu0 %v3884
        %4367 = vmatpush1.bf16.msra.mxu0 %v3883
        %4368 = vmatprep.subr.bf16.mxu0 %v3890
        %4369 = vmatpush1.bf16.msra.mxu0 %v3889
        %4370 = vmatprep.subr.bf16.mxu0 %v3896
        %4371 = vmatpush1.bf16.msra.mxu0 %v3895
        %4372 = vmatprep.subr.bf16.mxu0 %v3902
        %4373 = vmatpush1.bf16.msra.mxu0 %v3901
        %4374 = vmatprep.subr.bf16.mxu0 %v3908
        %4375 = vmatpush1.bf16.msra.mxu0 %v3907
        %4376 = vmatprep.subr.bf16.mxu0 %v3914
        %4377 = vmatpush1.bf16.msra.mxu0 %v3913
        %4378 = vmatprep.subr.bf16.mxu0 %v3920
        %4379 = vmatpush1.bf16.msra.mxu0 %v3919
        %4380 = vmatprep.subr.bf16.mxu0 %v3926
        %4381 = vmatpush1.bf16.msra.mxu0 %v3925
        %4382 = vmatprep.subr.bf16.mxu0 %v3932
        %4383 = vmatpush1.bf16.msra.mxu0 %v3931
        %4384 = vmatprep.subr.bf16.mxu0 %v3938
        %4385 = vmatpush1.bf16.msra.mxu0 %v3937
        %4386 = vmatprep.subr.bf16.mxu0 %v3944
        %4387 = vmatpush1.bf16.msra.mxu0 %v3943
        %4388 = vmatprep.subr.bf16.mxu0 %v3950
        %4389 = vmatpush1.bf16.msra.mxu0 %v3949
        %4390 = vmatprep.subr.bf16.mxu0 %v3956
        %4391 = vmatpush1.bf16.msra.mxu0 %v3955
        %4392 = vmatprep.mubr.bf16.mxu0 %v4184
        %4393 = vmatmul.mubr.bf16.gmra.mrb[0].mxu0 %v4183
        %v4394 = vpop.f32.mrb[0].mxu0
        %v4395 = vadd.f32 %v4342, %v4394
        %v4396 = vpop.f32.mrb[0].mxu0
        %v4397 = vadd.f32 %v4344, %v4396
        %v4398 = vpop.f32.mrb[0].mxu0
        %v4399 = vadd.f32 %v4346, %v4398
        %v4400 = vpop.f32.mrb[0].mxu0
        %v4401 = vadd.f32 %v4348, %v4400
        %4402 = vmatprep.mubr.bf16.mxu0 %v4196
        %4403 = vmatmul.mubr.bf16.gmra.mrb[0].mxu0 %v4195
        %v4404 = vpop.f32.mrb[0].mxu0
        %v4405 = vadd.f32 %v4352, %v4404
        %v4406 = vpop.f32.mrb[0].mxu0
        %v4407 = vadd.f32 %v4354, %v4406
        %v4408 = vpop.f32.mrb[0].mxu0
        %v4409 = vadd.f32 %v4356, %v4408
        %v4410 = vpop.f32.mrb[0].mxu0
        %v4411 = vadd.f32 %v4358, %v4410
        %4412 = vdwg.mxu0
        %4413 = vmatprep.subr.bf16.mxu0 %v3962
        %4414 = vmatpush1.bf16.msra.mxu0 %v3961
        %4415 = vmatprep.subr.bf16.mxu0 %v3968
        %4416 = vmatpush1.bf16.msra.mxu0 %v3967
        %4417 = vmatprep.subr.bf16.mxu0 %v3974
        %4418 = vmatpush1.bf16.msra.mxu0 %v3973
        %4419 = vmatprep.subr.bf16.mxu0 %v3980
        %4420 = vmatpush1.bf16.msra.mxu0 %v3979
        %4421 = vmatprep.subr.bf16.mxu0 %v3986
        %4422 = vmatpush1.bf16.msra.mxu0 %v3985
        %4423 = vmatprep.subr.bf16.mxu0 %v3992
        %4424 = vmatpush1.bf16.msra.mxu0 %v3991
        %4425 = vmatprep.subr.bf16.mxu0 %v3998
        %4426 = vmatpush1.bf16.msra.mxu0 %v3997
        %4427 = vmatprep.subr.bf16.mxu0 %v4004
        %4428 = vmatpush1.bf16.msra.mxu0 %v4003
        %4429 = vmatprep.subr.bf16.mxu0 %v4010
        %4430 = vmatpush1.bf16.msra.mxu0 %v4009
        %4431 = vmatprep.subr.bf16.mxu0 %v4016
        %4432 = vmatpush1.bf16.msra.mxu0 %v4015
        %4433 = vmatprep.subr.bf16.mxu0 %v4022
        %4434 = vmatpush1.bf16.msra.mxu0 %v4021
        %4435 = vmatprep.subr.bf16.mxu0 %v4028
        %4436 = vmatpush1.bf16.msra.mxu0 %v4027
        %4437 = vmatprep.subr.bf16.mxu0 %v4034
        %4438 = vmatpush1.bf16.msra.mxu0 %v4033
        %4439 = vmatprep.subr.bf16.mxu0 %v4040
        %4440 = vmatpush1.bf16.msra.mxu0 %v4039
        %4441 = vmatprep.subr.bf16.mxu0 %v4046
        %4442 = vmatpush1.bf16.msra.mxu0 %v4045
        %4443 = vmatprep.subr.bf16.mxu0 %v4052
        %4444 = vmatpush1.bf16.msra.mxu0 %v4051
        %4445 = vmatprep.mubr.bf16.mxu0 %v4186
        %4446 = vmatmul.mubr.bf16.gmra.mrb[0].mxu0 %v4185
        %v4447 = vpop.f32.mrb[0].mxu0
        %v4448 = vadd.f32 %v4395, %v4447
        %v4449 = vpop.f32.mrb[0].mxu0
        %v4450 = vadd.f32 %v4397, %v4449
        %v4451 = vpop.f32.mrb[0].mxu0
        %v4452 = vadd.f32 %v4399, %v4451
        %v4453 = vpop.f32.mrb[0].mxu0
        %v4454 = vadd.f32 %v4401, %v4453
        %4455 = vmatprep.mubr.bf16.mxu0 %v4198
        %4456 = vmatmul.mubr.bf16.gmra.mrb[0].mxu0 %v4197
        %v4457 = vpop.f32.mrb[0].mxu0
        %v4458 = vadd.f32 %v4405, %v4457
        %v4459 = vpop.f32.mrb[0].mxu0
        %v4460 = vadd.f32 %v4407, %v4459
        %v4461 = vpop.f32.mrb[0].mxu0
        %v4462 = vadd.f32 %v4409, %v4461
        %v4463 = vpop.f32.mrb[0].mxu0
        %v4464 = vadd.f32 %v4411, %v4463
        %4465 = vdwg.mxu0
        %4466 = vmatprep.subr.bf16.mxu0 %v4058
        %4467 = vmatpush1.bf16.msra.mxu0 %v4057
        %4468 = vmatprep.subr.bf16.mxu0 %v4064
        %4469 = vmatpush1.bf16.msra.mxu0 %v4063
        %4470 = vmatprep.subr.bf16.mxu0 %v4070
        %4471 = vmatpush1.bf16.msra.mxu0 %v4069
        %4472 = vmatprep.subr.bf16.mxu0 %v4076
        %4473 = vmatpush1.bf16.msra.mxu0 %v4075
        %4474 = vmatprep.subr.bf16.mxu0 %v4082
        %4475 = vmatpush1.bf16.msra.mxu0 %v4081
        %4476 = vmatprep.subr.bf16.mxu0 %v4088
        %4477 = vmatpush1.bf16.msra.mxu0 %v4087
        %4478 = vmatprep.subr.bf16.mxu0 %v4094
        %4479 = vmatpush1.bf16.msra.mxu0 %v4093
        %4480 = vmatprep.subr.bf16.mxu0 %v4100
        %4481 = vmatpush1.bf16.msra.mxu0 %v4099
        %4482 = vmatprep.subr.bf16.mxu0 %v4106
        %4483 = vmatpush1.bf16.msra.mxu0 %v4105
        %4484 = vmatprep.subr.bf16.mxu0 %v4112
        %4485 = vmatpush1.bf16.msra.mxu0 %v4111
        %4486 = vmatprep.subr.bf16.mxu0 %v4118
        %4487 = vmatpush1.bf16.msra.mxu0 %v4117
        %4488 = vmatprep.subr.bf16.mxu0 %v4124
        %4489 = vmatpush1.bf16.msra.mxu0 %v4123
        %4490 = vmatprep.subr.bf16.mxu0 %v4130
        %4491 = vmatpush1.bf16.msra.mxu0 %v4129
        %4492 = vmatprep.subr.bf16.mxu0 %v4136
        %4493 = vmatpush1.bf16.msra.mxu0 %v4135
        %4494 = vmatprep.subr.bf16.mxu0 %v4142
        %4495 = vmatpush1.bf16.msra.mxu0 %v4141
        %4496 = vmatprep.subr.bf16.mxu0 %v4148
        %4497 = vmatpush1.bf16.msra.mxu0 %v4147
        %4498 = vmatprep.mubr.bf16.mxu0 %v4188
        %4499 = vmatmul.mubr.bf16.gmra.mrb[0].mxu0 %v4187
        %v4500 = vpop.f32.mrb[0].mxu0
        %v4501 = vadd.f32 %v4448, %v4500
        %v4502 = vpop.f32.mrb[0].mxu0
        %v4503 = vadd.f32 %v4450, %v4502
        %v4504 = vpop.f32.mrb[0].mxu0
        %v4505 = vadd.f32 %v4452, %v4504
        %v4506 = vpop.f32.mrb[0].mxu0
        %v4507 = vadd.f32 %v4454, %v4506
        %4508 = vmatprep.mubr.bf16.mxu0 %v4200
        %4509 = vmatmul.mubr.bf16.gmra.mrb[0].mxu0 %v4199
        %v4510 = vpop.f32.mrb[0].mxu0
        %v4511 = vadd.f32 %v4458, %v4510
        %v4512 = vpop.f32.mrb[0].mxu0
        %v4513 = vadd.f32 %v4460, %v4512
        %v4514 = vpop.f32.mrb[0].mxu0
        %v4515 = vadd.f32 %v4462, %v4514
        %v4516 = vpop.f32.mrb[0].mxu0
        %v4517 = vadd.f32 %v4464, %v4516
        %4518 = vdwg.mxu0
        %4519 = vmatprep.subr.bf16.mxu0 %v3580
        %4520 = vmatpush1.bf16.msra.mxu0 %v3579
        %4521 = vmatprep.subr.bf16.mxu0 %v3586
        %4522 = vmatpush1.bf16.msra.mxu0 %v3585
        %4523 = vmatprep.subr.bf16.mxu0 %v3592
        %4524 = vmatpush1.bf16.msra.mxu0 %v3591
        %4525 = vmatprep.subr.bf16.mxu0 %v3598
        %4526 = vmatpush1.bf16.msra.mxu0 %v3597
        %4527 = vmatprep.subr.bf16.mxu0 %v3604
        %4528 = vmatpush1.bf16.msra.mxu0 %v3603
        %4529 = vmatprep.subr.bf16.mxu0 %v3610
        %4530 = vmatpush1.bf16.msra.mxu0 %v3609
        %4531 = vmatprep.subr.bf16.mxu0 %v3616
        %4532 = vmatpush1.bf16.msra.mxu0 %v3615
        %4533 = vmatprep.subr.bf16.mxu0 %v3622
        %4534 = vmatpush1.bf16.msra.mxu0 %v3621
        %4535 = vmatprep.subr.bf16.mxu0 %v3628
        %4536 = vmatpush1.bf16.msra.mxu0 %v3627
        %4537 = vmatprep.subr.bf16.mxu0 %v3634
        %4538 = vmatpush1.bf16.msra.mxu0 %v3633
        %4539 = vmatprep.subr.bf16.mxu0 %v3640
        %4540 = vmatpush1.bf16.msra.mxu0 %v3639
        %4541 = vmatprep.subr.bf16.mxu0 %v3646
        %4542 = vmatpush1.bf16.msra.mxu0 %v3645
        %4543 = vmatprep.subr.bf16.mxu0 %v3652
        %4544 = vmatpush1.bf16.msra.mxu0 %v3651
        %4545 = vmatprep.subr.bf16.mxu0 %v3658
        %4546 = vmatpush1.bf16.msra.mxu0 %v3657
        %4547 = vmatprep.subr.bf16.mxu0 %v3664
        %4548 = vmatpush1.bf16.msra.mxu0 %v3663
        %4549 = vmatprep.subr.bf16.mxu0 %v3670
        %4550 = vmatpush1.bf16.msra.mxu0 %v3669
        %4551 = vmatprep.mubr.bf16.mxu0 %v4178
        %4552 = vmatmul.mubr.bf16.gmra.mrb[0].mxu0 %v4177
        %v4553 = vpop.f32.mrb[0].mxu0
        %v4554 = vadd.f32 0.0, %v4553
        %v4555 = vpop.f32.mrb[0].mxu0
        %v4556 = vadd.f32 0.0, %v4555
        %v4557 = vpop.f32.mrb[0].mxu0
        %v4558 = vadd.f32 0.0, %v4557
        %v4559 = vpop.f32.mrb[0].mxu0
        %v4560 = vadd.f32 0.0, %v4559
        %4561 = vmatprep.mubr.bf16.mxu0 %v4190
        %4562 = vmatmul.mubr.bf16.gmra.mrb[0].mxu0 %v4189
        %v4563 = vpop.f32.mrb[0].mxu0
        %v4564 = vadd.f32 0.0, %v4563
        %v4565 = vpop.f32.mrb[0].mxu0
        %v4566 = vadd.f32 0.0, %v4565
        %v4567 = vpop.f32.mrb[0].mxu0
        %v4568 = vadd.f32 0.0, %v4567
        %v4569 = vpop.f32.mrb[0].mxu0
        %v4570 = vadd.f32 0.0, %v4569
        %4571 = vdwg.mxu0
        %4572 = vmatprep.subr.bf16.mxu0 %v3676
        %4573 = vmatpush1.bf16.msra.mxu0 %v3675
        %4574 = vmatprep.subr.bf16.mxu0 %v3682
        %4575 = vmatpush1.bf16.msra.mxu0 %v3681
        %4576 = vmatprep.subr.bf16.mxu0 %v3688
        %4577 = vmatpush1.bf16.msra.mxu0 %v3687
        %4578 = vmatprep.subr.bf16.mxu0 %v3694
        %4579 = vmatpush1.bf16.msra.mxu0 %v3693
        %4580 = vmatprep.subr.bf16.mxu0 %v3700
        %4581 = vmatpush1.bf16.msra.mxu0 %v3699
        %4582 = vmatprep.subr.bf16.mxu0 %v3706
        %4583 = vmatpush1.bf16.msra.mxu0 %v3705
        %4584 = vmatprep.subr.bf16.mxu0 %v3712
        %4585 = vmatpush1.bf16.msra.mxu0 %v3711
        %4586 = vmatprep.subr.bf16.mxu0 %v3718
        %4587 = vmatpush1.bf16.msra.mxu0 %v3717
        %4588 = vmatprep.subr.bf16.mxu0 %v3724
        %4589 = vmatpush1.bf16.msra.mxu0 %v3723
        %4590 = vmatprep.subr.bf16.mxu0 %v3730
        %4591 = vmatpush1.bf16.msra.mxu0 %v3729
        %4592 = vmatprep.subr.bf16.mxu0 %v3736
        %4593 = vmatpush1.bf16.msra.mxu0 %v3735
        %4594 = vmatprep.subr.bf16.mxu0 %v3742
        %4595 = vmatpush1.bf16.msra.mxu0 %v3741
        %4596 = vmatprep.subr.bf16.mxu0 %v3748
        %4597 = vmatpush1.bf16.msra.mxu0 %v3747
        %4598 = vmatprep.subr.bf16.mxu0 %v3754
        %4599 = vmatpush1.bf16.msra.mxu0 %v3753
        %4600 = vmatprep.subr.bf16.mxu0 %v3760
        %4601 = vmatpush1.bf16.msra.mxu0 %v3759
        %4602 = vmatprep.subr.bf16.mxu0 %v3766
        %4603 = vmatpush1.bf16.msra.mxu0 %v3765
        %4604 = vmatprep.mubr.bf16.mxu0 %v4180
        %4605 = vmatmul.mubr.bf16.gmra.mrb[0].mxu0 %v4179
        %v4606 = vpop.f32.mrb[0].mxu0
        %v4607 = vadd.f32 %v4554, %v4606
        %v4608 = vpop.f32.mrb[0].mxu0
        %v4609 = vadd.f32 %v4556, %v4608
        %v4610 = vpop.f32.mrb[0].mxu0
        %v4611 = vadd.f32 %v4558, %v4610
        %v4612 = vpop.f32.mrb[0].mxu0
        %v4613 = vadd.f32 %v4560, %v4612
        %4614 = vmatprep.mubr.bf16.mxu0 %v4192
        %4615 = vmatmul.mubr.bf16.gmra.mrb[0].mxu0 %v4191
        %v4616 = vpop.f32.mrb[0].mxu0
        %v4617 = vadd.f32 %v4564, %v4616
        %v4618 = vpop.f32.mrb[0].mxu0
        %v4619 = vadd.f32 %v4566, %v4618
        %v4620 = vpop.f32.mrb[0].mxu0
        %v4621 = vadd.f32 %v4568, %v4620
        %v4622 = vpop.f32.mrb[0].mxu0
        %v4623 = vadd.f32 %v4570, %v4622
        %4624 = vdwg.mxu0
        %4625 = vmatprep.subr.bf16.mxu0 %v3772
        %4626 = vmatpush1.bf16.msra.mxu0 %v3771
        %4627 = vmatprep.subr.bf16.mxu0 %v3778
        %4628 = vmatpush1.bf16.msra.mxu0 %v3777
        %4629 = vmatprep.subr.bf16.mxu0 %v3784
        %4630 = vmatpush1.bf16.msra.mxu0 %v3783
        %4631 = vmatprep.subr.bf16.mxu0 %v3790
        %4632 = vmatpush1.bf16.msra.mxu0 %v3789
        %4633 = vmatprep.subr.bf16.mxu0 %v3796
        %4634 = vmatpush1.bf16.msra.mxu0 %v3795
        %4635 = vmatprep.subr.bf16.mxu0 %v3802
        %4636 = vmatpush1.bf16.msra.mxu0 %v3801
        %4637 = vmatprep.subr.bf16.mxu0 %v3808
        %4638 = vmatpush1.bf16.msra.mxu0 %v3807
        %4639 = vmatprep.subr.bf16.mxu0 %v3814
        %4640 = vmatpush1.bf16.msra.mxu0 %v3813
        %4641 = vmatprep.subr.bf16.mxu0 %v3820
        %4642 = vmatpush1.bf16.msra.mxu0 %v3819
        %4643 = vmatprep.subr.bf16.mxu0 %v3826
        %4644 = vmatpush1.bf16.msra.mxu0 %v3825
        %4645 = vmatprep.subr.bf16.mxu0 %v3832
        %4646 = vmatpush1.bf16.msra.mxu0 %v3831
        %4647 = vmatprep.subr.bf16.mxu0 %v3838
        %4648 = vmatpush1.bf16.msra.mxu0 %v3837
        %4649 = vmatprep.subr.bf16.mxu0 %v3844
        %4650 = vmatpush1.bf16.msra.mxu0 %v3843
        %4651 = vmatprep.subr.bf16.mxu0 %v3850
        %4652 = vmatpush1.bf16.msra.mxu0 %v3849
        %4653 = vmatprep.subr.bf16.mxu0 %v3856
        %4654 = vmatpush1.bf16.msra.mxu0 %v3855
        %4655 = vmatprep.subr.bf16.mxu0 %v3862
        %4656 = vmatpush1.bf16.msra.mxu0 %v3861
        %4657 = vmatprep.mubr.bf16.mxu0 %v4182
        %4658 = vmatmul.mubr.bf16.gmra.mrb[0].mxu0 %v4181
        %v4659 = vpop.f32.mrb[0].mxu0
        %v4660 = vadd.f32 %v4607, %v4659
        %v4661 = vpop.f32.mrb[0].mxu0
        %v4662 = vadd.f32 %v4609, %v4661
        %v4663 = vpop.f32.mrb[0].mxu0
        %v4664 = vadd.f32 %v4611, %v4663
        %v4665 = vpop.f32.mrb[0].mxu0
        %v4666 = vadd.f32 %v4613, %v4665
        %4667 = vmatprep.mubr.bf16.mxu0 %v4194
        %4668 = vmatmul.mubr.bf16.gmra.mrb[0].mxu0 %v4193
        %v4669 = vpop.f32.mrb[0].mxu0
        %v4670 = vadd.f32 %v4617, %v4669
        %v4671 = vpop.f32.mrb[0].mxu0
        %v4672 = vadd.f32 %v4619, %v4671
        %v4673 = vpop.f32.mrb[0].mxu0
        %v4674 = vadd.f32 %v4621, %v4673
        %v4675 = vpop.f32.mrb[0].mxu0
        %v4676 = vadd.f32 %v4623, %v4675
        %4677 = vdwg.mxu0
        %4678 = vmatprep.subr.bf16.mxu0 %v3868
        %4679 = vmatpush1.bf16.msra.mxu0 %v3867
        %4680 = vmatprep.subr.bf16.mxu0 %v3874
        %4681 = vmatpush1.bf16.msra.mxu0 %v3873
        %4682 = vmatprep.subr.bf16.mxu0 %v3880
        %4683 = vmatpush1.bf16.msra.mxu0 %v3879
        %4684 = vmatprep.subr.bf16.mxu0 %v3886
        %4685 = vmatpush1.bf16.msra.mxu0 %v3885
        %4686 = vmatprep.subr.bf16.mxu0 %v3892
        %4687 = vmatpush1.bf16.msra.mxu0 %v3891
        %4688 = vmatprep.subr.bf16.mxu0 %v3898
        %4689 = vmatpush1.bf16.msra.mxu0 %v3897
        %4690 = vmatprep.subr.bf16.mxu0 %v3904
        %4691 = vmatpush1.bf16.msra.mxu0 %v3903
        %4692 = vmatprep.subr.bf16.mxu0 %v3910
        %4693 = vmatpush1.bf16.msra.mxu0 %v3909
        %4694 = vmatprep.subr.bf16.mxu0 %v3916
        %4695 = vmatpush1.bf16.msra.mxu0 %v3915
        %4696 = vmatprep.subr.bf16.mxu0 %v3922
        %4697 = vmatpush1.bf16.msra.mxu0 %v3921
        %4698 = vmatprep.subr.bf16.mxu0 %v3928
        %4699 = vmatpush1.bf16.msra.mxu0 %v3927
        %4700 = vmatprep.subr.bf16.mxu0 %v3934
        %4701 = vmatpush1.bf16.msra.mxu0 %v3933
        %4702 = vmatprep.subr.bf16.mxu0 %v3940
        %4703 = vmatpush1.bf16.msra.mxu0 %v3939
        %4704 = vmatprep.subr.bf16.mxu0 %v3946
        %4705 = vmatpush1.bf16.msra.mxu0 %v3945
        %4706 = vmatprep.subr.bf16.mxu0 %v3952
        %4707 = vmatpush1.bf16.msra.mxu0 %v3951
        %4708 = vmatprep.subr.bf16.mxu0 %v3958
        %4709 = vmatpush1.bf16.msra.mxu0 %v3957
        %4710 = vmatprep.mubr.bf16.mxu0 %v4184
        %4711 = vmatmul.mubr.bf16.gmra.mrb[0].mxu0 %v4183
        %v4712 = vpop.f32.mrb[0].mxu0
        %v4713 = vadd.f32 %v4660, %v4712
        %v4714 = vpop.f32.mrb[0].mxu0
        %v4715 = vadd.f32 %v4662, %v4714
        %v4716 = vpop.f32.mrb[0].mxu0
        %v4717 = vadd.f32 %v4664, %v4716
        %v4718 = vpop.f32.mrb[0].mxu0
        %v4719 = vadd.f32 %v4666, %v4718
        %4720 = vmatprep.mubr.bf16.mxu0 %v4196
        %4721 = vmatmul.mubr.bf16.gmra.mrb[0].mxu0 %v4195
        %v4722 = vpop.f32.mrb[0].mxu0
        %v4723 = vadd.f32 %v4670, %v4722
        %v4724 = vpop.f32.mrb[0].mxu0
        %v4725 = vadd.f32 %v4672, %v4724
        %v4726 = vpop.f32.mrb[0].mxu0
        %v4727 = vadd.f32 %v4674, %v4726
        %v4728 = vpop.f32.mrb[0].mxu0
        %v4729 = vadd.f32 %v4676, %v4728
        %4730 = vdwg.mxu0
        %4731 = vmatprep.subr.bf16.mxu0 %v3964
        %4732 = vmatpush1.bf16.msra.mxu0 %v3963
        %4733 = vmatprep.subr.bf16.mxu0 %v3970
        %4734 = vmatpush1.bf16.msra.mxu0 %v3969
        %4735 = vmatprep.subr.bf16.mxu0 %v3976
        %4736 = vmatpush1.bf16.msra.mxu0 %v3975
        %4737 = vmatprep.subr.bf16.mxu0 %v3982
        %4738 = vmatpush1.bf16.msra.mxu0 %v3981
        %4739 = vmatprep.subr.bf16.mxu0 %v3988
        %4740 = vmatpush1.bf16.msra.mxu0 %v3987
        %4741 = vmatprep.subr.bf16.mxu0 %v3994
        %4742 = vmatpush1.bf16.msra.mxu0 %v3993
        %4743 = vmatprep.subr.bf16.mxu0 %v4000
        %4744 = vmatpush1.bf16.msra.mxu0 %v3999
        %4745 = vmatprep.subr.bf16.mxu0 %v4006
        %4746 = vmatpush1.bf16.msra.mxu0 %v4005
        %4747 = vmatprep.subr.bf16.mxu0 %v4012
        %4748 = vmatpush1.bf16.msra.mxu0 %v4011
        %4749 = vmatprep.subr.bf16.mxu0 %v4018
        %4750 = vmatpush1.bf16.msra.mxu0 %v4017
        %4751 = vmatprep.subr.bf16.mxu0 %v4024
        %4752 = vmatpush1.bf16.msra.mxu0 %v4023
        %4753 = vmatprep.subr.bf16.mxu0 %v4030
        %4754 = vmatpush1.bf16.msra.mxu0 %v4029
        %4755 = vmatprep.subr.bf16.mxu0 %v4036
        %4756 = vmatpush1.bf16.msra.mxu0 %v4035
        %4757 = vmatprep.subr.bf16.mxu0 %v4042
        %4758 = vmatpush1.bf16.msra.mxu0 %v4041
        %4759 = vmatprep.subr.bf16.mxu0 %v4048
        %4760 = vmatpush1.bf16.msra.mxu0 %v4047
        %4761 = vmatprep.subr.bf16.mxu0 %v4054
        %4762 = vmatpush1.bf16.msra.mxu0 %v4053
        %4763 = vmatprep.mubr.bf16.mxu0 %v4186
        %4764 = vmatmul.mubr.bf16.gmra.mrb[0].mxu0 %v4185
        %v4765 = vpop.f32.mrb[0].mxu0
        %v4766 = vadd.f32 %v4713, %v4765
        %v4767 = vpop.f32.mrb[0].mxu0
        %v4768 = vadd.f32 %v4715, %v4767
        %v4769 = vpop.f32.mrb[0].mxu0
        %v4770 = vadd.f32 %v4717, %v4769
        %v4771 = vpop.f32.mrb[0].mxu0
        %v4772 = vadd.f32 %v4719, %v4771
        %4773 = vmatprep.mubr.bf16.mxu0 %v4198
        %4774 = vmatmul.mubr.bf16.gmra.mrb[0].mxu0 %v4197
        %v4775 = vpop.f32.mrb[0].mxu0
        %v4776 = vadd.f32 %v4723, %v4775
        %v4777 = vpop.f32.mrb[0].mxu0
        %v4778 = vadd.f32 %v4725, %v4777
        %v4779 = vpop.f32.mrb[0].mxu0
        %v4780 = vadd.f32 %v4727, %v4779
        %v4781 = vpop.f32.mrb[0].mxu0
        %v4782 = vadd.f32 %v4729, %v4781
        %4783 = vdwg.mxu0
        %4784 = vmatprep.subr.bf16.mxu0 %v4060
        %4785 = vmatpush1.bf16.msra.mxu0 %v4059
        %4786 = vmatprep.subr.bf16.mxu0 %v4066
        %4787 = vmatpush1.bf16.msra.mxu0 %v4065
        %4788 = vmatprep.subr.bf16.mxu0 %v4072
        %4789 = vmatpush1.bf16.msra.mxu0 %v4071
        %4790 = vmatprep.subr.bf16.mxu0 %v4078
        %4791 = vmatpush1.bf16.msra.mxu0 %v4077
        %4792 = vmatprep.subr.bf16.mxu0 %v4084
        %4793 = vmatpush1.bf16.msra.mxu0 %v4083
        %4794 = vmatprep.subr.bf16.mxu0 %v4090
        %4795 = vmatpush1.bf16.msra.mxu0 %v4089
        %4796 = vmatprep.subr.bf16.mxu0 %v4096
        %4797 = vmatpush1.bf16.msra.mxu0 %v4095
        %4798 = vmatprep.subr.bf16.mxu0 %v4102
        %4799 = vmatpush1.bf16.msra.mxu0 %v4101
        %4800 = vmatprep.subr.bf16.mxu0 %v4108
        %4801 = vmatpush1.bf16.msra.mxu0 %v4107
        %4802 = vmatprep.subr.bf16.mxu0 %v4114
        %4803 = vmatpush1.bf16.msra.mxu0 %v4113
        %4804 = vmatprep.subr.bf16.mxu0 %v4120
        %4805 = vmatpush1.bf16.msra.mxu0 %v4119
        %4806 = vmatprep.subr.bf16.mxu0 %v4126
        %4807 = vmatpush1.bf16.msra.mxu0 %v4125
        %4808 = vmatprep.subr.bf16.mxu0 %v4132
        %4809 = vmatpush1.bf16.msra.mxu0 %v4131
        %4810 = vmatprep.subr.bf16.mxu0 %v4138
        %4811 = vmatpush1.bf16.msra.mxu0 %v4137
        %4812 = vmatprep.subr.bf16.mxu0 %v4144
        %4813 = vmatpush1.bf16.msra.mxu0 %v4143
        %4814 = vmatprep.subr.bf16.mxu0 %v4150
        %4815 = vmatpush1.bf16.msra.mxu0 %v4149
        %4816 = vmatprep.mubr.bf16.mxu0 %v4188
        %4817 = vmatmul.mubr.bf16.gmra.mrb[0].mxu0 %v4187
        %v4818 = vpop.f32.mrb[0].mxu0
        %v4819 = vadd.f32 %v4766, %v4818
        %v4820 = vpop.f32.mrb[0].mxu0
        %v4821 = vadd.f32 %v4768, %v4820
        %v4822 = vpop.f32.mrb[0].mxu0
        %v4823 = vadd.f32 %v4770, %v4822
        %v4824 = vpop.f32.mrb[0].mxu0
        %v4825 = vadd.f32 %v4772, %v4824
        %4826 = vmatprep.mubr.bf16.mxu0 %v4200
        %4827 = vmatmul.mubr.bf16.gmra.mrb[0].mxu0 %v4199
        %v4828 = vpop.f32.mrb[0].mxu0
        %v4829 = vadd.f32 %v4776, %v4828
        %v4830 = vpop.f32.mrb[0].mxu0
        %v4831 = vadd.f32 %v4778, %v4830
        %v4832 = vpop.f32.mrb[0].mxu0
        %v4833 = vadd.f32 %v4780, %v4832
        %v4834 = vpop.f32.mrb[0].mxu0
        %v4835 = vadd.f32 %v4782, %v4834
        %4836 = vdwg.mxu0
        %4837 = vmatprep.subr.bf16.mxu0 %v3582
        %4838 = vmatpush1.bf16.msra.mxu0 %v3581
        %4839 = vmatprep.subr.bf16.mxu0 %v3588
        %4840 = vmatpush1.bf16.msra.mxu0 %v3587
        %4841 = vmatprep.subr.bf16.mxu0 %v3594
        %4842 = vmatpush1.bf16.msra.mxu0 %v3593
        %4843 = vmatprep.subr.bf16.mxu0 %v3600
        %4844 = vmatpush1.bf16.msra.mxu0 %v3599
        %4845 = vmatprep.subr.bf16.mxu0 %v3606
        %4846 = vmatpush1.bf16.msra.mxu0 %v3605
        %4847 = vmatprep.subr.bf16.mxu0 %v3612
        %4848 = vmatpush1.bf16.msra.mxu0 %v3611
        %4849 = vmatprep.subr.bf16.mxu0 %v3618
        %4850 = vmatpush1.bf16.msra.mxu0 %v3617
        %4851 = vmatprep.subr.bf16.mxu0 %v3624
        %4852 = vmatpush1.bf16.msra.mxu0 %v3623
        %4853 = vmatprep.subr.bf16.mxu0 %v3630
        %4854 = vmatpush1.bf16.msra.mxu0 %v3629
        %4855 = vmatprep.subr.bf16.mxu0 %v3636
        %4856 = vmatpush1.bf16.msra.mxu0 %v3635
        %4857 = vmatprep.subr.bf16.mxu0 %v3642
        %4858 = vmatpush1.bf16.msra.mxu0 %v3641
        %4859 = vmatprep.subr.bf16.mxu0 %v3648
        %4860 = vmatpush1.bf16.msra.mxu0 %v3647
        %4861 = vmatprep.subr.bf16.mxu0 %v3654
        %4862 = vmatpush1.bf16.msra.mxu0 %v3653
        %4863 = vmatprep.subr.bf16.mxu0 %v3660
        %4864 = vmatpush1.bf16.msra.mxu0 %v3659
        %4865 = vmatprep.subr.bf16.mxu0 %v3666
        %4866 = vmatpush1.bf16.msra.mxu0 %v3665
        %4867 = vmatprep.subr.bf16.mxu0 %v3672
        %4868 = vmatpush1.bf16.msra.mxu0 %v3671
        %4869 = vmatprep.mubr.bf16.mxu0 %v4178
        %4870 = vmatmul.mubr.bf16.gmra.mrb[0].mxu0 %v4177
        %v4871 = vpop.f32.mrb[0].mxu0
        %v4872 = vadd.f32 0.0, %v4871
        %v4873 = vpop.f32.mrb[0].mxu0
        %v4874 = vadd.f32 0.0, %v4873
        %v4875 = vpop.f32.mrb[0].mxu0
        %v4876 = vadd.f32 0.0, %v4875
        %v4877 = vpop.f32.mrb[0].mxu0
        %v4878 = vadd.f32 0.0, %v4877
        %4879 = vmatprep.mubr.bf16.mxu0 %v4190
        %4880 = vmatmul.mubr.bf16.gmra.mrb[0].mxu0 %v4189
        %v4881 = vpop.f32.mrb[0].mxu0
        %v4882 = vadd.f32 0.0, %v4881
        %v4883 = vpop.f32.mrb[0].mxu0
        %v4884 = vadd.f32 0.0, %v4883
        %v4885 = vpop.f32.mrb[0].mxu0
        %v4886 = vadd.f32 0.0, %v4885
        %v4887 = vpop.f32.mrb[0].mxu0
        %v4888 = vadd.f32 0.0, %v4887
        %4889 = vdwg.mxu0
        %4890 = vmatprep.subr.bf16.mxu0 %v3678
        %4891 = vmatpush1.bf16.msra.mxu0 %v3677
        %4892 = vmatprep.subr.bf16.mxu0 %v3684
        %4893 = vmatpush1.bf16.msra.mxu0 %v3683
        %4894 = vmatprep.subr.bf16.mxu0 %v3690
        %4895 = vmatpush1.bf16.msra.mxu0 %v3689
        %4896 = vmatprep.subr.bf16.mxu0 %v3696
        %4897 = vmatpush1.bf16.msra.mxu0 %v3695
        %4898 = vmatprep.subr.bf16.mxu0 %v3702
        %4899 = vmatpush1.bf16.msra.mxu0 %v3701
        %4900 = vmatprep.subr.bf16.mxu0 %v3708
        %4901 = vmatpush1.bf16.msra.mxu0 %v3707
        %4902 = vmatprep.subr.bf16.mxu0 %v3714
        %4903 = vmatpush1.bf16.msra.mxu0 %v3713
        %4904 = vmatprep.subr.bf16.mxu0 %v3720
        %4905 = vmatpush1.bf16.msra.mxu0 %v3719
        %4906 = vmatprep.subr.bf16.mxu0 %v3726
        %4907 = vmatpush1.bf16.msra.mxu0 %v3725
        %4908 = vmatprep.subr.bf16.mxu0 %v3732
        %4909 = vmatpush1.bf16.msra.mxu0 %v3731
        %4910 = vmatprep.subr.bf16.mxu0 %v3738
        %4911 = vmatpush1.bf16.msra.mxu0 %v3737
        %4912 = vmatprep.subr.bf16.mxu0 %v3744
        %4913 = vmatpush1.bf16.msra.mxu0 %v3743
        %4914 = vmatprep.subr.bf16.mxu0 %v3750
        %4915 = vmatpush1.bf16.msra.mxu0 %v3749
        %4916 = vmatprep.subr.bf16.mxu0 %v3756
        %4917 = vmatpush1.bf16.msra.mxu0 %v3755
        %4918 = vmatprep.subr.bf16.mxu0 %v3762
        %4919 = vmatpush1.bf16.msra.mxu0 %v3761
        %4920 = vmatprep.subr.bf16.mxu0 %v3768
        %4921 = vmatpush1.bf16.msra.mxu0 %v3767
        %4922 = vmatprep.mubr.bf16.mxu0 %v4180
        %4923 = vmatmul.mubr.bf16.gmra.mrb[0].mxu0 %v4179
        %v4924 = vpop.f32.mrb[0].mxu0
        %v4925 = vadd.f32 %v4872, %v4924
        %v4926 = vpop.f32.mrb[0].mxu0
        %v4927 = vadd.f32 %v4874, %v4926
        %v4928 = vpop.f32.mrb[0].mxu0
        %v4929 = vadd.f32 %v4876, %v4928
        %v4930 = vpop.f32.mrb[0].mxu0
        %v4931 = vadd.f32 %v4878, %v4930
        %4932 = vmatprep.mubr.bf16.mxu0 %v4192
        %4933 = vmatmul.mubr.bf16.gmra.mrb[0].mxu0 %v4191
        %v4934 = vpop.f32.mrb[0].mxu0
        %v4935 = vadd.f32 %v4882, %v4934
        %v4936 = vpop.f32.mrb[0].mxu0
        %v4937 = vadd.f32 %v4884, %v4936
        %v4938 = vpop.f32.mrb[0].mxu0
        %v4939 = vadd.f32 %v4886, %v4938
        %v4940 = vpop.f32.mrb[0].mxu0
        %v4941 = vadd.f32 %v4888, %v4940
        %4942 = vdwg.mxu0
        %4943 = vmatprep.subr.bf16.mxu0 %v3774
        %4944 = vmatpush1.bf16.msra.mxu0 %v3773
        %4945 = vmatprep.subr.bf16.mxu0 %v3780
        %4946 = vmatpush1.bf16.msra.mxu0 %v3779
        %4947 = vmatprep.subr.bf16.mxu0 %v3786
        %4948 = vmatpush1.bf16.msra.mxu0 %v3785
        %4949 = vmatprep.subr.bf16.mxu0 %v3792
        %4950 = vmatpush1.bf16.msra.mxu0 %v3791
        %4951 = vmatprep.subr.bf16.mxu0 %v3798
        %4952 = vmatpush1.bf16.msra.mxu0 %v3797
        %4953 = vmatprep.subr.bf16.mxu0 %v3804
        %4954 = vmatpush1.bf16.msra.mxu0 %v3803
        %4955 = vmatprep.subr.bf16.mxu0 %v3810
        %4956 = vmatpush1.bf16.msra.mxu0 %v3809
        %4957 = vmatprep.subr.bf16.mxu0 %v3816
        %4958 = vmatpush1.bf16.msra.mxu0 %v3815
        %4959 = vmatprep.subr.bf16.mxu0 %v3822
        %4960 = vmatpush1.bf16.msra.mxu0 %v3821
        %4961 = vmatprep.subr.bf16.mxu0 %v3828
        %4962 = vmatpush1.bf16.msra.mxu0 %v3827
        %4963 = vmatprep.subr.bf16.mxu0 %v3834
        %4964 = vmatpush1.bf16.msra.mxu0 %v3833
        %4965 = vmatprep.subr.bf16.mxu0 %v3840
        %4966 = vmatpush1.bf16.msra.mxu0 %v3839
        %4967 = vmatprep.subr.bf16.mxu0 %v3846
        %4968 = vmatpush1.bf16.msra.mxu0 %v3845
        %4969 = vmatprep.subr.bf16.mxu0 %v3852
        %4970 = vmatpush1.bf16.msra.mxu0 %v3851
        %4971 = vmatprep.subr.bf16.mxu0 %v3858
        %4972 = vmatpush1.bf16.msra.mxu0 %v3857
        %4973 = vmatprep.subr.bf16.mxu0 %v3864
        %4974 = vmatpush1.bf16.msra.mxu0 %v3863
        %4975 = vmatprep.mubr.bf16.mxu0 %v4182
        %4976 = vmatmul.mubr.bf16.gmra.mrb[0].mxu0 %v4181
        %v4977 = vpop.f32.mrb[0].mxu0
        %v4978 = vadd.f32 %v4925, %v4977
        %v4979 = vpop.f32.mrb[0].mxu0
        %v4980 = vadd.f32 %v4927, %v4979
        %v4981 = vpop.f32.mrb[0].mxu0
        %v4982 = vadd.f32 %v4929, %v4981
        %v4983 = vpop.f32.mrb[0].mxu0
        %v4984 = vadd.f32 %v4931, %v4983
        %4985 = vmatprep.mubr.bf16.mxu0 %v4194
        %4986 = vmatmul.mubr.bf16.gmra.mrb[0].mxu0 %v4193
        %v4987 = vpop.f32.mrb[0].mxu0
        %v4988 = vadd.f32 %v4935, %v4987
        %v4989 = vpop.f32.mrb[0].mxu0
        %v4990 = vadd.f32 %v4937, %v4989
        %v4991 = vpop.f32.mrb[0].mxu0
        %v4992 = vadd.f32 %v4939, %v4991
        %v4993 = vpop.f32.mrb[0].mxu0
        %v4994 = vadd.f32 %v4941, %v4993
        %4995 = vdwg.mxu0
        %4996 = vmatprep.subr.bf16.mxu0 %v3870
        %4997 = vmatpush1.bf16.msra.mxu0 %v3869
        %4998 = vmatprep.subr.bf16.mxu0 %v3876
        %4999 = vmatpush1.bf16.msra.mxu0 %v3875
        %5000 = vmatprep.subr.bf16.mxu0 %v3882
        %5001 = vmatpush1.bf16.msra.mxu0 %v3881
        %5002 = vmatprep.subr.bf16.mxu0 %v3888
        %5003 = vmatpush1.bf16.msra.mxu0 %v3887
        %5004 = vmatprep.subr.bf16.mxu0 %v3894
        %5005 = vmatpush1.bf16.msra.mxu0 %v3893
        %5006 = vmatprep.subr.bf16.mxu0 %v3900
        %5007 = vmatpush1.bf16.msra.mxu0 %v3899
        %5008 = vmatprep.subr.bf16.mxu0 %v3906
        %5009 = vmatpush1.bf16.msra.mxu0 %v3905
        %5010 = vmatprep.subr.bf16.mxu0 %v3912
        %5011 = vmatpush1.bf16.msra.mxu0 %v3911
        %5012 = vmatprep.subr.bf16.mxu0 %v3918
        %5013 = vmatpush1.bf16.msra.mxu0 %v3917
        %5014 = vmatprep.subr.bf16.mxu0 %v3924
        %5015 = vmatpush1.bf16.msra.mxu0 %v3923
        %5016 = vmatprep.subr.bf16.mxu0 %v3930
        %5017 = vmatpush1.bf16.msra.mxu0 %v3929
        %5018 = vmatprep.subr.bf16.mxu0 %v3936
        %5019 = vmatpush1.bf16.msra.mxu0 %v3935
        %5020 = vmatprep.subr.bf16.mxu0 %v3942
        %5021 = vmatpush1.bf16.msra.mxu0 %v3941
        %5022 = vmatprep.subr.bf16.mxu0 %v3948
        %5023 = vmatpush1.bf16.msra.mxu0 %v3947
        %5024 = vmatprep.subr.bf16.mxu0 %v3954
        %5025 = vmatpush1.bf16.msra.mxu0 %v3953
        %5026 = vmatprep.subr.bf16.mxu0 %v3960
        %5027 = vmatpush1.bf16.msra.mxu0 %v3959
        %5028 = vmatprep.mubr.bf16.mxu0 %v4184
        %5029 = vmatmul.mubr.bf16.gmra.mrb[0].mxu0 %v4183
        %v5030 = vpop.f32.mrb[0].mxu0
        %v5031 = vadd.f32 %v4978, %v5030
        %v5032 = vpop.f32.mrb[0].mxu0
        %v5033 = vadd.f32 %v4980, %v5032
        %v5034 = vpop.f32.mrb[0].mxu0
        %v5035 = vadd.f32 %v4982, %v5034
        %v5036 = vpop.f32.mrb[0].mxu0
        %v5037 = vadd.f32 %v4984, %v5036
        %5038 = vmatprep.mubr.bf16.mxu0 %v4196
        %5039 = vmatmul.mubr.bf16.gmra.mrb[0].mxu0 %v4195
        %v5040 = vpop.f32.mrb[0].mxu0
        %v5041 = vadd.f32 %v4988, %v5040
        %v5042 = vpop.f32.mrb[0].mxu0
        %v5043 = vadd.f32 %v4990, %v5042
        %v5044 = vpop.f32.mrb[0].mxu0
        %v5045 = vadd.f32 %v4992, %v5044
        %v5046 = vpop.f32.mrb[0].mxu0
        %v5047 = vadd.f32 %v4994, %v5046
        %5048 = vdwg.mxu0
        %5049 = vmatprep.subr.bf16.mxu0 %v3966
        %5050 = vmatpush1.bf16.msra.mxu0 %v3965
        %5051 = vmatprep.subr.bf16.mxu0 %v3972
        %5052 = vmatpush1.bf16.msra.mxu0 %v3971
        %5053 = vmatprep.subr.bf16.mxu0 %v3978
        %5054 = vmatpush1.bf16.msra.mxu0 %v3977
        %5055 = vmatprep.subr.bf16.mxu0 %v3984
        %5056 = vmatpush1.bf16.msra.mxu0 %v3983
        %5057 = vmatprep.subr.bf16.mxu0 %v3990
        %5058 = vmatpush1.bf16.msra.mxu0 %v3989
        %5059 = vmatprep.subr.bf16.mxu0 %v3996
        %5060 = vmatpush1.bf16.msra.mxu0 %v3995
        %5061 = vmatprep.subr.bf16.mxu0 %v4002
        %5062 = vmatpush1.bf16.msra.mxu0 %v4001
        %5063 = vmatprep.subr.bf16.mxu0 %v4008
        %5064 = vmatpush1.bf16.msra.mxu0 %v4007
        %5065 = vmatprep.subr.bf16.mxu0 %v4014
        %5066 = vmatpush1.bf16.msra.mxu0 %v4013
        %5067 = vmatprep.subr.bf16.mxu0 %v4020
        %5068 = vmatpush1.bf16.msra.mxu0 %v4019
        %5069 = vmatprep.subr.bf16.mxu0 %v4026
        %5070 = vmatpush1.bf16.msra.mxu0 %v4025
        %5071 = vmatprep.subr.bf16.mxu0 %v4032
        %5072 = vmatpush1.bf16.msra.mxu0 %v4031
        %5073 = vmatprep.subr.bf16.mxu0 %v4038
        %5074 = vmatpush1.bf16.msra.mxu0 %v4037
        %5075 = vmatprep.subr.bf16.mxu0 %v4044
        %5076 = vmatpush1.bf16.msra.mxu0 %v4043
        %5077 = vmatprep.subr.bf16.mxu0 %v4050
        %5078 = vmatpush1.bf16.msra.mxu0 %v4049
        %5079 = vmatprep.subr.bf16.mxu0 %v4056
        %5080 = vmatpush1.bf16.msra.mxu0 %v4055
        %5081 = vmatprep.mubr.bf16.mxu0 %v4186
        %5082 = vmatmul.mubr.bf16.gmra.mrb[0].mxu0 %v4185
        %v5083 = vpop.f32.mrb[0].mxu0
        %v5084 = vadd.f32 %v5031, %v5083
        %v5085 = vpop.f32.mrb[0].mxu0
        %v5086 = vadd.f32 %v5033, %v5085
        %v5087 = vpop.f32.mrb[0].mxu0
        %v5088 = vadd.f32 %v5035, %v5087
        %v5089 = vpop.f32.mrb[0].mxu0
        %v5090 = vadd.f32 %v5037, %v5089
        %5091 = vmatprep.mubr.bf16.mxu0 %v4198
        %5092 = vmatmul.mubr.bf16.gmra.mrb[0].mxu0 %v4197
        %v5093 = vpop.f32.mrb[0].mxu0
        %v5094 = vadd.f32 %v5041, %v5093
        %v5095 = vpop.f32.mrb[0].mxu0
        %v5096 = vadd.f32 %v5043, %v5095
        %v5097 = vpop.f32.mrb[0].mxu0
        %v5098 = vadd.f32 %v5045, %v5097
        %v5099 = vpop.f32.mrb[0].mxu0
        %v5100 = vadd.f32 %v5047, %v5099
        %5101 = vdwg.mxu0
        %5102 = vmatprep.subr.bf16.mxu0 %v4062
        %5103 = vmatpush1.bf16.msra.mxu0 %v4061
        %5104 = vmatprep.subr.bf16.mxu0 %v4068
        %5105 = vmatpush1.bf16.msra.mxu0 %v4067
        %5106 = vmatprep.subr.bf16.mxu0 %v4074
        %5107 = vmatpush1.bf16.msra.mxu0 %v4073
        %5108 = vmatprep.subr.bf16.mxu0 %v4080
        %5109 = vmatpush1.bf16.msra.mxu0 %v4079
        %5110 = vmatprep.subr.bf16.mxu0 %v4086
        %5111 = vmatpush1.bf16.msra.mxu0 %v4085
        %5112 = vmatprep.subr.bf16.mxu0 %v4092
        %5113 = vmatpush1.bf16.msra.mxu0 %v4091
        %5114 = vmatprep.subr.bf16.mxu0 %v4098
        %5115 = vmatpush1.bf16.msra.mxu0 %v4097
        %5116 = vmatprep.subr.bf16.mxu0 %v4104
        %5117 = vmatpush1.bf16.msra.mxu0 %v4103
        %5118 = vmatprep.subr.bf16.mxu0 %v4110
        %5119 = vmatpush1.bf16.msra.mxu0 %v4109
        %5120 = vmatprep.subr.bf16.mxu0 %v4116
        %5121 = vmatpush1.bf16.msra.mxu0 %v4115
        %5122 = vmatprep.subr.bf16.mxu0 %v4122
        %5123 = vmatpush1.bf16.msra.mxu0 %v4121
        %5124 = vmatprep.subr.bf16.mxu0 %v4128
        %5125 = vmatpush1.bf16.msra.mxu0 %v4127
        %5126 = vmatprep.subr.bf16.mxu0 %v4134
        %5127 = vmatpush1.bf16.msra.mxu0 %v4133
        %5128 = vmatprep.subr.bf16.mxu0 %v4140
        %5129 = vmatpush1.bf16.msra.mxu0 %v4139
        %5130 = vmatprep.subr.bf16.mxu0 %v4146
        %5131 = vmatpush1.bf16.msra.mxu0 %v4145
        %5132 = vmatprep.subr.bf16.mxu0 %v4152
        %5133 = vmatpush1.bf16.msra.mxu0 %v4151
        %5134 = vmatprep.mubr.bf16.mxu0 %v4188
        %5135 = vmatmul.mubr.bf16.gmra.mrb[0].mxu0 %v4187
        %v5136 = vpop.f32.mrb[0].mxu0
        %v5137 = vadd.f32 %v5084, %v5136
        %v5138 = vpop.f32.mrb[0].mxu0
        %v5139 = vadd.f32 %v5086, %v5138
        %v5140 = vpop.f32.mrb[0].mxu0
        %v5141 = vadd.f32 %v5088, %v5140
        %v5142 = vpop.f32.mrb[0].mxu0
        %v5143 = vadd.f32 %v5090, %v5142
        %5144 = vmatprep.mubr.bf16.mxu0 %v4200
        %5145 = vmatmul.mubr.bf16.gmra.mrb[0].mxu0 %v4199
        %v5146 = vpop.f32.mrb[0].mxu0
        %v5147 = vadd.f32 %v5094, %v5146
        %v5148 = vpop.f32.mrb[0].mxu0
        %v5149 = vadd.f32 %v5096, %v5148
        %v5150 = vpop.f32.mrb[0].mxu0
        %v5151 = vadd.f32 %v5098, %v5150
        %v5152 = vpop.f32.mrb[0].mxu0
        %v5153 = vadd.f32 %v5100, %v5152
        %5154 = vdwg.mxu0
        %v5155 = vadd.f32 %v4153, %v4501
        %v5156 = vadd.f32 %v4154, %v4503
        %v5157 = vadd.f32 %v4155, %v4819
        %v5158 = vadd.f32 %v4156, %v4821
        %v5159 = vadd.f32 %v4157, %v5137
        %v5160 = vadd.f32 %v4158, %v5139
        %v5161 = vadd.f32 %v4159, %v4505
        %v5162 = vadd.f32 %v4160, %v4507
        %v5163 = vadd.f32 %v4161, %v4823
        %v5164 = vadd.f32 %v4162, %v4825
        %v5165 = vadd.f32 %v4163, %v5141
        %v5166 = vadd.f32 %v4164, %v5143
        %v5167 = vadd.f32 %v4165, %v4511
        %v5168 = vadd.f32 %v4166, %v4513
        %v5169 = vadd.f32 %v4167, %v4829
        %v5170 = vadd.f32 %v4168, %v4831
        %v5171 = vadd.f32 %v4169, %v5147
        %v5172 = vadd.f32 %v4170, %v5149
        %v5173 = vadd.f32 %v4171, %v4515
        %v5174 = vadd.f32 %v4172, %v4517
        %v5175 = vadd.f32 %v4173, %v4833
        %v5176 = vadd.f32 %v4174, %v4835
        %v5177 = vadd.f32 %v4175, %v5151
        %v5178 = vadd.f32 %v4176, %v5153
        %5179 = vst [vmem:[#allocation18] sm:$0xff] %v5155
        %5180 = vst [vmem:[#allocation18 + $0x8] sm:$0xff] %v5156
        %5181 = vst [vmem:[#allocation18 + $0x10] sm:$0xff] %v5157
        %5182 = vst [vmem:[#allocation18 + $0x18] sm:$0xff] %v5158
        %5183 = vst [vmem:[#allocation18 + $0x20] sm:$0xff] %v5159
        %5184 = vst [vmem:[#allocation18 + $0x28] sm:$0xff] %v5160
        %5185 = vst [vmem:[#allocation18 + $0x30] sm:$0xff] %v5161
        %5186 = vst [vmem:[#allocation18 + $0x38] sm:$0xff] %v5162
        %5187 = vst [vmem:[#allocation18 + $0x40] sm:$0xff] %v5163
        %5188 = vst [vmem:[#allocation18 + $0x48] sm:$0xff] %v5164
        %5189 = vst [vmem:[#allocation18 + $0x50] sm:$0xff] %v5165
        %5190 = vst [vmem:[#allocation18 + $0x58] sm:$0xff] %v5166
        %5191 = vst [vmem:[#allocation18 + $0x60] sm:$0xff] %v5167
        %5192 = vst [vmem:[#allocation18 + $0x68] sm:$0xff] %v5168
        %5193 = vst [vmem:[#allocation18 + $0x70] sm:$0xff] %v5169
        %5194 = vst [vmem:[#allocation18 + $0x78] sm:$0xff] %v5170
        %5195 = vst [vmem:[#allocation18 + $0x80] sm:$0xff] %v5171
        %5196 = vst [vmem:[#allocation18 + $0x88] sm:$0xff] %v5172
        %5197 = vst [vmem:[#allocation18 + $0x90] sm:$0xff] %v5173
        %5198 = vst [vmem:[#allocation18 + $0x98] sm:$0xff] %v5174
        %5199 = vst [vmem:[#allocation18 + $0xa0] sm:$0xff] %v5175
        %5200 = vst [vmem:[#allocation18 + $0xa8] sm:$0xff] %v5176
        %5201 = vst [vmem:[#allocation18 + $0xb0] sm:$0xff] %v5177
        %5202 = vst [vmem:[#allocation18 + $0xb8] sm:$0xff] %v5178
        %p5203 = scmp.eq.s32.totalorder %s30, 1
        // Predicated region
        $region97: #{tpu_custom_call.1} parent=55 // pred_check
          %p5204 = pneg %p5203
        $region98: #{tpu_custom_call.1} parent=55 // pred_check_branch
          %5206 = sbr.rel (%p5204) target = $region100
        $region99: #{tpu_custom_call.1} parent=55 // pred_region
          %v5207 = vld [vmem:[#allocation18] sm:$0xff]
          %v5208 = vld [vmem:[#allocation18 + $0x8] sm:$0xff]
          %v5209 = vld [vmem:[#allocation18 + $0x10] sm:$0xff]
          %v5210 = vld [vmem:[#allocation18 + $0x18] sm:$0xff]
          %v5211 = vld [vmem:[#allocation18 + $0x20] sm:$0xff]
          %v5212 = vld [vmem:[#allocation18 + $0x28] sm:$0xff]
          %v5213 = vld [vmem:[#allocation18 + $0x30] sm:$0xff]
          %v5214 = vld [vmem:[#allocation18 + $0x38] sm:$0xff]
          %v5215 = vld [vmem:[#allocation18 + $0x40] sm:$0xff]
          %v5216 = vld [vmem:[#allocation18 + $0x48] sm:$0xff]
          %v5217 = vld [vmem:[#allocation18 + $0x50] sm:$0xff]
          %v5218 = vld [vmem:[#allocation18 + $0x58] sm:$0xff]
          %v5219 = vld [vmem:[#allocation18 + $0x60] sm:$0xff]
          %v5220 = vld [vmem:[#allocation18 + $0x68] sm:$0xff]
          %v5221 = vld [vmem:[#allocation18 + $0x70] sm:$0xff]
          %v5222 = vld [vmem:[#allocation18 + $0x78] sm:$0xff]
          %v5223 = vld [vmem:[#allocation18 + $0x80] sm:$0xff]
          %v5224 = vld [vmem:[#allocation18 + $0x88] sm:$0xff]
          %v5225 = vld [vmem:[#allocation18 + $0x90] sm:$0xff]
          %v5226 = vld [vmem:[#allocation18 + $0x98] sm:$0xff]
          %v5227 = vld [vmem:[#allocation18 + $0xa0] sm:$0xff]
          %v5228 = vld [vmem:[#allocation18 + $0xa8] sm:$0xff]
          %v5229 = vld [vmem:[#allocation18 + $0xb0] sm:$0xff]
          %v5230 = vld [vmem:[#allocation18 + $0xb8] sm:$0xff]
          %v5231 = vld [vmem:[#allocation12] sm:$0x3f]
          %v5233 = vlaneseq
          %v5234 = vshrl.u32 %v5233, 7
          %v5235 = vsub.s32 0, %v5234
          %v5236 = vrot.slane %v5231, %v5235
          %v5237 = vlaneseq
          %v5238 = vshrl.u32 %v5237, 7
          %v5239 = vsub.s32 1, %v5238
          %v5240 = vrot.slane %v5231, %v5239
          %v5241 = vlaneseq
          %v5242 = vshrl.u32 %v5241, 7
          %v5243 = vsub.s32 2, %v5242
          %v5244 = vrot.slane %v5231, %v5243
          %v5245 = vlaneseq
          %v5246 = vshrl.u32 %v5245, 7
          %v5247 = vsub.s32 3, %v5246
          %v5248 = vrot.slane %v5231, %v5247
          %v5249 = vlaneseq
          %v5250 = vshrl.u32 %v5249, 7
          %v5251 = vsub.s32 4, %v5250
          %v5252 = vrot.slane %v5231, %v5251
          %v5253 = vlaneseq
          %v5254 = vshrl.u32 %v5253, 7
          %v5255 = vsub.s32 5, %v5254
          %v5256 = vrot.slane %v5231, %v5255
          %v5263 = vmul.f32 %v5207, %v5236
          %v5264 = vmul.f32 %v5208, %v5240
          %v5265 = vmul.f32 %v5209, %v5244
          %v5266 = vmul.f32 %v5210, %v5248
          %v5267 = vmul.f32 %v5211, %v5252
          %v5268 = vmul.f32 %v5212, %v5256
          %v5269 = vmul.f32 %v5213, %v5236
          %v5270 = vmul.f32 %v5214, %v5240
          %v5271 = vmul.f32 %v5215, %v5244
          %v5272 = vmul.f32 %v5216, %v5248
          %v5273 = vmul.f32 %v5217, %v5252
          %v5274 = vmul.f32 %v5218, %v5256
          %v5275 = vmul.f32 %v5219, %v5236
          %v5276 = vmul.f32 %v5220, %v5240
          %v5277 = vmul.f32 %v5221, %v5244
          %v5278 = vmul.f32 %v5222, %v5248
          %v5279 = vmul.f32 %v5223, %v5252
          %v5280 = vmul.f32 %v5224, %v5256
          %v5281 = vmul.f32 %v5225, %v5236
          %v5282 = vmul.f32 %v5226, %v5240
          %v5283 = vmul.f32 %v5227, %v5244
          %v5284 = vmul.f32 %v5228, %v5248
          %v5285 = vmul.f32 %v5229, %v5252
          %v5286 = vmul.f32 %v5230, %v5256
          %v5287 = vld [vmem:[#allocation14] sm:$0x3f]
          %v5289 = vlaneseq
          %v5290 = vshrl.u32 %v5289, 7
          %v5291 = vsub.s32 0, %v5290
          %v5292 = vrot.slane %v5287, %v5291
          %v5293 = vlaneseq
          %v5294 = vshrl.u32 %v5293, 7
          %v5295 = vsub.s32 1, %v5294
          %v5296 = vrot.slane %v5287, %v5295
          %v5297 = vlaneseq
          %v5298 = vshrl.u32 %v5297, 7
          %v5299 = vsub.s32 2, %v5298
          %v5300 = vrot.slane %v5287, %v5299
          %v5301 = vlaneseq
          %v5302 = vshrl.u32 %v5301, 7
          %v5303 = vsub.s32 3, %v5302
          %v5304 = vrot.slane %v5287, %v5303
          %v5305 = vlaneseq
          %v5306 = vshrl.u32 %v5305, 7
          %v5307 = vsub.s32 4, %v5306
          %v5308 = vrot.slane %v5287, %v5307
          %v5309 = vlaneseq
          %v5310 = vshrl.u32 %v5309, 7
          %v5311 = vsub.s32 5, %v5310
          %v5312 = vrot.slane %v5287, %v5311
          %v5319 = vadd.f32 %v5263, %v5292
          %v5320 = vadd.f32 %v5264, %v5296
          %v5321 = vadd.f32 %v5265, %v5300
          %v5322 = vadd.f32 %v5266, %v5304
          %v5323 = vadd.f32 %v5267, %v5308
          %v5324 = vadd.f32 %v5268, %v5312
          %v5325 = vadd.f32 %v5269, %v5292
          %v5326 = vadd.f32 %v5270, %v5296
          %v5327 = vadd.f32 %v5271, %v5300
          %v5328 = vadd.f32 %v5272, %v5304
          %v5329 = vadd.f32 %v5273, %v5308
          %v5330 = vadd.f32 %v5274, %v5312
          %v5331 = vadd.f32 %v5275, %v5292
          %v5332 = vadd.f32 %v5276, %v5296
          %v5333 = vadd.f32 %v5277, %v5300
          %v5334 = vadd.f32 %v5278, %v5304
          %v5335 = vadd.f32 %v5279, %v5308
          %v5336 = vadd.f32 %v5280, %v5312
          %v5337 = vadd.f32 %v5281, %v5292
          %v5338 = vadd.f32 %v5282, %v5296
          %v5339 = vadd.f32 %v5283, %v5300
          %v5340 = vadd.f32 %v5284, %v5304
          %v5341 = vadd.f32 %v5285, %v5308
          %v5342 = vadd.f32 %v5286, %v5312
          %v5343 = vld [vmem:[#allocation3] sm:$0xff]
          %v5344 = vld [vmem:[#allocation3 + $0x8] sm:$0xff]
          %v5345 = vld [vmem:[#allocation3 + $0x10] sm:$0xff]
          %v5346 = vld [vmem:[#allocation3 + $0x18] sm:$0xff]
          %v5347 = vld [vmem:[#allocation3 + $0x20] sm:$0xff]
          %v5348 = vld [vmem:[#allocation3 + $0x28] sm:$0xff]
          %v5349 = vld [vmem:[#allocation3 + $0x30] sm:$0xff]
          %v5350 = vld [vmem:[#allocation3 + $0x38] sm:$0xff]
          %v5351 = vld [vmem:[#allocation3 + $0x40] sm:$0xff]
          %v5352 = vld [vmem:[#allocation3 + $0x48] sm:$0xff]
          %v5353 = vld [vmem:[#allocation3 + $0x50] sm:$0xff]
          %v5354 = vld [vmem:[#allocation3 + $0x58] sm:$0xff]
          %v5355 = vld [vmem:[#allocation3 + $0x60] sm:$0xff]
          %v5356 = vld [vmem:[#allocation3 + $0x68] sm:$0xff]
          %v5357 = vld [vmem:[#allocation3 + $0x70] sm:$0xff]
          %v5358 = vld [vmem:[#allocation3 + $0x78] sm:$0xff]
          %v5359 = vld [vmem:[#allocation3 + $0x80] sm:$0xff]
          %v5360 = vld [vmem:[#allocation3 + $0x88] sm:$0xff]
          %v5361 = vld [vmem:[#allocation3 + $0x90] sm:$0xff]
          %v5362 = vld [vmem:[#allocation3 + $0x98] sm:$0xff]
          %v5363 = vld [vmem:[#allocation3 + $0xa0] sm:$0xff]
          %v5364 = vld [vmem:[#allocation3 + $0xa8] sm:$0xff]
          %v5365 = vld [vmem:[#allocation3 + $0xb0] sm:$0xff]
          %v5366 = vld [vmem:[#allocation3 + $0xb8] sm:$0xff]
          %v5367 = vadd.f32 %v5319, %v5343
          %v5368 = vadd.f32 %v5320, %v5344
          %v5369 = vadd.f32 %v5321, %v5345
          %v5370 = vadd.f32 %v5322, %v5346
          %v5371 = vadd.f32 %v5323, %v5347
          %v5372 = vadd.f32 %v5324, %v5348
          %v5373 = vadd.f32 %v5325, %v5349
          %v5374 = vadd.f32 %v5326, %v5350
          %v5375 = vadd.f32 %v5327, %v5351
          %v5376 = vadd.f32 %v5328, %v5352
          %v5377 = vadd.f32 %v5329, %v5353
          %v5378 = vadd.f32 %v5330, %v5354
          %v5379 = vadd.f32 %v5331, %v5355
          %v5380 = vadd.f32 %v5332, %v5356
          %v5381 = vadd.f32 %v5333, %v5357
          %v5382 = vadd.f32 %v5334, %v5358
          %v5383 = vadd.f32 %v5335, %v5359
          %v5384 = vadd.f32 %v5336, %v5360
          %v5385 = vadd.f32 %v5337, %v5361
          %v5386 = vadd.f32 %v5338, %v5362
          %v5387 = vadd.f32 %v5339, %v5363
          %v5388 = vadd.f32 %v5340, %v5364
          %v5389 = vadd.f32 %v5341, %v5365
          %v5390 = vadd.f32 %v5342, %v5366
          %5391 = vst [vmem:[#allocation18] sm:$0xff] %v5367
          %5392 = vst [vmem:[#allocation18 + $0x8] sm:$0xff] %v5368
          %5393 = vst [vmem:[#allocation18 + $0x10] sm:$0xff] %v5369
          %5394 = vst [vmem:[#allocation18 + $0x18] sm:$0xff] %v5370
          %5395 = vst [vmem:[#allocation18 + $0x20] sm:$0xff] %v5371
          %5396 = vst [vmem:[#allocation18 + $0x28] sm:$0xff] %v5372
          %5397 = vst [vmem:[#allocation18 + $0x30] sm:$0xff] %v5373
          %5398 = vst [vmem:[#allocation18 + $0x38] sm:$0xff] %v5374
          %5399 = vst [vmem:[#allocation18 + $0x40] sm:$0xff] %v5375
          %5400 = vst [vmem:[#allocation18 + $0x48] sm:$0xff] %v5376
          %5401 = vst [vmem:[#allocation18 + $0x50] sm:$0xff] %v5377
          %5402 = vst [vmem:[#allocation18 + $0x58] sm:$0xff] %v5378
          %5403 = vst [vmem:[#allocation18 + $0x60] sm:$0xff] %v5379
          %5404 = vst [vmem:[#allocation18 + $0x68] sm:$0xff] %v5380
          %5405 = vst [vmem:[#allocation18 + $0x70] sm:$0xff] %v5381
          %5406 = vst [vmem:[#allocation18 + $0x78] sm:$0xff] %v5382
          %5407 = vst [vmem:[#allocation18 + $0x80] sm:$0xff] %v5383
          %5408 = vst [vmem:[#allocation18 + $0x88] sm:$0xff] %v5384
          %5409 = vst [vmem:[#allocation18 + $0x90] sm:$0xff] %v5385
          %5410 = vst [vmem:[#allocation18 + $0x98] sm:$0xff] %v5386
          %5411 = vst [vmem:[#allocation18 + $0xa0] sm:$0xff] %v5387
          %5412 = vst [vmem:[#allocation18 + $0xa8] sm:$0xff] %v5388
          %5413 = vst [vmem:[#allocation18 + $0xb0] sm:$0xff] %v5389
          %5414 = vst [vmem:[#allocation18 + $0xb8] sm:$0xff] %v5390
        $region100: #{tpu_custom_call.1} parent=55 // pred_fallthru
          _
        // Predicated region
        $region101: #{tpu_custom_call.1} parent=55 // pred_check
          %p5415 = pneg %p252
        $region102: #{tpu_custom_call.1} parent=55 // pred_check_branch
          %5417 = sbr.rel (%p5415) target = $region104
        $region103: #{tpu_custom_call.1} parent=55 // pred_region
          %s5419 = ssub.s32 3072, 3072
          %5420 = vsyncadd [#allocation5], %s5419
          %s5421 = sshll.u32 [#allocation18], 4
          %s5422 = int_to_ptr.vmem [resolvable:$true] %s5421
          %5427 = dma.vmem_to_hbm [thread:$0]  %s5422, 3072, %s9, [#allocation5], 768, 768, 48
        $region104: #{tpu_custom_call.1} parent=55 // pred_fallthru
          _
        // Predicated region
        $region105: #{tpu_custom_call.1} parent=55 // pred_check
          %p5428 = pneg %p252
        $region106: #{tpu_custom_call.1} parent=55 // pred_check_branch
          %5430 = sbr.rel (%p5428) target = $region108
        $region107: #{tpu_custom_call.1} parent=55 // pred_region
          %5431 = dma.done [#allocation5], 3072
        $region108: #{tpu_custom_call.1} parent=55 // pred_fallthru
          _
      $region56: #{tpu_custom_call.1} parent=5 // pred_fallthru
        _
      %p5432 = scmp.le.s32.totalorder 2, %s25
      // Predicated region
      $region109: #{tpu_custom_call.1} parent=5 // pred_check
        %p5433 = pneg %p5432
      $region110: #{tpu_custom_call.1} parent=5 // pred_check_branch
        %5435 = sbr.rel (%p5433) target = $region112
      $region111: #{tpu_custom_call.1} parent=5 // pred_region
        %s5436 = ssub.s32 %s25, 2
      $region112: #{tpu_custom_call.1} parent=5 // pred_fallthru
        _
    $region6: #{tpu_custom_call.1} parent=1 // loop_footer
      %s29 = sadd.s32 1, %s25
    $region7: #{tpu_custom_call.1} parent=1 // loop_footer_branch
      %24 = sbr.rel target = $region3
    $region8: #{tpu_custom_call.1} parent=1 // loop_exit
      _
    %5437 = vsyncpa [#allocation4], 1
    %s5438 = scalar_lea.sflag [#allocation4], 1
    %5439 = vsyncpa %s5438, 1
    %5440 = vsyncpa [#allocation7], 1
    %s5441 = scalar_lea.sflag [#allocation7], 1
    %5442 = vsyncpa %s5441, 1
    %5443 = vsyncpa [#allocation10], 1
    %s5444 = scalar_lea.sflag [#allocation10], 1
    %5445 = vsyncpa %s5444, 1
    %5446 = vsyncpa [#allocation13], 1
    %5447 = vsyncpa [#allocation16], 1
    %5448 = vsyncpa [#allocation5], 1
    %s5449 = scalar_lea.sflag [#allocation5], 1
    %5450 = vsyncpa %s5449, 1

</llo_original>
